<compile_context>
chip_gen: v7x
topology: tpu7x:2x2x1
jax: 0.10.0
libtpu: 0.0.40
codegen_flags: <defaults>
</compile_context>

<pallas_src>
import jax
import jax.numpy as jnp
import numpy as np
from jax import lax
from jax.experimental import pallas as pl
from jax.experimental.pallas import tpu as pltpu

ALPHA = 1.0
BETA = 50.0
BASE = 0.0
EPS = 1e-12          # F.normalize eps
TM = 256             # row-block tile: fills the 256x256 MXU on v6e/v7x
LANE = 128           # lane width
SUB = 8              # f32 sublane tile


def _round_up(x, m):
    return (x + m - 1) // m * m


def _l2_normalize(x):
    # torch.nn.functional.normalize(p=2, dim=1): x / max(||x||_2, eps)
    norm = jnp.sqrt(jnp.sum(x * x, axis=1, keepdims=True))
    return x / jnp.maximum(norm, EPS)


def _masked_lse_add_one(z, mask):
    """Row-wise log(1 + sum_{j in mask} exp(z_ij)); 0 for rows with empty mask.

    Matches torch: masked_fill(~mask, finfo.min) -> cat zero column ->
    logsumexp(dim=1) -> zero out rows with an empty mask.
    """
    neg_fill = jnp.finfo(jnp.float32).min
    zm = jnp.where(mask, z, neg_fill)                       # single full-width select
    row_max = jnp.max(zm, axis=1, keepdims=True)            # (TM, 1); == neg_fill iff row empty
    m = jnp.maximum(row_max, 0.0)                           # appended 0-column joins the max
    # NOTE: masked-out entries hold neg_fill; with m >= 0, exp(neg_fill - m)
    # underflows to exactly 0.0 in f32, so no second full-width select is needed.
    terms = jnp.exp(zm - m)                                 # single full-width exp
    lse = m + jnp.log(jnp.exp(-m) + jnp.sum(terms, axis=1, keepdims=True))
    # A non-empty row's max is a real z value with |z| <= BETA*e < 150, so this
    # (TM,1) compare is an exact "any(mask)" test with no full-width bool reduce.
    has_any = row_max > (0.5 * neg_fill)
    return jnp.where(has_any, lse, 0.0)


def gms_kernel(s_row_ref, t_row_ref, sT_ref, tT_ref, pm_ref, nm_ref, out_ref):
    # s_row_ref / t_row_ref : (TM, D_pad) pre-normalized row tiles (streamed per step)
    # sT_ref / tT_ref       : (D_pad, B_pad) pre-normalized, pre-transposed descriptors,
    #                         fully resident in VMEM (single copy, single buffer)
    # pm_ref / nm_ref       : (TM, B_pad) int8 mask row tiles (streamed per step)
    # out_ref               : (SUB, LANE) f32 lane-dense partial-sum tile for this block
    dn = (((1,), (0,)), ((), ()))   # (TM, D) @ (D, B) -> (TM, B); RHS contraction dim leading
    S = lax.dot_general(s_row_ref[...], sT_ref[...], dn,
                        preferred_element_type=jnp.float32)    # (TM, B_pad)
    ST = lax.dot_general(t_row_ref[...], tT_ref[...], dn,
                         preferred_element_type=jnp.float32)   # (TM, B_pad)

    pos_mask = pm_ref[...] != 0          # int8 -> i1 compare, no f32 convert
    neg_mask = nm_ref[...] != 0

    e_pos = jnp.exp(ST)                              # one full-width exp (EUP)
    e_neg = pl.reciprocal(e_pos, approx=False)       # exact exp(-ST) without a second exp (VALU)

    pos_z = (ALPHA * (BASE - S)) * e_pos
    neg_z = (BETA * (S - BASE)) * e_neg

    pos_loss = _masked_lse_add_one(pos_z, pos_mask) * (1.0 / ALPHA)   # (TM, 1)
    neg_loss = _masked_lse_add_one(neg_z, neg_mask) * (1.0 / BETA)    # (TM, 1)

    # Reduce over the row block in-kernel; padded rows have empty masks -> contribute 0.
    block_sum = jnp.sum(pos_loss + neg_loss, axis=0, keepdims=True)   # (1, 1)
    out_ref[...] = jnp.broadcast_to(block_sum, (SUB, LANE))


def guided_multi_similarity(student, teacher, miner_outputs):
    """student, teacher: (B, D); miner_outputs = (a1, p, a2, n) int index arrays."""
    B, D = student.shape
    a1, p, a2, n = miner_outputs

    B_pad = _round_up(B, TM)        # TM = 256 -> also lane aligned
    D_pad = _round_up(D, LANE)

    # Hoisted normalization (done once in XLA); zero-padding keeps padded rows at 0.
    s_n = _l2_normalize(student.astype(jnp.float32))
    t_n = _l2_normalize(teacher.astype(jnp.float32))
    s_rows = jnp.zeros((B_pad, D_pad), jnp.float32).at[:B, :D].set(s_n)
    t_rows = jnp.zeros((B_pad, D_pad), jnp.float32).at[:B, :D].set(t_n)
    # Pre-transposed Gram RHS: contraction dim leading for the MXU (done once in XLA).
    s_T = s_rows.T                  # (D_pad, B_pad)
    t_T = t_rows.T                  # (D_pad, B_pad)

    # glue: scatter miner index pairs into dense int8 masks (padded region stays 0)
    pos_mask = jnp.zeros((B_pad, B_pad), jnp.int8).at[a1, p].set(1)
    neg_mask = jnp.zeros((B_pad, B_pad), jnp.int8).at[a2, n].set(1)

    num_blocks = B_pad // TM

    # VMEM budget derived from the actual footprint (residents single-buffered,
    # streamed tiles double-buffered, generous slack for in-kernel temporaries).
    resident_bytes = 2 * D_pad * B_pad * 4
    stream_bytes = 2 * (2 * TM * D_pad * 4) + 2 * (2 * TM * B_pad * 1) + 2 * SUB * LANE * 4
    temp_bytes = 12 * TM * B_pad * 4
    vmem_limit = resident_bytes + stream_bytes + temp_bytes + (4 << 20)
    vmem_limit = int(min(max(vmem_limit, 32 << 20), 112 << 20))

    out = pl.pallas_call(
        gms_kernel,
        out_shape=jax.ShapeDtypeStruct((num_blocks * SUB, LANE), jnp.float32),
        grid_spec=pltpu.PrefetchScalarGridSpec(
            num_scalar_prefetch=0,
            grid=(num_blocks,),
            in_specs=[
                pl.BlockSpec((TM, D_pad), lambda i: (i, 0)),            # student row tile (LHS)
                pl.BlockSpec((TM, D_pad), lambda i: (i, 0)),            # teacher row tile (LHS)
                pl.BlockSpec(memory_space=pltpu.MemorySpace.VMEM),      # student^T, resident (1 copy)
                pl.BlockSpec(memory_space=pltpu.MemorySpace.VMEM),      # teacher^T, resident (1 copy)
                pl.BlockSpec((TM, B_pad), lambda i: (i, 0)),            # pos mask row tile (int8)
                pl.BlockSpec((TM, B_pad), lambda i: (i, 0)),            # neg mask row tile (int8)
            ],
            out_specs=pl.BlockSpec((SUB, LANE), lambda i: (i, 0)),
        ),
        compiler_params=pltpu.CompilerParams(
            dimension_semantics=("parallel",),       # shard row blocks across v7x's 2 TCs
            vmem_limit_bytes=vmem_limit,
        ),
    )(s_rows, t_rows, s_T, t_T, pos_mask, neg_mask)

    # Each block's partial sum is replicated over its (8, 128) tile; pick one copy per block.
    per_block = out[0::SUB, 0]                        # (num_blocks,)
    return jnp.sum(per_block) / B


def reference(student, teacher, miner_outputs):
    """Pure-JAX mirror of the PyTorch forward (for verification)."""
    B, _ = student.shape
    a1, p, a2, n = miner_outputs
    pos_mask = jnp.zeros((B, B), bool).at[a1, p].set(True)
    neg_mask = jnp.zeros((B, B), bool).at[a2, n].set(True)

    s = student / jnp.maximum(jnp.linalg.norm(student, axis=1, keepdims=True), EPS)
    t = teacher / jnp.maximum(jnp.linalg.norm(teacher, axis=1, keepdims=True), EPS)
    S = s @ s.T
    ST = t @ t.T

    def lse(x, mask, ts):
        xm = jnp.where(mask, x * jnp.exp(ts), jnp.finfo(jnp.float32).min)
        xm = jnp.concatenate([xm, jnp.zeros((B, 1), jnp.float32)], axis=1)
        out = jax.scipy.special.logsumexp(xm, axis=1, keepdims=True)
        return jnp.where(jnp.any(mask, axis=1, keepdims=True), out, 0.0)

    pos_loss = lse(ALPHA * (BASE - S), pos_mask, ST) / ALPHA
    neg_loss = lse(BETA * (S - BASE), neg_mask, -ST) / BETA
    return jnp.mean(pos_loss + neg_loss)


if __name__ == "__main__":
    B, D = 8, 32
    key = jax.random.PRNGKey(0)
    k1, k2 = jax.random.split(key)
    student = jax.random.normal(k1, (B, D), jnp.float32)
    teacher = jax.random.normal(k2, (B, D), jnp.float32)

    # deterministic synthetic miner outputs (anchor/pos and anchor/neg index pairs)
    a1 = jnp.array([0, 0, 1, 2, 3, 4, 5, 6], jnp.int32)
    p  = jnp.array([1, 2, 0, 3, 2, 5, 4, 7], jnp.int32)
    a2 = jnp.array([0, 1, 2, 3, 4, 5, 6, 7, 0, 1], jnp.int32)
    n  = jnp.array([4, 5, 6, 7, 0, 1, 2, 3, 7, 6], jnp.int32)
    miner_outputs = (a1, p, a2, n)

    loss = guided_multi_similarity(student, teacher, miner_outputs)
    loss = jax.block_until_ready(loss)

    ref = jax.block_until_ready(reference(student, teacher, miner_outputs))
    assert np.allclose(np.asarray(loss), np.asarray(ref), rtol=1e-5, atol=1e-5), (
        f"mismatch: kernel={loss} ref={ref}")

    print("KERNEL_OK")
</pallas_src>

<mosaic_0001>
module attributes {stable_mosaic.version = 11 : i64} {
  func.func @gms_kernel(%arg0: i32, %arg1: memref<256x128xf32, #tpu.memory_space<vmem>>, %arg2: memref<256x128xf32, #tpu.memory_space<vmem>>, %arg3: memref<128x256xf32, #tpu.memory_space<vmem>>, %arg4: memref<128x256xf32, #tpu.memory_space<vmem>>, %arg5: memref<256x256xi8, #tpu.memory_space<vmem>>, %arg6: memref<256x256xi8, #tpu.memory_space<vmem>>, %arg7: memref<8x128xf32, #tpu.memory_space<vmem>>) attributes {dimension_semantics = [#tpu.dimension_semantics<parallel>], iteration_bounds = array<i64: 1>, scalar_prefetch = 0 : i64, scratch_operands = 0 : i64, tpu.core_type = #tpu.core_type<tc>, window_params = [{transform_indices = @transform_0, window_bounds = array<i64: 256, 128>}, {transform_indices = @transform_1, window_bounds = array<i64: 256, 128>}, {pipeline_mode = #tpu.pipeline_mode<synchronous>, transform_indices = @transform_2, window_bounds = array<i64: 128, 256>}, {pipeline_mode = #tpu.pipeline_mode<synchronous>, transform_indices = @transform_3, window_bounds = array<i64: 128, 256>}, {transform_indices = @transform_4, window_bounds = array<i64: 256, 256>}, {transform_indices = @transform_5, window_bounds = array<i64: 256, 256>}, {transform_indices = @transform_6, window_bounds = array<i64: 8, 128>}]} {
    %c0 = arith.constant 0 : index
    %c0_0 = arith.constant 0 : index
    %0 = vector.load %arg1[%c0, %c0_0] : memref<256x128xf32, #tpu.memory_space<vmem>>, vector<256x128xf32>
    %c0_1 = arith.constant 0 : index
    %c0_2 = arith.constant 0 : index
    %1 = vector.load %arg3[%c0_1, %c0_2] : memref<128x256xf32, #tpu.memory_space<vmem>>, vector<128x256xf32>
    %cst = arith.constant dense<0.000000e+00> : vector<256x256xf32>
    %2 = tpu.matmul %0, %1, %cst {dimension_numbers = #tpu.dot_dimension_numbers<[1], [0], [0], [1], [0, 0, 1, 1], [], []>} : vector<256x128xf32>, vector<128x256xf32>, vector<256x256xf32> -> vector<256x256xf32>
    %c0_3 = arith.constant 0 : index
    %c0_4 = arith.constant 0 : index
    %3 = vector.load %arg2[%c0_3, %c0_4] : memref<256x128xf32, #tpu.memory_space<vmem>>, vector<256x128xf32>
    %c0_5 = arith.constant 0 : index
    %c0_6 = arith.constant 0 : index
    %4 = vector.load %arg4[%c0_5, %c0_6] : memref<128x256xf32, #tpu.memory_space<vmem>>, vector<128x256xf32>
    %cst_7 = arith.constant dense<0.000000e+00> : vector<256x256xf32>
    %5 = tpu.matmul %3, %4, %cst_7 {dimension_numbers = #tpu.dot_dimension_numbers<[1], [0], [0], [1], [0, 0, 1, 1], [], []>} : vector<256x128xf32>, vector<128x256xf32>, vector<256x256xf32> -> vector<256x256xf32>
    %c0_8 = arith.constant 0 : index
    %c0_9 = arith.constant 0 : index
    %6 = vector.load %arg5[%c0_8, %c0_9] : memref<256x256xi8, #tpu.memory_space<vmem>>, vector<256x256xi8>
    %c0_i8 = arith.constant 0 : i8
    %7 = vector.broadcast %c0_i8 : i8 to vector<256x256xi8>
    %8 = arith.cmpi ne, %6, %7 : vector<256x256xi8>
    %c0_10 = arith.constant 0 : index
    %c0_11 = arith.constant 0 : index
    %9 = vector.load %arg6[%c0_10, %c0_11] : memref<256x256xi8, #tpu.memory_space<vmem>>, vector<256x256xi8>
    %c0_i8_12 = arith.constant 0 : i8
    %10 = vector.broadcast %c0_i8_12 : i8 to vector<256x256xi8>
    %11 = arith.cmpi ne, %9, %10 : vector<256x256xi8>
    %12 = math.exp %5 : vector<256x256xf32>
    %13 = tpu.reciprocal %12 : vector<256x256xf32> -> vector<256x256xf32>
    %cst_13 = arith.constant 0.000000e+00 : f32
    %14 = vector.broadcast %cst_13 : f32 to vector<256x256xf32>
    %15 = arith.subf %14, %2 : vector<256x256xf32>
    %cst_14 = arith.constant 1.000000e+00 : f32
    %16 = vector.broadcast %cst_14 : f32 to vector<256x256xf32>
    %17 = arith.mulf %16, %15 : vector<256x256xf32>
    %18 = arith.mulf %17, %12 : vector<256x256xf32>
    %cst_15 = arith.constant 0.000000e+00 : f32
    %19 = vector.broadcast %cst_15 : f32 to vector<256x256xf32>
    %20 = arith.subf %2, %19 : vector<256x256xf32>
    %cst_16 = arith.constant 5.000000e+01 : f32
    %21 = vector.broadcast %cst_16 : f32 to vector<256x256xf32>
    %22 = arith.mulf %21, %20 : vector<256x256xf32>
    %23 = arith.mulf %22, %13 : vector<256x256xf32>
    %cst_17 = arith.constant -3.40282347E+38 : f32
    %24 = vector.broadcast %cst_17 : f32 to vector<256x256xf32>
    %25 = arith.select %8, %18, %24 : vector<256x256xi1>, vector<256x256xf32>
    %cst_18 = arith.constant dense<0xFF800000> : vector<256xf32>
    %26 = vector.multi_reduction <maximumf>, %25, %cst_18 [1] : vector<256x256xf32> to vector<256xf32>
    %27 = vector.shape_cast %26 : vector<256xf32> to vector<256x1xf32>
    %cst_19 = arith.constant 0.000000e+00 : f32
    %28 = vector.broadcast %cst_19 : f32 to vector<256x1xf32>
    %29 = arith.maximumf %27, %28 : vector<256x1xf32>
    %30 = vector.broadcast %29 : vector<256x1xf32> to vector<256x256xf32>
    %31 = arith.subf %25, %30 : vector<256x256xf32>
    %32 = math.exp %31 : vector<256x256xf32>
    %cst_20 = arith.constant 0.000000e+00 : f32
    %33 = vector.broadcast %cst_20 : f32 to vector<256x1xf32>
    %34 = arith.subf %33, %29 : vector<256x1xf32>
    %35 = math.exp %34 : vector<256x1xf32>
    %cst_21 = arith.constant dense<0.000000e+00> : vector<256xf32>
    %36 = vector.multi_reduction <add>, %32, %cst_21 [1] : vector<256x256xf32> to vector<256xf32>
    %37 = vector.shape_cast %36 : vector<256xf32> to vector<256x1xf32>
    %38 = arith.addf %35, %37 : vector<256x1xf32>
    %39 = math.log %38 : vector<256x1xf32>
    %40 = arith.addf %29, %39 : vector<256x1xf32>
    %cst_22 = arith.constant -1.70141173E+38 : f32
    %41 = vector.broadcast %cst_22 : f32 to vector<256x1xf32>
    %42 = arith.cmpf ogt, %27, %41 : vector<256x1xf32>
    %cst_23 = arith.constant 0.000000e+00 : f32
    %43 = vector.broadcast %cst_23 : f32 to vector<256x1xf32>
    %44 = arith.select %42, %40, %43 : vector<256x1xi1>, vector<256x1xf32>
    %cst_24 = arith.constant 1.000000e+00 : f32
    %45 = vector.broadcast %cst_24 : f32 to vector<256x1xf32>
    %46 = arith.mulf %44, %45 : vector<256x1xf32>
    %cst_25 = arith.constant -3.40282347E+38 : f32
    %47 = vector.broadcast %cst_25 : f32 to vector<256x256xf32>
    %48 = arith.select %11, %23, %47 : vector<256x256xi1>, vector<256x256xf32>
    %cst_26 = arith.constant dense<0xFF800000> : vector<256xf32>
    %49 = vector.multi_reduction <maximumf>, %48, %cst_26 [1] : vector<256x256xf32> to vector<256xf32>
    %50 = vector.shape_cast %49 : vector<256xf32> to vector<256x1xf32>
    %cst_27 = arith.constant 0.000000e+00 : f32
    %51 = vector.broadcast %cst_27 : f32 to vector<256x1xf32>
    %52 = arith.maximumf %50, %51 : vector<256x1xf32>
    %53 = vector.broadcast %52 : vector<256x1xf32> to vector<256x256xf32>
    %54 = arith.subf %48, %53 : vector<256x256xf32>
    %55 = math.exp %54 : vector<256x256xf32>
    %cst_28 = arith.constant 0.000000e+00 : f32
    %56 = vector.broadcast %cst_28 : f32 to vector<256x1xf32>
    %57 = arith.subf %56, %52 : vector<256x1xf32>
    %58 = math.exp %57 : vector<256x1xf32>
    %cst_29 = arith.constant dense<0.000000e+00> : vector<256xf32>
    %59 = vector.multi_reduction <add>, %55, %cst_29 [1] : vector<256x256xf32> to vector<256xf32>
    %60 = vector.shape_cast %59 : vector<256xf32> to vector<256x1xf32>
    %61 = arith.addf %58, %60 : vector<256x1xf32>
    %62 = math.log %61 : vector<256x1xf32>
    %63 = arith.addf %52, %62 : vector<256x1xf32>
    %cst_30 = arith.constant -1.70141173E+38 : f32
    %64 = vector.broadcast %cst_30 : f32 to vector<256x1xf32>
    %65 = arith.cmpf ogt, %50, %64 : vector<256x1xf32>
    %cst_31 = arith.constant 0.000000e+00 : f32
    %66 = vector.broadcast %cst_31 : f32 to vector<256x1xf32>
    %67 = arith.select %65, %63, %66 : vector<256x1xi1>, vector<256x1xf32>
    %cst_32 = arith.constant 2.000000e-02 : f32
    %68 = vector.broadcast %cst_32 : f32 to vector<256x1xf32>
    %69 = arith.mulf %67, %68 : vector<256x1xf32>
    %70 = arith.addf %46, %69 : vector<256x1xf32>
    %cst_33 = arith.constant dense<0.000000e+00> : vector<1xf32>
    %71 = vector.multi_reduction <add>, %70, %cst_33 [0] : vector<256x1xf32> to vector<1xf32>
    %72 = vector.shape_cast %71 : vector<1xf32> to vector<1x1xf32>
    %73 = vector.shape_cast %72 : vector<1x1xf32> to vector<1x1xf32>
    %74 = vector.broadcast %73 : vector<1x1xf32> to vector<8x128xf32>
    %c0_34 = arith.constant 0 : index
    %c0_35 = arith.constant 0 : index
    %75 = vector.load %arg7[%c0_34, %c0_35] : memref<8x128xf32, #tpu.memory_space<vmem>>, vector<8x128xf32>
    tpu.vector_store %arg7[%c0_34, %c0_35], %74 {strides = array<i32>} : memref<8x128xf32, #tpu.memory_space<vmem>>, vector<8x128xf32>,
    return
  }
  func.func @transform_0(%arg0: i32) -> (i32, i32) {
    %c0_i32 = arith.constant 0 : i32
    %c0_i32_0 = arith.constant 0 : i32
    return %arg0, %c0_i32 : i32, i32
  }
  func.func @transform_1(%arg0: i32) -> (i32, i32) {
    %c0_i32 = arith.constant 0 : i32
    %c0_i32_0 = arith.constant 0 : i32
    return %arg0, %c0_i32 : i32, i32
  }
  func.func @transform_2(%arg0: i32) -> (i32, i32) {
    %c0_i32 = arith.constant 0 : i32
    %c0_i32_0 = arith.constant 0 : i32
    %c0_i32_1 = arith.constant 0 : i32
    return %c0_i32, %c0_i32_0 : i32, i32
  }
  func.func @transform_3(%arg0: i32) -> (i32, i32) {
    %c0_i32 = arith.constant 0 : i32
    %c0_i32_0 = arith.constant 0 : i32
    %c0_i32_1 = arith.constant 0 : i32
    return %c0_i32, %c0_i32_0 : i32, i32
  }
  func.func @transform_4(%arg0: i32) -> (i32, i32) {
    %c0_i32 = arith.constant 0 : i32
    %c0_i32_0 = arith.constant 0 : i32
    return %arg0, %c0_i32 : i32, i32
  }
  func.func @transform_5(%arg0: i32) -> (i32, i32) {
    %c0_i32 = arith.constant 0 : i32
    %c0_i32_0 = arith.constant 0 : i32
    return %arg0, %c0_i32 : i32, i32
  }
  func.func @transform_6(%arg0: i32) -> (i32, i32) {
    %c0_i32 = arith.constant 0 : i32
    %c0_i32_0 = arith.constant 0 : i32
    return %arg0, %c0_i32 : i32, i32
  }
}

</mosaic_0001>

<llo_original>
// kernel: tpu_custom_call.1
$region0: #{tpu_custom_call.1}
  #allocation0 [shape = 'u32[]', space=smem, size = 0x4, offset = 0x4, fixed_abs, tag = 'smem constant byte address 0x4 - core index']
  #allocation1 [shape = 'u32[144,128]{1,0:T(1,128)}', space=vmem, size = 0x12000, scoped, tag = 'internal scratch']
  %s0 = inlined_call_operand.hbm [shape: f32[256,128], index: 0, kind: input, shape index: {}]
  %s1 = inlined_call_operand.hbm [shape: f32[256,128], index: 1, kind: input, shape index: {}]
  %s2 = inlined_call_operand.hbm [shape: f32[128,256], index: 2, kind: input, shape index: {}]
  %s3 = inlined_call_operand.hbm [shape: f32[128,256], index: 3, kind: input, shape index: {}]
  %s4 = inlined_call_operand.hbm [shape: s8[256,256], index: 4, kind: input, shape index: {}]
  %s5 = inlined_call_operand.hbm [shape: s8[256,256], index: 5, kind: input, shape index: {}]
  %s6 = inlined_call_operand.hbm [shape: f32[8,128], index: 6, kind: output, shape index: {}]
  %s7 = sld [smem:[#allocation0]]
  $region58: #{tpu_custom_call.1} parent=0
    _
  %s9 = ssub.s32 1, %s7
  %s10 = scalar_select 0, %s9, %s7
  $region1: #{tpu_custom_call.1} parent=0
    #allocation2 [shape = 'u8[131072]{0}', space=vmem, size = 0x20000, scoped, tag = 'input window, operand 0, single buffered']
    #allocation3 [shape = 's32[1]{0}', space=sflag, size = 0x4, scoped, tag = 'scoped memory for tpu_custom_call.1']
    #allocation4 [shape = 's32[1]{0}', space=sflag, size = 0x4, scoped, tag = 'scoped memory for tpu_custom_call.1']
    #allocation5 [shape = 'u8[131072]{0}', space=vmem, size = 0x20000, scoped, tag = 'input window, operand 1, single buffered']
    #allocation6 [shape = 's32[1]{0}', space=sflag, size = 0x4, scoped, tag = 'scoped memory for tpu_custom_call.1']
    #allocation7 [shape = 'u8[131072]{0}', space=vmem, size = 0x20000, scoped, tag = 'input window, operand 2, single buffered']
    #allocation8 [shape = 'u8[131072]{0}', space=vmem, size = 0x20000, scoped, tag = 'input window, operand 3, single buffered']
    #allocation9 [shape = 's32[1]{0}', space=sflag, size = 0x4, scoped, tag = 'scoped memory for tpu_custom_call.1']
    #allocation10 [shape = 'u8[65536]{0}', space=vmem, size = 0x10000, scoped, tag = 'input window, operand 4, single buffered']
    #allocation11 [shape = 'u8[65536]{0}', space=vmem, size = 0x10000, scoped, tag = 'input window, operand 5, single buffered']
    #allocation12 [shape = 's32[1]{0}', space=sflag, size = 0x4, scoped, tag = 'scoped memory for tpu_custom_call.1']
    #allocation13 [shape = 'u8[4096]{0}', space=vmem, size = 0x1000, scoped, tag = 'output window, operand 0, single buffered']
    %11 = vsyncpa [#allocation3], 0
    %12 = vsyncpa [#allocation6], 0
    %13 = vsyncpa [#allocation9], 0
    %14 = vsyncpa [#allocation12], 0
    %15 = vsyncpa [#allocation4], 0
    // Predicated region
    $region2: #{tpu_custom_call.1} parent=1 // pred_check
      _
    $region3: #{tpu_custom_call.1} parent=1 // pred_check_branch
      %17 = sbr.rel (0) target = $region5
    $region4: #{tpu_custom_call.1} parent=1 // pred_region
      %s19 = ssub.s32 4096, 4096
      %20 = vsyncadd [#allocation3], %s19
      %s21 = sshll.u32 [#allocation2], 4
      %s22 = int_to_ptr.vmem [resolvable:$true] %s21
      %27 = dma.hbm_to_vmem [thread:$0]  %s0, 4096, %s22, [#allocation3], 128, 128, 8
    $region5: #{tpu_custom_call.1} parent=1 // pred_fallthru
      _
    // Predicated region
    $region6: #{tpu_custom_call.1} parent=1 // pred_check
      _
    $region7: #{tpu_custom_call.1} parent=1 // pred_check_branch
      %29 = sbr.rel (0) target = $region9
    $region8: #{tpu_custom_call.1} parent=1 // pred_region
      %s31 = ssub.s32 4096, 4096
      %32 = vsyncadd [#allocation6], %s31
      %s33 = sshll.u32 [#allocation5], 4
      %s34 = int_to_ptr.vmem [resolvable:$true] %s33
      %39 = dma.hbm_to_vmem [thread:$0]  %s1, 4096, %s34, [#allocation6], 128, 128, 8
    $region9: #{tpu_custom_call.1} parent=1 // pred_fallthru
      _
    // Predicated region
    $region10: #{tpu_custom_call.1} parent=1 // pred_check
      _
    $region11: #{tpu_custom_call.1} parent=1 // pred_check_branch
      %41 = sbr.rel (0) target = $region13
    $region12: #{tpu_custom_call.1} parent=1 // pred_region
      %s43 = ssub.s32 4096, 4096
      %44 = vsyncadd [#allocation6], %s43
      %s45 = sshll.u32 [#allocation7], 4
      %s46 = int_to_ptr.vmem [resolvable:$true] %s45
      %51 = dma.hbm_to_vmem [thread:$0]  %s2, 4096, %s46, [#allocation6], 256, 256, 16
    $region13: #{tpu_custom_call.1} parent=1 // pred_fallthru
      _
    // Predicated region
    $region14: #{tpu_custom_call.1} parent=1 // pred_check
      _
    $region15: #{tpu_custom_call.1} parent=1 // pred_check_branch
      %53 = sbr.rel (0) target = $region17
    $region16: #{tpu_custom_call.1} parent=1 // pred_region
      %s55 = ssub.s32 4096, 4096
      %56 = vsyncadd [#allocation9], %s55
      %s57 = sshll.u32 [#allocation8], 4
      %s58 = int_to_ptr.vmem [resolvable:$true] %s57
      %63 = dma.hbm_to_vmem [thread:$0]  %s3, 4096, %s58, [#allocation9], 256, 256, 16
    $region17: #{tpu_custom_call.1} parent=1 // pred_fallthru
      _
    // Predicated region
    $region18: #{tpu_custom_call.1} parent=1 // pred_check
      _
    $region19: #{tpu_custom_call.1} parent=1 // pred_check_branch
      %65 = sbr.rel (0) target = $region21
    $region20: #{tpu_custom_call.1} parent=1 // pred_region
      %s67 = ssub.s32 2048, 2048
      %68 = vsyncadd [#allocation9], %s67
      %s69 = sshll.u32 [#allocation10], 4
      %s70 = int_to_ptr.vmem [resolvable:$true] %s69
      %75 = dma.hbm_to_vmem [thread:$0]  %s4, 2048, %s70, [#allocation9], 256, 256, 16
    $region21: #{tpu_custom_call.1} parent=1 // pred_fallthru
      _
    // Predicated region
    $region22: #{tpu_custom_call.1} parent=1 // pred_check
      _
    $region23: #{tpu_custom_call.1} parent=1 // pred_check_branch
      %77 = sbr.rel (0) target = $region25
    $region24: #{tpu_custom_call.1} parent=1 // pred_region
      %s79 = ssub.s32 2048, 2048
      %80 = vsyncadd [#allocation12], %s79
      %s81 = sshll.u32 [#allocation11], 4
      %s82 = int_to_ptr.vmem [resolvable:$true] %s81
      %87 = dma.hbm_to_vmem [thread:$0]  %s5, 2048, %s82, [#allocation12], 256, 256, 16
    $region25: #{tpu_custom_call.1} parent=1 // pred_fallthru
      _
    // Predicated region
    $region26: #{tpu_custom_call.1} parent=1 // pred_check
      _
    $region27: #{tpu_custom_call.1} parent=1 // pred_check_branch
      %89 = sbr.rel (0) target = $region29
    $region28: #{tpu_custom_call.1} parent=1 // pred_region
      %90 = dma.done [#allocation3], 4096
    $region29: #{tpu_custom_call.1} parent=1 // pred_fallthru
      _
    // Predicated region
    $region30: #{tpu_custom_call.1} parent=1 // pred_check
      _
    $region31: #{tpu_custom_call.1} parent=1 // pred_check_branch
      %92 = sbr.rel (0) target = $region33
    $region32: #{tpu_custom_call.1} parent=1 // pred_region
      %93 = dma.done [#allocation6], 4096
    $region33: #{tpu_custom_call.1} parent=1 // pred_fallthru
      _
    // Predicated region
    $region34: #{tpu_custom_call.1} parent=1 // pred_check
      _
    $region35: #{tpu_custom_call.1} parent=1 // pred_check_branch
      %95 = sbr.rel (0) target = $region37
    $region36: #{tpu_custom_call.1} parent=1 // pred_region
      %96 = dma.done [#allocation6], 4096
    $region37: #{tpu_custom_call.1} parent=1 // pred_fallthru
      _
    // Predicated region
    $region38: #{tpu_custom_call.1} parent=1 // pred_check
      _
    $region39: #{tpu_custom_call.1} parent=1 // pred_check_branch
      %98 = sbr.rel (0) target = $region41
    $region40: #{tpu_custom_call.1} parent=1 // pred_region
      %99 = dma.done [#allocation9], 4096
    $region41: #{tpu_custom_call.1} parent=1 // pred_fallthru
      _
    // Predicated region
    $region42: #{tpu_custom_call.1} parent=1 // pred_check
      _
    $region43: #{tpu_custom_call.1} parent=1 // pred_check_branch
      %101 = sbr.rel (0) target = $region45
    $region44: #{tpu_custom_call.1} parent=1 // pred_region
      %102 = dma.done [#allocation9], 2048
    $region45: #{tpu_custom_call.1} parent=1 // pred_fallthru
      _
    // Predicated region
    $region46: #{tpu_custom_call.1} parent=1 // pred_check
      _
    $region47: #{tpu_custom_call.1} parent=1 // pred_check_branch
      %104 = sbr.rel (0) target = $region49
    $region48: #{tpu_custom_call.1} parent=1 // pred_region
      %105 = dma.done [#allocation12], 2048
    $region49: #{tpu_custom_call.1} parent=1 // pred_fallthru
      _
    %v108 = vld [vmem:[#allocation2] sm:$0xff]
    %v109 = vld [vmem:[#allocation2 + $0x8] sm:$0xff]
    %v110 = vld [vmem:[#allocation2 + $0x10] sm:$0xff]
    %v111 = vld [vmem:[#allocation2 + $0x18] sm:$0xff]
    %v112 = vld [vmem:[#allocation2 + $0x20] sm:$0xff]
    %v113 = vld [vmem:[#allocation2 + $0x28] sm:$0xff]
    %v114 = vld [vmem:[#allocation2 + $0x30] sm:$0xff]
    %v115 = vld [vmem:[#allocation2 + $0x38] sm:$0xff]
    %v116 = vld [vmem:[#allocation2 + $0x40] sm:$0xff]
    %v117 = vld [vmem:[#allocation2 + $0x48] sm:$0xff]
    %v118 = vld [vmem:[#allocation2 + $0x50] sm:$0xff]
    %v119 = vld [vmem:[#allocation2 + $0x58] sm:$0xff]
    %v120 = vld [vmem:[#allocation2 + $0x60] sm:$0xff]
    %v121 = vld [vmem:[#allocation2 + $0x68] sm:$0xff]
    %v122 = vld [vmem:[#allocation2 + $0x70] sm:$0xff]
    %v123 = vld [vmem:[#allocation2 + $0x78] sm:$0xff]
    %v124 = vld [vmem:[#allocation2 + $0x80] sm:$0xff]
    %v125 = vld [vmem:[#allocation2 + $0x88] sm:$0xff]
    %v126 = vld [vmem:[#allocation2 + $0x90] sm:$0xff]
    %v127 = vld [vmem:[#allocation2 + $0x98] sm:$0xff]
    %v128 = vld [vmem:[#allocation2 + $0xa0] sm:$0xff]
    %v129 = vld [vmem:[#allocation2 + $0xa8] sm:$0xff]
    %v130 = vld [vmem:[#allocation2 + $0xb0] sm:$0xff]
    %v131 = vld [vmem:[#allocation2 + $0xb8] sm:$0xff]
    %v132 = vld [vmem:[#allocation2 + $0xc0] sm:$0xff]
    %v133 = vld [vmem:[#allocation2 + $0xc8] sm:$0xff]
    %v134 = vld [vmem:[#allocation2 + $0xd0] sm:$0xff]
    %v135 = vld [vmem:[#allocation2 + $0xd8] sm:$0xff]
    %v136 = vld [vmem:[#allocation2 + $0xe0] sm:$0xff]
    %v137 = vld [vmem:[#allocation2 + $0xe8] sm:$0xff]
    %v138 = vld [vmem:[#allocation2 + $0xf0] sm:$0xff]
    %v139 = vld [vmem:[#allocation2 + $0xf8] sm:$0xff]
    %v140 = vld [vmem:[#allocation7] sm:$0xff]
    %v141 = vld [vmem:[#allocation7 + $0x8] sm:$0xff]
    %v142 = vld [vmem:[#allocation7 + $0x10] sm:$0xff]
    %v143 = vld [vmem:[#allocation7 + $0x18] sm:$0xff]
    %v144 = vld [vmem:[#allocation7 + $0x20] sm:$0xff]
    %v145 = vld [vmem:[#allocation7 + $0x28] sm:$0xff]
    %v146 = vld [vmem:[#allocation7 + $0x30] sm:$0xff]
    %v147 = vld [vmem:[#allocation7 + $0x38] sm:$0xff]
    %v148 = vld [vmem:[#allocation7 + $0x40] sm:$0xff]
    %v149 = vld [vmem:[#allocation7 + $0x48] sm:$0xff]
    %v150 = vld [vmem:[#allocation7 + $0x50] sm:$0xff]
    %v151 = vld [vmem:[#allocation7 + $0x58] sm:$0xff]
    %v152 = vld [vmem:[#allocation7 + $0x60] sm:$0xff]
    %v153 = vld [vmem:[#allocation7 + $0x68] sm:$0xff]
    %v154 = vld [vmem:[#allocation7 + $0x70] sm:$0xff]
    %v155 = vld [vmem:[#allocation7 + $0x78] sm:$0xff]
    %v156 = vld [vmem:[#allocation7 + $0x80] sm:$0xff]
    %v157 = vld [vmem:[#allocation7 + $0x88] sm:$0xff]
    %v158 = vld [vmem:[#allocation7 + $0x90] sm:$0xff]
    %v159 = vld [vmem:[#allocation7 + $0x98] sm:$0xff]
    %v160 = vld [vmem:[#allocation7 + $0xa0] sm:$0xff]
    %v161 = vld [vmem:[#allocation7 + $0xa8] sm:$0xff]
    %v162 = vld [vmem:[#allocation7 + $0xb0] sm:$0xff]
    %v163 = vld [vmem:[#allocation7 + $0xb8] sm:$0xff]
    %v164 = vld [vmem:[#allocation7 + $0xc0] sm:$0xff]
    %v165 = vld [vmem:[#allocation7 + $0xc8] sm:$0xff]
    %v166 = vld [vmem:[#allocation7 + $0xd0] sm:$0xff]
    %v167 = vld [vmem:[#allocation7 + $0xd8] sm:$0xff]
    %v168 = vld [vmem:[#allocation7 + $0xe0] sm:$0xff]
    %v169 = vld [vmem:[#allocation7 + $0xe8] sm:$0xff]
    %v170 = vld [vmem:[#allocation7 + $0xf0] sm:$0xff]
    %v171 = vld [vmem:[#allocation7 + $0xf8] sm:$0xff]
    %172 = vmatprep.subr.mxu0 %v141
    %173 = vmatpush1.msra.mxu0 %v140
    %174 = vmatprep.subr.mxu0 %v143
    %175 = vmatpush1.msra.mxu0 %v142
    %176 = vmatprep.subr.mxu0 %v145
    %177 = vmatpush1.msra.mxu0 %v144
    %178 = vmatprep.subr.mxu0 %v147
    %179 = vmatpush1.msra.mxu0 %v146
    %180 = vmatprep.subr.mxu0 %v149
    %181 = vmatpush1.msra.mxu0 %v148
    %182 = vmatprep.subr.mxu0 %v151
    %183 = vmatpush1.msra.mxu0 %v150
    %184 = vmatprep.subr.mxu0 %v153
    %185 = vmatpush1.msra.mxu0 %v152
    %186 = vmatprep.subr.mxu0 %v155
    %187 = vmatpush1.msra.mxu0 %v154
    %188 = vmatprep.subr.mxu0 %v157
    %189 = vmatpush1.msra.mxu0 %v156
    %190 = vmatprep.subr.mxu0 %v159
    %191 = vmatpush1.msra.mxu0 %v158
    %192 = vmatprep.subr.mxu0 %v161
    %193 = vmatpush1.msra.mxu0 %v160
    %194 = vmatprep.subr.mxu0 %v163
    %195 = vmatpush1.msra.mxu0 %v162
    %196 = vmatprep.subr.mxu0 %v165
    %197 = vmatpush1.msra.mxu0 %v164
    %198 = vmatprep.subr.mxu0 %v167
    %199 = vmatpush1.msra.mxu0 %v166
    %200 = vmatprep.subr.mxu0 %v169
    %201 = vmatpush1.msra.mxu0 %v168
    %202 = vmatprep.subr.mxu0 %v171
    %203 = vmatpush1.msra.mxu0 %v170
    %204 = vmatprep.subr.mxu0 0.0
    %205 = vmatpush1.msra.mxu0 0.0
    %206 = vmatprep.subr.mxu0 0.0
    %207 = vmatpush1.msra.mxu0 0.0
    %208 = vmatprep.subr.mxu0 0.0
    %209 = vmatpush1.msra.mxu0 0.0
    %210 = vmatprep.subr.mxu0 0.0
    %211 = vmatpush1.msra.mxu0 0.0
    %212 = vmatprep.subr.mxu0 0.0
    %213 = vmatpush1.msra.mxu0 0.0
    %214 = vmatprep.subr.mxu0 0.0
    %215 = vmatpush1.msra.mxu0 0.0
    %216 = vmatprep.subr.mxu0 0.0
    %217 = vmatpush1.msra.mxu0 0.0
    %218 = vmatprep.subr.mxu0 0.0
    %219 = vmatpush1.msra.mxu0 0.0
    %220 = vmatprep.subr.mxu0 0.0
    %221 = vmatpush1.msra.mxu0 0.0
    %222 = vmatprep.subr.mxu0 0.0
    %223 = vmatpush1.msra.mxu0 0.0
    %224 = vmatprep.subr.mxu0 0.0
    %225 = vmatpush1.msra.mxu0 0.0
    %226 = vmatprep.subr.mxu0 0.0
    %227 = vmatpush1.msra.mxu0 0.0
    %228 = vmatprep.subr.mxu0 0.0
    %229 = vmatpush1.msra.mxu0 0.0
    %230 = vmatprep.subr.mxu0 0.0
    %231 = vmatpush1.msra.mxu0 0.0
    %232 = vmatprep.subr.mxu0 0.0
    %233 = vmatpush1.msra.mxu0 0.0
    %234 = vmatprep.subr.mxu0 0.0
    %235 = vmatpush1.msra.mxu0 0.0
    %236 = vmatprep.mubr.f32.mxu0 0.0
    %237 = vmatmul.mubr.f32.gmra.mrb[0].mxu0 %v108
    %v238 = vpop.f32.mrb[0].mxu0
    %v239 = vadd.f32 0.0, %v238
    %v240 = vpop.f32.mrb[0].mxu0
    %v241 = vadd.f32 0.0, %v240
    %242 = vmatprep.mubr.f32.mxu0 0.0
    %243 = vmatmul.mubr.f32.gmra.mrb[0].mxu0 %v109
    %v244 = vpop.f32.mrb[0].mxu0
    %v245 = vadd.f32 0.0, %v244
    %v246 = vpop.f32.mrb[0].mxu0
    %v247 = vadd.f32 0.0, %v246
    %248 = vmatprep.mubr.f32.mxu0 0.0
    %249 = vmatmul.mubr.f32.gmra.mrb[0].mxu0 %v110
    %v250 = vpop.f32.mrb[0].mxu0
    %v251 = vadd.f32 0.0, %v250
    %v252 = vpop.f32.mrb[0].mxu0
    %v253 = vadd.f32 0.0, %v252
    %254 = vmatprep.mubr.f32.mxu0 0.0
    %255 = vmatmul.mubr.f32.gmra.mrb[0].mxu0 %v111
    %v256 = vpop.f32.mrb[0].mxu0
    %v257 = vadd.f32 0.0, %v256
    %v258 = vpop.f32.mrb[0].mxu0
    %v259 = vadd.f32 0.0, %v258
    %260 = vmatprep.mubr.f32.mxu0 0.0
    %261 = vmatmul.mubr.f32.gmra.mrb[0].mxu0 %v112
    %v262 = vpop.f32.mrb[0].mxu0
    %v263 = vadd.f32 0.0, %v262
    %v264 = vpop.f32.mrb[0].mxu0
    %v265 = vadd.f32 0.0, %v264
    %266 = vmatprep.mubr.f32.mxu0 0.0
    %267 = vmatmul.mubr.f32.gmra.mrb[0].mxu0 %v113
    %v268 = vpop.f32.mrb[0].mxu0
    %v269 = vadd.f32 0.0, %v268
    %v270 = vpop.f32.mrb[0].mxu0
    %v271 = vadd.f32 0.0, %v270
    %272 = vmatprep.mubr.f32.mxu0 0.0
    %273 = vmatmul.mubr.f32.gmra.mrb[0].mxu0 %v114
    %v274 = vpop.f32.mrb[0].mxu0
    %v275 = vadd.f32 0.0, %v274
    %v276 = vpop.f32.mrb[0].mxu0
    %v277 = vadd.f32 0.0, %v276
    %278 = vmatprep.mubr.f32.mxu0 0.0
    %279 = vmatmul.mubr.f32.gmra.mrb[0].mxu0 %v115
    %v280 = vpop.f32.mrb[0].mxu0
    %v281 = vadd.f32 0.0, %v280
    %v282 = vpop.f32.mrb[0].mxu0
    %v283 = vadd.f32 0.0, %v282
    %284 = vmatprep.mubr.f32.mxu0 0.0
    %285 = vmatmul.mubr.f32.gmra.mrb[0].mxu0 %v116
    %v286 = vpop.f32.mrb[0].mxu0
    %v287 = vadd.f32 0.0, %v286
    %v288 = vpop.f32.mrb[0].mxu0
    %v289 = vadd.f32 0.0, %v288
    %290 = vmatprep.mubr.f32.mxu0 0.0
    %291 = vmatmul.mubr.f32.gmra.mrb[0].mxu0 %v117
    %v292 = vpop.f32.mrb[0].mxu0
    %v293 = vadd.f32 0.0, %v292
    %v294 = vpop.f32.mrb[0].mxu0
    %v295 = vadd.f32 0.0, %v294
    %296 = vmatprep.mubr.f32.mxu0 0.0
    %297 = vmatmul.mubr.f32.gmra.mrb[0].mxu0 %v118
    %v298 = vpop.f32.mrb[0].mxu0
    %v299 = vadd.f32 0.0, %v298
    %v300 = vpop.f32.mrb[0].mxu0
    %v301 = vadd.f32 0.0, %v300
    %302 = vmatprep.mubr.f32.mxu0 0.0
    %303 = vmatmul.mubr.f32.gmra.mrb[0].mxu0 %v119
    %v304 = vpop.f32.mrb[0].mxu0
    %v305 = vadd.f32 0.0, %v304
    %v306 = vpop.f32.mrb[0].mxu0
    %v307 = vadd.f32 0.0, %v306
    %308 = vmatprep.mubr.f32.mxu0 0.0
    %309 = vmatmul.mubr.f32.gmra.mrb[0].mxu0 %v120
    %v310 = vpop.f32.mrb[0].mxu0
    %v311 = vadd.f32 0.0, %v310
    %v312 = vpop.f32.mrb[0].mxu0
    %v313 = vadd.f32 0.0, %v312
    %314 = vmatprep.mubr.f32.mxu0 0.0
    %315 = vmatmul.mubr.f32.gmra.mrb[0].mxu0 %v121
    %v316 = vpop.f32.mrb[0].mxu0
    %v317 = vadd.f32 0.0, %v316
    %v318 = vpop.f32.mrb[0].mxu0
    %v319 = vadd.f32 0.0, %v318
    %320 = vmatprep.mubr.f32.mxu0 0.0
    %321 = vmatmul.mubr.f32.gmra.mrb[0].mxu0 %v122
    %v322 = vpop.f32.mrb[0].mxu0
    %v323 = vadd.f32 0.0, %v322
    %v324 = vpop.f32.mrb[0].mxu0
    %v325 = vadd.f32 0.0, %v324
    %326 = vmatprep.mubr.f32.mxu0 0.0
    %327 = vmatmul.mubr.f32.gmra.mrb[0].mxu0 %v123
    %v328 = vpop.f32.mrb[0].mxu0
    %v329 = vadd.f32 0.0, %v328
    %v330 = vpop.f32.mrb[0].mxu0
    %v331 = vadd.f32 0.0, %v330
    %332 = vmatprep.mubr.f32.mxu0 0.0
    %333 = vmatmul.mubr.f32.gmra.mrb[0].mxu0 %v124
    %v334 = vpop.f32.mrb[0].mxu0
    %v335 = vadd.f32 0.0, %v334
    %v336 = vpop.f32.mrb[0].mxu0
    %v337 = vadd.f32 0.0, %v336
    %338 = vmatprep.mubr.f32.mxu0 0.0
    %339 = vmatmul.mubr.f32.gmra.mrb[0].mxu0 %v125
    %v340 = vpop.f32.mrb[0].mxu0
    %v341 = vadd.f32 0.0, %v340
    %v342 = vpop.f32.mrb[0].mxu0
    %v343 = vadd.f32 0.0, %v342
    %344 = vmatprep.mubr.f32.mxu0 0.0
    %345 = vmatmul.mubr.f32.gmra.mrb[0].mxu0 %v126
    %v346 = vpop.f32.mrb[0].mxu0
    %v347 = vadd.f32 0.0, %v346
    %v348 = vpop.f32.mrb[0].mxu0
    %v349 = vadd.f32 0.0, %v348
    %350 = vmatprep.mubr.f32.mxu0 0.0
    %351 = vmatmul.mubr.f32.gmra.mrb[0].mxu0 %v127
    %v352 = vpop.f32.mrb[0].mxu0
    %v353 = vadd.f32 0.0, %v352
    %v354 = vpop.f32.mrb[0].mxu0
    %v355 = vadd.f32 0.0, %v354
    %356 = vmatprep.mubr.f32.mxu0 0.0
    %357 = vmatmul.mubr.f32.gmra.mrb[0].mxu0 %v128
    %v358 = vpop.f32.mrb[0].mxu0
    %v359 = vadd.f32 0.0, %v358
    %v360 = vpop.f32.mrb[0].mxu0
    %v361 = vadd.f32 0.0, %v360
    %362 = vmatprep.mubr.f32.mxu0 0.0
    %363 = vmatmul.mubr.f32.gmra.mrb[0].mxu0 %v129
    %v364 = vpop.f32.mrb[0].mxu0
    %v365 = vadd.f32 0.0, %v364
    %v366 = vpop.f32.mrb[0].mxu0
    %v367 = vadd.f32 0.0, %v366
    %368 = vmatprep.mubr.f32.mxu0 0.0
    %369 = vmatmul.mubr.f32.gmra.mrb[0].mxu0 %v130
    %v370 = vpop.f32.mrb[0].mxu0
    %v371 = vadd.f32 0.0, %v370
    %v372 = vpop.f32.mrb[0].mxu0
    %v373 = vadd.f32 0.0, %v372
    %374 = vmatprep.mubr.f32.mxu0 0.0
    %375 = vmatmul.mubr.f32.gmra.mrb[0].mxu0 %v131
    %v376 = vpop.f32.mrb[0].mxu0
    %v377 = vadd.f32 0.0, %v376
    %v378 = vpop.f32.mrb[0].mxu0
    %v379 = vadd.f32 0.0, %v378
    %380 = vmatprep.mubr.f32.mxu0 0.0
    %381 = vmatmul.mubr.f32.gmra.mrb[0].mxu0 %v132
    %v382 = vpop.f32.mrb[0].mxu0
    %v383 = vadd.f32 0.0, %v382
    %v384 = vpop.f32.mrb[0].mxu0
    %v385 = vadd.f32 0.0, %v384
    %386 = vmatprep.mubr.f32.mxu0 0.0
    %387 = vmatmul.mubr.f32.gmra.mrb[0].mxu0 %v133
    %v388 = vpop.f32.mrb[0].mxu0
    %v389 = vadd.f32 0.0, %v388
    %v390 = vpop.f32.mrb[0].mxu0
    %v391 = vadd.f32 0.0, %v390
    %392 = vmatprep.mubr.f32.mxu0 0.0
    %393 = vmatmul.mubr.f32.gmra.mrb[0].mxu0 %v134
    %v394 = vpop.f32.mrb[0].mxu0
    %v395 = vadd.f32 0.0, %v394
    %v396 = vpop.f32.mrb[0].mxu0
    %v397 = vadd.f32 0.0, %v396
    %398 = vmatprep.mubr.f32.mxu0 0.0
    %399 = vmatmul.mubr.f32.gmra.mrb[0].mxu0 %v135
    %v400 = vpop.f32.mrb[0].mxu0
    %v401 = vadd.f32 0.0, %v400
    %v402 = vpop.f32.mrb[0].mxu0
    %v403 = vadd.f32 0.0, %v402
    %404 = vmatprep.mubr.f32.mxu0 0.0
    %405 = vmatmul.mubr.f32.gmra.mrb[0].mxu0 %v136
    %v406 = vpop.f32.mrb[0].mxu0
    %v407 = vadd.f32 0.0, %v406
    %v408 = vpop.f32.mrb[0].mxu0
    %v409 = vadd.f32 0.0, %v408
    %410 = vmatprep.mubr.f32.mxu0 0.0
    %411 = vmatmul.mubr.f32.gmra.mrb[0].mxu0 %v137
    %v412 = vpop.f32.mrb[0].mxu0
    %v413 = vadd.f32 0.0, %v412
    %v414 = vpop.f32.mrb[0].mxu0
    %v415 = vadd.f32 0.0, %v414
    %416 = vmatprep.mubr.f32.mxu0 0.0
    %417 = vmatmul.mubr.f32.gmra.mrb[0].mxu0 %v138
    %v418 = vpop.f32.mrb[0].mxu0
    %v419 = vadd.f32 0.0, %v418
    %v420 = vpop.f32.mrb[0].mxu0
    %v421 = vadd.f32 0.0, %v420
    %422 = vmatprep.mubr.f32.mxu0 0.0
    %423 = vmatmul.mubr.f32.gmra.mrb[0].mxu0 %v139
    %v424 = vpop.f32.mrb[0].mxu0
    %v425 = vadd.f32 0.0, %v424
    %v426 = vpop.f32.mrb[0].mxu0
    %v427 = vadd.f32 0.0, %v426
    %428 = vdwg.mxu0
    %v429 = vld [vmem:[#allocation5] sm:$0xff]
    %v430 = vld [vmem:[#allocation5 + $0x8] sm:$0xff]
    %v431 = vld [vmem:[#allocation5 + $0x10] sm:$0xff]
    %v432 = vld [vmem:[#allocation5 + $0x18] sm:$0xff]
    %v433 = vld [vmem:[#allocation5 + $0x20] sm:$0xff]
    %v434 = vld [vmem:[#allocation5 + $0x28] sm:$0xff]
    %v435 = vld [vmem:[#allocation5 + $0x30] sm:$0xff]
    %v436 = vld [vmem:[#allocation5 + $0x38] sm:$0xff]
    %v437 = vld [vmem:[#allocation5 + $0x40] sm:$0xff]
    %v438 = vld [vmem:[#allocation5 + $0x48] sm:$0xff]
    %v439 = vld [vmem:[#allocation5 + $0x50] sm:$0xff]
    %v440 = vld [vmem:[#allocation5 + $0x58] sm:$0xff]
    %v441 = vld [vmem:[#allocation5 + $0x60] sm:$0xff]
    %v442 = vld [vmem:[#allocation5 + $0x68] sm:$0xff]
    %v443 = vld [vmem:[#allocation5 + $0x70] sm:$0xff]
    %v444 = vld [vmem:[#allocation5 + $0x78] sm:$0xff]
    %v445 = vld [vmem:[#allocation5 + $0x80] sm:$0xff]
    %v446 = vld [vmem:[#allocation5 + $0x88] sm:$0xff]
    %v447 = vld [vmem:[#allocation5 + $0x90] sm:$0xff]
    %v448 = vld [vmem:[#allocation5 + $0x98] sm:$0xff]
    %v449 = vld [vmem:[#allocation5 + $0xa0] sm:$0xff]
    %v450 = vld [vmem:[#allocation5 + $0xa8] sm:$0xff]
    %v451 = vld [vmem:[#allocation5 + $0xb0] sm:$0xff]
    %v452 = vld [vmem:[#allocation5 + $0xb8] sm:$0xff]
    %v453 = vld [vmem:[#allocation5 + $0xc0] sm:$0xff]
    %v454 = vld [vmem:[#allocation5 + $0xc8] sm:$0xff]
    %v455 = vld [vmem:[#allocation5 + $0xd0] sm:$0xff]
    %v456 = vld [vmem:[#allocation5 + $0xd8] sm:$0xff]
    %v457 = vld [vmem:[#allocation5 + $0xe0] sm:$0xff]
    %v458 = vld [vmem:[#allocation5 + $0xe8] sm:$0xff]
    %v459 = vld [vmem:[#allocation5 + $0xf0] sm:$0xff]
    %v460 = vld [vmem:[#allocation5 + $0xf8] sm:$0xff]
    %v461 = vld [vmem:[#allocation8] sm:$0xff]
    %v462 = vld [vmem:[#allocation8 + $0x8] sm:$0xff]
    %v463 = vld [vmem:[#allocation8 + $0x10] sm:$0xff]
    %v464 = vld [vmem:[#allocation8 + $0x18] sm:$0xff]
    %v465 = vld [vmem:[#allocation8 + $0x20] sm:$0xff]
    %v466 = vld [vmem:[#allocation8 + $0x28] sm:$0xff]
    %v467 = vld [vmem:[#allocation8 + $0x30] sm:$0xff]
    %v468 = vld [vmem:[#allocation8 + $0x38] sm:$0xff]
    %v469 = vld [vmem:[#allocation8 + $0x40] sm:$0xff]
    %v470 = vld [vmem:[#allocation8 + $0x48] sm:$0xff]
    %v471 = vld [vmem:[#allocation8 + $0x50] sm:$0xff]
    %v472 = vld [vmem:[#allocation8 + $0x58] sm:$0xff]
    %v473 = vld [vmem:[#allocation8 + $0x60] sm:$0xff]
    %v474 = vld [vmem:[#allocation8 + $0x68] sm:$0xff]
    %v475 = vld [vmem:[#allocation8 + $0x70] sm:$0xff]
    %v476 = vld [vmem:[#allocation8 + $0x78] sm:$0xff]
    %v477 = vld [vmem:[#allocation8 + $0x80] sm:$0xff]
    %v478 = vld [vmem:[#allocation8 + $0x88] sm:$0xff]
    %v479 = vld [vmem:[#allocation8 + $0x90] sm:$0xff]
    %v480 = vld [vmem:[#allocation8 + $0x98] sm:$0xff]
    %v481 = vld [vmem:[#allocation8 + $0xa0] sm:$0xff]
    %v482 = vld [vmem:[#allocation8 + $0xa8] sm:$0xff]
    %v483 = vld [vmem:[#allocation8 + $0xb0] sm:$0xff]
    %v484 = vld [vmem:[#allocation8 + $0xb8] sm:$0xff]
    %v485 = vld [vmem:[#allocation8 + $0xc0] sm:$0xff]
    %v486 = vld [vmem:[#allocation8 + $0xc8] sm:$0xff]
    %v487 = vld [vmem:[#allocation8 + $0xd0] sm:$0xff]
    %v488 = vld [vmem:[#allocation8 + $0xd8] sm:$0xff]
    %v489 = vld [vmem:[#allocation8 + $0xe0] sm:$0xff]
    %v490 = vld [vmem:[#allocation8 + $0xe8] sm:$0xff]
    %v491 = vld [vmem:[#allocation8 + $0xf0] sm:$0xff]
    %v492 = vld [vmem:[#allocation8 + $0xf8] sm:$0xff]
    %493 = vmatprep.subr.mxu0 %v462
    %494 = vmatpush1.msra.mxu0 %v461
    %495 = vmatprep.subr.mxu0 %v464
    %496 = vmatpush1.msra.mxu0 %v463
    %497 = vmatprep.subr.mxu0 %v466
    %498 = vmatpush1.msra.mxu0 %v465
    %499 = vmatprep.subr.mxu0 %v468
    %500 = vmatpush1.msra.mxu0 %v467
    %501 = vmatprep.subr.mxu0 %v470
    %502 = vmatpush1.msra.mxu0 %v469
    %503 = vmatprep.subr.mxu0 %v472
    %504 = vmatpush1.msra.mxu0 %v471
    %505 = vmatprep.subr.mxu0 %v474
    %506 = vmatpush1.msra.mxu0 %v473
    %507 = vmatprep.subr.mxu0 %v476
    %508 = vmatpush1.msra.mxu0 %v475
    %509 = vmatprep.subr.mxu0 %v478
    %510 = vmatpush1.msra.mxu0 %v477
    %511 = vmatprep.subr.mxu0 %v480
    %512 = vmatpush1.msra.mxu0 %v479
    %513 = vmatprep.subr.mxu0 %v482
    %514 = vmatpush1.msra.mxu0 %v481
    %515 = vmatprep.subr.mxu0 %v484
    %516 = vmatpush1.msra.mxu0 %v483
    %517 = vmatprep.subr.mxu0 %v486
    %518 = vmatpush1.msra.mxu0 %v485
    %519 = vmatprep.subr.mxu0 %v488
    %520 = vmatpush1.msra.mxu0 %v487
    %521 = vmatprep.subr.mxu0 %v490
    %522 = vmatpush1.msra.mxu0 %v489
    %523 = vmatprep.subr.mxu0 %v492
    %524 = vmatpush1.msra.mxu0 %v491
    %525 = vmatprep.subr.mxu0 0.0
    %526 = vmatpush1.msra.mxu0 0.0
    %527 = vmatprep.subr.mxu0 0.0
    %528 = vmatpush1.msra.mxu0 0.0
    %529 = vmatprep.subr.mxu0 0.0
    %530 = vmatpush1.msra.mxu0 0.0
    %531 = vmatprep.subr.mxu0 0.0
    %532 = vmatpush1.msra.mxu0 0.0
    %533 = vmatprep.subr.mxu0 0.0
    %534 = vmatpush1.msra.mxu0 0.0
    %535 = vmatprep.subr.mxu0 0.0
    %536 = vmatpush1.msra.mxu0 0.0
    %537 = vmatprep.subr.mxu0 0.0
    %538 = vmatpush1.msra.mxu0 0.0
    %539 = vmatprep.subr.mxu0 0.0
    %540 = vmatpush1.msra.mxu0 0.0
    %541 = vmatprep.subr.mxu0 0.0
    %542 = vmatpush1.msra.mxu0 0.0
    %543 = vmatprep.subr.mxu0 0.0
    %544 = vmatpush1.msra.mxu0 0.0
    %545 = vmatprep.subr.mxu0 0.0
    %546 = vmatpush1.msra.mxu0 0.0
    %547 = vmatprep.subr.mxu0 0.0
    %548 = vmatpush1.msra.mxu0 0.0
    %549 = vmatprep.subr.mxu0 0.0
    %550 = vmatpush1.msra.mxu0 0.0
    %551 = vmatprep.subr.mxu0 0.0
    %552 = vmatpush1.msra.mxu0 0.0
    %553 = vmatprep.subr.mxu0 0.0
    %554 = vmatpush1.msra.mxu0 0.0
    %555 = vmatprep.subr.mxu0 0.0
    %556 = vmatpush1.msra.mxu0 0.0
    %557 = vmatprep.mubr.f32.mxu0 0.0
    %558 = vmatmul.mubr.f32.gmra.mrb[0].mxu0 %v429
    %v559 = vpop.f32.mrb[0].mxu0
    %v560 = vadd.f32 0.0, %v559
    %v561 = vpop.f32.mrb[0].mxu0
    %v562 = vadd.f32 0.0, %v561
    %563 = vmatprep.mubr.f32.mxu0 0.0
    %564 = vmatmul.mubr.f32.gmra.mrb[0].mxu0 %v430
    %v565 = vpop.f32.mrb[0].mxu0
    %v566 = vadd.f32 0.0, %v565
    %v567 = vpop.f32.mrb[0].mxu0
    %v568 = vadd.f32 0.0, %v567
    %569 = vmatprep.mubr.f32.mxu0 0.0
    %570 = vmatmul.mubr.f32.gmra.mrb[0].mxu0 %v431
    %v571 = vpop.f32.mrb[0].mxu0
    %v572 = vadd.f32 0.0, %v571
    %v573 = vpop.f32.mrb[0].mxu0
    %v574 = vadd.f32 0.0, %v573
    %575 = vmatprep.mubr.f32.mxu0 0.0
    %576 = vmatmul.mubr.f32.gmra.mrb[0].mxu0 %v432
    %v577 = vpop.f32.mrb[0].mxu0
    %v578 = vadd.f32 0.0, %v577
    %v579 = vpop.f32.mrb[0].mxu0
    %v580 = vadd.f32 0.0, %v579
    %581 = vmatprep.mubr.f32.mxu0 0.0
    %582 = vmatmul.mubr.f32.gmra.mrb[0].mxu0 %v433
    %v583 = vpop.f32.mrb[0].mxu0
    %v584 = vadd.f32 0.0, %v583
    %v585 = vpop.f32.mrb[0].mxu0
    %v586 = vadd.f32 0.0, %v585
    %587 = vmatprep.mubr.f32.mxu0 0.0
    %588 = vmatmul.mubr.f32.gmra.mrb[0].mxu0 %v434
    %v589 = vpop.f32.mrb[0].mxu0
    %v590 = vadd.f32 0.0, %v589
    %v591 = vpop.f32.mrb[0].mxu0
    %v592 = vadd.f32 0.0, %v591
    %593 = vmatprep.mubr.f32.mxu0 0.0
    %594 = vmatmul.mubr.f32.gmra.mrb[0].mxu0 %v435
    %v595 = vpop.f32.mrb[0].mxu0
    %v596 = vadd.f32 0.0, %v595
    %v597 = vpop.f32.mrb[0].mxu0
    %v598 = vadd.f32 0.0, %v597
    %599 = vmatprep.mubr.f32.mxu0 0.0
    %600 = vmatmul.mubr.f32.gmra.mrb[0].mxu0 %v436
    %v601 = vpop.f32.mrb[0].mxu0
    %v602 = vadd.f32 0.0, %v601
    %v603 = vpop.f32.mrb[0].mxu0
    %v604 = vadd.f32 0.0, %v603
    %605 = vmatprep.mubr.f32.mxu0 0.0
    %606 = vmatmul.mubr.f32.gmra.mrb[0].mxu0 %v437
    %v607 = vpop.f32.mrb[0].mxu0
    %v608 = vadd.f32 0.0, %v607
    %v609 = vpop.f32.mrb[0].mxu0
    %v610 = vadd.f32 0.0, %v609
    %611 = vmatprep.mubr.f32.mxu0 0.0
    %612 = vmatmul.mubr.f32.gmra.mrb[0].mxu0 %v438
    %v613 = vpop.f32.mrb[0].mxu0
    %v614 = vadd.f32 0.0, %v613
    %v615 = vpop.f32.mrb[0].mxu0
    %v616 = vadd.f32 0.0, %v615
    %617 = vmatprep.mubr.f32.mxu0 0.0
    %618 = vmatmul.mubr.f32.gmra.mrb[0].mxu0 %v439
    %v619 = vpop.f32.mrb[0].mxu0
    %v620 = vadd.f32 0.0, %v619
    %v621 = vpop.f32.mrb[0].mxu0
    %v622 = vadd.f32 0.0, %v621
    %623 = vmatprep.mubr.f32.mxu0 0.0
    %624 = vmatmul.mubr.f32.gmra.mrb[0].mxu0 %v440
    %v625 = vpop.f32.mrb[0].mxu0
    %v626 = vadd.f32 0.0, %v625
    %v627 = vpop.f32.mrb[0].mxu0
    %v628 = vadd.f32 0.0, %v627
    %629 = vmatprep.mubr.f32.mxu0 0.0
    %630 = vmatmul.mubr.f32.gmra.mrb[0].mxu0 %v441
    %v631 = vpop.f32.mrb[0].mxu0
    %v632 = vadd.f32 0.0, %v631
    %v633 = vpop.f32.mrb[0].mxu0
    %v634 = vadd.f32 0.0, %v633
    %635 = vmatprep.mubr.f32.mxu0 0.0
    %636 = vmatmul.mubr.f32.gmra.mrb[0].mxu0 %v442
    %v637 = vpop.f32.mrb[0].mxu0
    %v638 = vadd.f32 0.0, %v637
    %v639 = vpop.f32.mrb[0].mxu0
    %v640 = vadd.f32 0.0, %v639
    %641 = vmatprep.mubr.f32.mxu0 0.0
    %642 = vmatmul.mubr.f32.gmra.mrb[0].mxu0 %v443
    %v643 = vpop.f32.mrb[0].mxu0
    %v644 = vadd.f32 0.0, %v643
    %v645 = vpop.f32.mrb[0].mxu0
    %v646 = vadd.f32 0.0, %v645
    %647 = vmatprep.mubr.f32.mxu0 0.0
    %648 = vmatmul.mubr.f32.gmra.mrb[0].mxu0 %v444
    %v649 = vpop.f32.mrb[0].mxu0
    %v650 = vadd.f32 0.0, %v649
    %v651 = vpop.f32.mrb[0].mxu0
    %v652 = vadd.f32 0.0, %v651
    %653 = vmatprep.mubr.f32.mxu0 0.0
    %654 = vmatmul.mubr.f32.gmra.mrb[0].mxu0 %v445
    %v655 = vpop.f32.mrb[0].mxu0
    %v656 = vadd.f32 0.0, %v655
    %v657 = vpop.f32.mrb[0].mxu0
    %v658 = vadd.f32 0.0, %v657
    %659 = vmatprep.mubr.f32.mxu0 0.0
    %660 = vmatmul.mubr.f32.gmra.mrb[0].mxu0 %v446
    %v661 = vpop.f32.mrb[0].mxu0
    %v662 = vadd.f32 0.0, %v661
    %v663 = vpop.f32.mrb[0].mxu0
    %v664 = vadd.f32 0.0, %v663
    %665 = vmatprep.mubr.f32.mxu0 0.0
    %666 = vmatmul.mubr.f32.gmra.mrb[0].mxu0 %v447
    %v667 = vpop.f32.mrb[0].mxu0
    %v668 = vadd.f32 0.0, %v667
    %v669 = vpop.f32.mrb[0].mxu0
    %v670 = vadd.f32 0.0, %v669
    %671 = vmatprep.mubr.f32.mxu0 0.0
    %672 = vmatmul.mubr.f32.gmra.mrb[0].mxu0 %v448
    %v673 = vpop.f32.mrb[0].mxu0
    %v674 = vadd.f32 0.0, %v673
    %v675 = vpop.f32.mrb[0].mxu0
    %v676 = vadd.f32 0.0, %v675
    %677 = vmatprep.mubr.f32.mxu0 0.0
    %678 = vmatmul.mubr.f32.gmra.mrb[0].mxu0 %v449
    %v679 = vpop.f32.mrb[0].mxu0
    %v680 = vadd.f32 0.0, %v679
    %v681 = vpop.f32.mrb[0].mxu0
    %v682 = vadd.f32 0.0, %v681
    %683 = vmatprep.mubr.f32.mxu0 0.0
    %684 = vmatmul.mubr.f32.gmra.mrb[0].mxu0 %v450
    %v685 = vpop.f32.mrb[0].mxu0
    %v686 = vadd.f32 0.0, %v685
    %v687 = vpop.f32.mrb[0].mxu0
    %v688 = vadd.f32 0.0, %v687
    %689 = vmatprep.mubr.f32.mxu0 0.0
    %690 = vmatmul.mubr.f32.gmra.mrb[0].mxu0 %v451
    %v691 = vpop.f32.mrb[0].mxu0
    %v692 = vadd.f32 0.0, %v691
    %v693 = vpop.f32.mrb[0].mxu0
    %v694 = vadd.f32 0.0, %v693
    %695 = vmatprep.mubr.f32.mxu0 0.0
    %696 = vmatmul.mubr.f32.gmra.mrb[0].mxu0 %v452
    %v697 = vpop.f32.mrb[0].mxu0
    %v698 = vadd.f32 0.0, %v697
    %v699 = vpop.f32.mrb[0].mxu0
    %v700 = vadd.f32 0.0, %v699
    %701 = vmatprep.mubr.f32.mxu0 0.0
    %702 = vmatmul.mubr.f32.gmra.mrb[0].mxu0 %v453
    %v703 = vpop.f32.mrb[0].mxu0
    %v704 = vadd.f32 0.0, %v703
    %v705 = vpop.f32.mrb[0].mxu0
    %v706 = vadd.f32 0.0, %v705
    %707 = vmatprep.mubr.f32.mxu0 0.0
    %708 = vmatmul.mubr.f32.gmra.mrb[0].mxu0 %v454
    %v709 = vpop.f32.mrb[0].mxu0
    %v710 = vadd.f32 0.0, %v709
    %v711 = vpop.f32.mrb[0].mxu0
    %v712 = vadd.f32 0.0, %v711
    %713 = vmatprep.mubr.f32.mxu0 0.0
    %714 = vmatmul.mubr.f32.gmra.mrb[0].mxu0 %v455
    %v715 = vpop.f32.mrb[0].mxu0
    %v716 = vadd.f32 0.0, %v715
    %v717 = vpop.f32.mrb[0].mxu0
    %v718 = vadd.f32 0.0, %v717
    %719 = vmatprep.mubr.f32.mxu0 0.0
    %720 = vmatmul.mubr.f32.gmra.mrb[0].mxu0 %v456
    %v721 = vpop.f32.mrb[0].mxu0
    %v722 = vadd.f32 0.0, %v721
    %v723 = vpop.f32.mrb[0].mxu0
    %v724 = vadd.f32 0.0, %v723
    %725 = vmatprep.mubr.f32.mxu0 0.0
    %726 = vmatmul.mubr.f32.gmra.mrb[0].mxu0 %v457
    %v727 = vpop.f32.mrb[0].mxu0
    %v728 = vadd.f32 0.0, %v727
    %v729 = vpop.f32.mrb[0].mxu0
    %v730 = vadd.f32 0.0, %v729
    %731 = vmatprep.mubr.f32.mxu0 0.0
    %732 = vmatmul.mubr.f32.gmra.mrb[0].mxu0 %v458
    %v733 = vpop.f32.mrb[0].mxu0
    %v734 = vadd.f32 0.0, %v733
    %v735 = vpop.f32.mrb[0].mxu0
    %v736 = vadd.f32 0.0, %v735
    %737 = vmatprep.mubr.f32.mxu0 0.0
    %738 = vmatmul.mubr.f32.gmra.mrb[0].mxu0 %v459
    %v739 = vpop.f32.mrb[0].mxu0
    %v740 = vadd.f32 0.0, %v739
    %v741 = vpop.f32.mrb[0].mxu0
    %v742 = vadd.f32 0.0, %v741
    %743 = vmatprep.mubr.f32.mxu0 0.0
    %744 = vmatmul.mubr.f32.gmra.mrb[0].mxu0 %v460
    %v745 = vpop.f32.mrb[0].mxu0
    %v746 = vadd.f32 0.0, %v745
    %v747 = vpop.f32.mrb[0].mxu0
    %v748 = vadd.f32 0.0, %v747
    %749 = vdwg.mxu0
    %v750 = vld [vmem:[#allocation10] sm:$0xff]
    %v751 = vld [vmem:[#allocation10 + $0x8] sm:$0xff]
    %v752 = vld [vmem:[#allocation10 + $0x10] sm:$0xff]
    %v753 = vld [vmem:[#allocation10 + $0x18] sm:$0xff]
    %v754 = vld [vmem:[#allocation10 + $0x20] sm:$0xff]
    %v755 = vld [vmem:[#allocation10 + $0x28] sm:$0xff]
    %v756 = vld [vmem:[#allocation10 + $0x30] sm:$0xff]
    %v757 = vld [vmem:[#allocation10 + $0x38] sm:$0xff]
    %v758 = vld [vmem:[#allocation10 + $0x40] sm:$0xff]
    %v759 = vld [vmem:[#allocation10 + $0x48] sm:$0xff]
    %v760 = vld [vmem:[#allocation10 + $0x50] sm:$0xff]
    %v761 = vld [vmem:[#allocation10 + $0x58] sm:$0xff]
    %v762 = vld [vmem:[#allocation10 + $0x60] sm:$0xff]
    %v763 = vld [vmem:[#allocation10 + $0x68] sm:$0xff]
    %v764 = vld [vmem:[#allocation10 + $0x70] sm:$0xff]
    %v765 = vld [vmem:[#allocation10 + $0x78] sm:$0xff]
    %vm766 = vnez %v750
    %vm767 = vnez %v751
    %vm768 = vnez %v752
    %vm769 = vnez %v753
    %vm770 = vnez %v754
    %vm771 = vnez %v755
    %vm772 = vnez %v756
    %vm773 = vnez %v757
    %vm774 = vnez %v758
    %vm775 = vnez %v759
    %vm776 = vnez %v760
    %vm777 = vnez %v761
    %vm778 = vnez %v762
    %vm779 = vnez %v763
    %vm780 = vnez %v764
    %vm781 = vnez %v765
    %v782 = vld [vmem:[#allocation11] sm:$0xff]
    %v783 = vld [vmem:[#allocation11 + $0x8] sm:$0xff]
    %v784 = vld [vmem:[#allocation11 + $0x10] sm:$0xff]
    %v785 = vld [vmem:[#allocation11 + $0x18] sm:$0xff]
    %v786 = vld [vmem:[#allocation11 + $0x20] sm:$0xff]
    %v787 = vld [vmem:[#allocation11 + $0x28] sm:$0xff]
    %v788 = vld [vmem:[#allocation11 + $0x30] sm:$0xff]
    %v789 = vld [vmem:[#allocation11 + $0x38] sm:$0xff]
    %v790 = vld [vmem:[#allocation11 + $0x40] sm:$0xff]
    %v791 = vld [vmem:[#allocation11 + $0x48] sm:$0xff]
    %v792 = vld [vmem:[#allocation11 + $0x50] sm:$0xff]
    %v793 = vld [vmem:[#allocation11 + $0x58] sm:$0xff]
    %v794 = vld [vmem:[#allocation11 + $0x60] sm:$0xff]
    %v795 = vld [vmem:[#allocation11 + $0x68] sm:$0xff]
    %v796 = vld [vmem:[#allocation11 + $0x70] sm:$0xff]
    %v797 = vld [vmem:[#allocation11 + $0x78] sm:$0xff]
    %vm798 = vnez %v782
    %vm799 = vnez %v783
    %vm800 = vnez %v784
    %vm801 = vnez %v785
    %vm802 = vnez %v786
    %vm803 = vnez %v787
    %vm804 = vnez %v788
    %vm805 = vnez %v789
    %vm806 = vnez %v790
    %vm807 = vnez %v791
    %vm808 = vnez %v792
    %vm809 = vnez %v793
    %vm810 = vnez %v794
    %vm811 = vnez %v795
    %vm812 = vnez %v796
    %vm813 = vnez %v797
    %v814 = vmul.f32 %v560, 1.442695
    %v815 = vpow.pop %v814
    %v816 = vmul.f32 %v562, 1.442695
    %v817 = vpow.pop %v816
    %v818 = vmul.f32 %v566, 1.442695
    %v819 = vpow.pop %v818
    %v820 = vmul.f32 %v568, 1.442695
    %v821 = vpow.pop %v820
    %v822 = vmul.f32 %v572, 1.442695
    %v823 = vpow.pop %v822
    %v824 = vmul.f32 %v574, 1.442695
    %v825 = vpow.pop %v824
    %v826 = vmul.f32 %v578, 1.442695
    %v827 = vpow.pop %v826
    %v828 = vmul.f32 %v580, 1.442695
    %v829 = vpow.pop %v828
    %v830 = vmul.f32 %v584, 1.442695
    %v831 = vpow.pop %v830
    %v832 = vmul.f32 %v586, 1.442695
    %v833 = vpow.pop %v832
    %v834 = vmul.f32 %v590, 1.442695
    %v835 = vpow.pop %v834
    %v836 = vmul.f32 %v592, 1.442695
    %v837 = vpow.pop %v836
    %v838 = vmul.f32 %v596, 1.442695
    %v839 = vpow.pop %v838
    %v840 = vmul.f32 %v598, 1.442695
    %v841 = vpow.pop %v840
    %v842 = vmul.f32 %v602, 1.442695
    %v843 = vpow.pop %v842
    %v844 = vmul.f32 %v604, 1.442695
    %v845 = vpow.pop %v844
    %v846 = vmul.f32 %v608, 1.442695
    %v847 = vpow.pop %v846
    %v848 = vmul.f32 %v610, 1.442695
    %v849 = vpow.pop %v848
    %v850 = vmul.f32 %v614, 1.442695
    %v851 = vpow.pop %v850
    %v852 = vmul.f32 %v616, 1.442695
    %v853 = vpow.pop %v852
    %v854 = vmul.f32 %v620, 1.442695
    %v855 = vpow.pop %v854
    %v856 = vmul.f32 %v622, 1.442695
    %v857 = vpow.pop %v856
    %v858 = vmul.f32 %v626, 1.442695
    %v859 = vpow.pop %v858
    %v860 = vmul.f32 %v628, 1.442695
    %v861 = vpow.pop %v860
    %v862 = vmul.f32 %v632, 1.442695
    %v863 = vpow.pop %v862
    %v864 = vmul.f32 %v634, 1.442695
    %v865 = vpow.pop %v864
    %v866 = vmul.f32 %v638, 1.442695
    %v867 = vpow.pop %v866
    %v868 = vmul.f32 %v640, 1.442695
    %v869 = vpow.pop %v868
    %v870 = vmul.f32 %v644, 1.442695
    %v871 = vpow.pop %v870
    %v872 = vmul.f32 %v646, 1.442695
    %v873 = vpow.pop %v872
    %v874 = vmul.f32 %v650, 1.442695
    %v875 = vpow.pop %v874
    %v876 = vmul.f32 %v652, 1.442695
    %v877 = vpow.pop %v876
    %v878 = vmul.f32 %v656, 1.442695
    %v879 = vpow.pop %v878
    %v880 = vmul.f32 %v658, 1.442695
    %v881 = vpow.pop %v880
    %v882 = vmul.f32 %v662, 1.442695
    %v883 = vpow.pop %v882
    %v884 = vmul.f32 %v664, 1.442695
    %v885 = vpow.pop %v884
    %v886 = vmul.f32 %v668, 1.442695
    %v887 = vpow.pop %v886
    %v888 = vmul.f32 %v670, 1.442695
    %v889 = vpow.pop %v888
    %v890 = vmul.f32 %v674, 1.442695
    %v891 = vpow.pop %v890
    %v892 = vmul.f32 %v676, 1.442695
    %v893 = vpow.pop %v892
    %v894 = vmul.f32 %v680, 1.442695
    %v895 = vpow.pop %v894
    %v896 = vmul.f32 %v682, 1.442695
    %v897 = vpow.pop %v896
    %v898 = vmul.f32 %v686, 1.442695
    %v899 = vpow.pop %v898
    %v900 = vmul.f32 %v688, 1.442695
    %v901 = vpow.pop %v900
    %v902 = vmul.f32 %v692, 1.442695
    %v903 = vpow.pop %v902
    %v904 = vmul.f32 %v694, 1.442695
    %v905 = vpow.pop %v904
    %v906 = vmul.f32 %v698, 1.442695
    %v907 = vpow.pop %v906
    %v908 = vmul.f32 %v700, 1.442695
    %v909 = vpow.pop %v908
    %v910 = vmul.f32 %v704, 1.442695
    %v911 = vpow.pop %v910
    %v912 = vmul.f32 %v706, 1.442695
    %v913 = vpow.pop %v912
    %v914 = vmul.f32 %v710, 1.442695
    %v915 = vpow.pop %v914
    %v916 = vmul.f32 %v712, 1.442695
    %v917 = vpow.pop %v916
    %v918 = vmul.f32 %v716, 1.442695
    %v919 = vpow.pop %v918
    %v920 = vmul.f32 %v718, 1.442695
    %v921 = vpow.pop %v920
    %v922 = vmul.f32 %v722, 1.442695
    %v923 = vpow.pop %v922
    %v924 = vmul.f32 %v724, 1.442695
    %v925 = vpow.pop %v924
    %v926 = vmul.f32 %v728, 1.442695
    %v927 = vpow.pop %v926
    %v928 = vmul.f32 %v730, 1.442695
    %v929 = vpow.pop %v928
    %v930 = vmul.f32 %v734, 1.442695
    %v931 = vpow.pop %v930
    %v932 = vmul.f32 %v736, 1.442695
    %v933 = vpow.pop %v932
    %v934 = vmul.f32 %v740, 1.442695
    %v935 = vpow.pop %v934
    %v936 = vmul.f32 %v742, 1.442695
    %v937 = vpow.pop %v936
    %v938 = vmul.f32 %v746, 1.442695
    %v939 = vpow.pop %v938
    %v940 = vmul.f32 %v748, 1.442695
    %v941 = vpow.pop %v940
    %v942 = vrcp.pop %v815
    %v943 = vrcp.pop %v817
    %v944 = vrcp.pop %v819
    %v945 = vrcp.pop %v821
    %v946 = vrcp.pop %v823
    %v947 = vrcp.pop %v825
    %v948 = vrcp.pop %v827
    %v949 = vrcp.pop %v829
    %v950 = vrcp.pop %v831
    %v951 = vrcp.pop %v833
    %v952 = vrcp.pop %v835
    %v953 = vrcp.pop %v837
    %v954 = vrcp.pop %v839
    %v955 = vrcp.pop %v841
    %v956 = vrcp.pop %v843
    %v957 = vrcp.pop %v845
    %v958 = vrcp.pop %v847
    %v959 = vrcp.pop %v849
    %v960 = vrcp.pop %v851
    %v961 = vrcp.pop %v853
    %v962 = vrcp.pop %v855
    %v963 = vrcp.pop %v857
    %v964 = vrcp.pop %v859
    %v965 = vrcp.pop %v861
    %v966 = vrcp.pop %v863
    %v967 = vrcp.pop %v865
    %v968 = vrcp.pop %v867
    %v969 = vrcp.pop %v869
    %v970 = vrcp.pop %v871
    %v971 = vrcp.pop %v873
    %v972 = vrcp.pop %v875
    %v973 = vrcp.pop %v877
    %v974 = vrcp.pop %v879
    %v975 = vrcp.pop %v881
    %v976 = vrcp.pop %v883
    %v977 = vrcp.pop %v885
    %v978 = vrcp.pop %v887
    %v979 = vrcp.pop %v889
    %v980 = vrcp.pop %v891
    %v981 = vrcp.pop %v893
    %v982 = vrcp.pop %v895
    %v983 = vrcp.pop %v897
    %v984 = vrcp.pop %v899
    %v985 = vrcp.pop %v901
    %v986 = vrcp.pop %v903
    %v987 = vrcp.pop %v905
    %v988 = vrcp.pop %v907
    %v989 = vrcp.pop %v909
    %v990 = vrcp.pop %v911
    %v991 = vrcp.pop %v913
    %v992 = vrcp.pop %v915
    %v993 = vrcp.pop %v917
    %v994 = vrcp.pop %v919
    %v995 = vrcp.pop %v921
    %v996 = vrcp.pop %v923
    %v997 = vrcp.pop %v925
    %v998 = vrcp.pop %v927
    %v999 = vrcp.pop %v929
    %v1000 = vrcp.pop %v931
    %v1001 = vrcp.pop %v933
    %v1002 = vrcp.pop %v935
    %v1003 = vrcp.pop %v937
    %v1004 = vrcp.pop %v939
    %v1005 = vrcp.pop %v941
    %v1006 = vsub.f32 0.0, %v239
    %v1007 = vsub.f32 0.0, %v241
    %v1008 = vsub.f32 0.0, %v245
    %v1009 = vsub.f32 0.0, %v247
    %v1010 = vsub.f32 0.0, %v251
    %v1011 = vsub.f32 0.0, %v253
    %v1012 = vsub.f32 0.0, %v257
    %v1013 = vsub.f32 0.0, %v259
    %v1014 = vsub.f32 0.0, %v263
    %v1015 = vsub.f32 0.0, %v265
    %v1016 = vsub.f32 0.0, %v269
    %v1017 = vsub.f32 0.0, %v271
    %v1018 = vsub.f32 0.0, %v275
    %v1019 = vsub.f32 0.0, %v277
    %v1020 = vsub.f32 0.0, %v281
    %v1021 = vsub.f32 0.0, %v283
    %v1022 = vsub.f32 0.0, %v287
    %v1023 = vsub.f32 0.0, %v289
    %v1024 = vsub.f32 0.0, %v293
    %v1025 = vsub.f32 0.0, %v295
    %v1026 = vsub.f32 0.0, %v299
    %v1027 = vsub.f32 0.0, %v301
    %v1028 = vsub.f32 0.0, %v305
    %v1029 = vsub.f32 0.0, %v307
    %v1030 = vsub.f32 0.0, %v311
    %v1031 = vsub.f32 0.0, %v313
    %v1032 = vsub.f32 0.0, %v317
    %v1033 = vsub.f32 0.0, %v319
    %v1034 = vsub.f32 0.0, %v323
    %v1035 = vsub.f32 0.0, %v325
    %v1036 = vsub.f32 0.0, %v329
    %v1037 = vsub.f32 0.0, %v331
    %v1038 = vsub.f32 0.0, %v335
    %v1039 = vsub.f32 0.0, %v337
    %v1040 = vsub.f32 0.0, %v341
    %v1041 = vsub.f32 0.0, %v343
    %v1042 = vsub.f32 0.0, %v347
    %v1043 = vsub.f32 0.0, %v349
    %v1044 = vsub.f32 0.0, %v353
    %v1045 = vsub.f32 0.0, %v355
    %v1046 = vsub.f32 0.0, %v359
    %v1047 = vsub.f32 0.0, %v361
    %v1048 = vsub.f32 0.0, %v365
    %v1049 = vsub.f32 0.0, %v367
    %v1050 = vsub.f32 0.0, %v371
    %v1051 = vsub.f32 0.0, %v373
    %v1052 = vsub.f32 0.0, %v377
    %v1053 = vsub.f32 0.0, %v379
    %v1054 = vsub.f32 0.0, %v383
    %v1055 = vsub.f32 0.0, %v385
    %v1056 = vsub.f32 0.0, %v389
    %v1057 = vsub.f32 0.0, %v391
    %v1058 = vsub.f32 0.0, %v395
    %v1059 = vsub.f32 0.0, %v397
    %v1060 = vsub.f32 0.0, %v401
    %v1061 = vsub.f32 0.0, %v403
    %v1062 = vsub.f32 0.0, %v407
    %v1063 = vsub.f32 0.0, %v409
    %v1064 = vsub.f32 0.0, %v413
    %v1065 = vsub.f32 0.0, %v415
    %v1066 = vsub.f32 0.0, %v419
    %v1067 = vsub.f32 0.0, %v421
    %v1068 = vsub.f32 0.0, %v425
    %v1069 = vsub.f32 0.0, %v427
    %v1070 = vmul.f32 %v1006, %v815
    %v1071 = vmul.f32 %v1007, %v817
    %v1072 = vmul.f32 %v1008, %v819
    %v1073 = vmul.f32 %v1009, %v821
    %v1074 = vmul.f32 %v1010, %v823
    %v1075 = vmul.f32 %v1011, %v825
    %v1076 = vmul.f32 %v1012, %v827
    %v1077 = vmul.f32 %v1013, %v829
    %v1078 = vmul.f32 %v1014, %v831
    %v1079 = vmul.f32 %v1015, %v833
    %v1080 = vmul.f32 %v1016, %v835
    %v1081 = vmul.f32 %v1017, %v837
    %v1082 = vmul.f32 %v1018, %v839
    %v1083 = vmul.f32 %v1019, %v841
    %v1084 = vmul.f32 %v1020, %v843
    %v1085 = vmul.f32 %v1021, %v845
    %v1086 = vmul.f32 %v1022, %v847
    %v1087 = vmul.f32 %v1023, %v849
    %v1088 = vmul.f32 %v1024, %v851
    %v1089 = vmul.f32 %v1025, %v853
    %v1090 = vmul.f32 %v1026, %v855
    %v1091 = vmul.f32 %v1027, %v857
    %v1092 = vmul.f32 %v1028, %v859
    %v1093 = vmul.f32 %v1029, %v861
    %v1094 = vmul.f32 %v1030, %v863
    %v1095 = vmul.f32 %v1031, %v865
    %v1096 = vmul.f32 %v1032, %v867
    %v1097 = vmul.f32 %v1033, %v869
    %v1098 = vmul.f32 %v1034, %v871
    %v1099 = vmul.f32 %v1035, %v873
    %v1100 = vmul.f32 %v1036, %v875
    %v1101 = vmul.f32 %v1037, %v877
    %v1102 = vmul.f32 %v1038, %v879
    %v1103 = vmul.f32 %v1039, %v881
    %v1104 = vmul.f32 %v1040, %v883
    %v1105 = vmul.f32 %v1041, %v885
    %v1106 = vmul.f32 %v1042, %v887
    %v1107 = vmul.f32 %v1043, %v889
    %v1108 = vmul.f32 %v1044, %v891
    %v1109 = vmul.f32 %v1045, %v893
    %v1110 = vmul.f32 %v1046, %v895
    %v1111 = vmul.f32 %v1047, %v897
    %v1112 = vmul.f32 %v1048, %v899
    %v1113 = vmul.f32 %v1049, %v901
    %v1114 = vmul.f32 %v1050, %v903
    %v1115 = vmul.f32 %v1051, %v905
    %v1116 = vmul.f32 %v1052, %v907
    %v1117 = vmul.f32 %v1053, %v909
    %v1118 = vmul.f32 %v1054, %v911
    %v1119 = vmul.f32 %v1055, %v913
    %v1120 = vmul.f32 %v1056, %v915
    %v1121 = vmul.f32 %v1057, %v917
    %v1122 = vmul.f32 %v1058, %v919
    %v1123 = vmul.f32 %v1059, %v921
    %v1124 = vmul.f32 %v1060, %v923
    %v1125 = vmul.f32 %v1061, %v925
    %v1126 = vmul.f32 %v1062, %v927
    %v1127 = vmul.f32 %v1063, %v929
    %v1128 = vmul.f32 %v1064, %v931
    %v1129 = vmul.f32 %v1065, %v933
    %v1130 = vmul.f32 %v1066, %v935
    %v1131 = vmul.f32 %v1067, %v937
    %v1132 = vmul.f32 %v1068, %v939
    %v1133 = vmul.f32 %v1069, %v941
    %v1134 = vmul.f32 %v239, 50.0
    %v1135 = vmul.f32 %v241, 50.0
    %v1136 = vmul.f32 %v245, 50.0
    %v1137 = vmul.f32 %v247, 50.0
    %v1138 = vmul.f32 %v251, 50.0
    %v1139 = vmul.f32 %v253, 50.0
    %v1140 = vmul.f32 %v257, 50.0
    %v1141 = vmul.f32 %v259, 50.0
    %v1142 = vmul.f32 %v263, 50.0
    %v1143 = vmul.f32 %v265, 50.0
    %v1144 = vmul.f32 %v269, 50.0
    %v1145 = vmul.f32 %v271, 50.0
    %v1146 = vmul.f32 %v275, 50.0
    %v1147 = vmul.f32 %v277, 50.0
    %v1148 = vmul.f32 %v281, 50.0
    %v1149 = vmul.f32 %v283, 50.0
    %v1150 = vmul.f32 %v287, 50.0
    %v1151 = vmul.f32 %v289, 50.0
    %v1152 = vmul.f32 %v293, 50.0
    %v1153 = vmul.f32 %v295, 50.0
    %v1154 = vmul.f32 %v299, 50.0
    %v1155 = vmul.f32 %v301, 50.0
    %v1156 = vmul.f32 %v305, 50.0
    %v1157 = vmul.f32 %v307, 50.0
    %v1158 = vmul.f32 %v311, 50.0
    %v1159 = vmul.f32 %v313, 50.0
    %v1160 = vmul.f32 %v317, 50.0
    %v1161 = vmul.f32 %v319, 50.0
    %v1162 = vmul.f32 %v323, 50.0
    %v1163 = vmul.f32 %v325, 50.0
    %v1164 = vmul.f32 %v329, 50.0
    %v1165 = vmul.f32 %v331, 50.0
    %v1166 = vmul.f32 %v335, 50.0
    %v1167 = vmul.f32 %v337, 50.0
    %v1168 = vmul.f32 %v341, 50.0
    %v1169 = vmul.f32 %v343, 50.0
    %v1170 = vmul.f32 %v347, 50.0
    %v1171 = vmul.f32 %v349, 50.0
    %v1172 = vmul.f32 %v353, 50.0
    %v1173 = vmul.f32 %v355, 50.0
    %v1174 = vmul.f32 %v359, 50.0
    %v1175 = vmul.f32 %v361, 50.0
    %v1176 = vmul.f32 %v365, 50.0
    %v1177 = vmul.f32 %v367, 50.0
    %v1178 = vmul.f32 %v371, 50.0
    %v1179 = vmul.f32 %v373, 50.0
    %v1180 = vmul.f32 %v377, 50.0
    %v1181 = vmul.f32 %v379, 50.0
    %v1182 = vmul.f32 %v383, 50.0
    %v1183 = vmul.f32 %v385, 50.0
    %v1184 = vmul.f32 %v389, 50.0
    %v1185 = vmul.f32 %v391, 50.0
    %v1186 = vmul.f32 %v395, 50.0
    %v1187 = vmul.f32 %v397, 50.0
    %v1188 = vmul.f32 %v401, 50.0
    %v1189 = vmul.f32 %v403, 50.0
    %v1190 = vmul.f32 %v407, 50.0
    %v1191 = vmul.f32 %v409, 50.0
    %v1192 = vmul.f32 %v413, 50.0
    %v1193 = vmul.f32 %v415, 50.0
    %v1194 = vmul.f32 %v419, 50.0
    %v1195 = vmul.f32 %v421, 50.0
    %v1196 = vmul.f32 %v425, 50.0
    %v1197 = vmul.f32 %v427, 50.0
    %v1198 = vmul.f32 %v1134, %v942
    %v1199 = vmul.f32 %v1135, %v943
    %v1200 = vmul.f32 %v1136, %v944
    %v1201 = vmul.f32 %v1137, %v945
    %v1202 = vmul.f32 %v1138, %v946
    %v1203 = vmul.f32 %v1139, %v947
    %v1204 = vmul.f32 %v1140, %v948
    %v1205 = vmul.f32 %v1141, %v949
    %v1206 = vmul.f32 %v1142, %v950
    %v1207 = vmul.f32 %v1143, %v951
    %v1208 = vmul.f32 %v1144, %v952
    %v1209 = vmul.f32 %v1145, %v953
    %v1210 = vmul.f32 %v1146, %v954
    %v1211 = vmul.f32 %v1147, %v955
    %v1212 = vmul.f32 %v1148, %v956
    %v1213 = vmul.f32 %v1149, %v957
    %v1214 = vmul.f32 %v1150, %v958
    %v1215 = vmul.f32 %v1151, %v959
    %v1216 = vmul.f32 %v1152, %v960
    %v1217 = vmul.f32 %v1153, %v961
    %v1218 = vmul.f32 %v1154, %v962
    %v1219 = vmul.f32 %v1155, %v963
    %v1220 = vmul.f32 %v1156, %v964
    %v1221 = vmul.f32 %v1157, %v965
    %v1222 = vmul.f32 %v1158, %v966
    %v1223 = vmul.f32 %v1159, %v967
    %v1224 = vmul.f32 %v1160, %v968
    %v1225 = vmul.f32 %v1161, %v969
    %v1226 = vmul.f32 %v1162, %v970
    %v1227 = vmul.f32 %v1163, %v971
    %v1228 = vmul.f32 %v1164, %v972
    %v1229 = vmul.f32 %v1165, %v973
    %v1230 = vmul.f32 %v1166, %v974
    %v1231 = vmul.f32 %v1167, %v975
    %v1232 = vmul.f32 %v1168, %v976
    %v1233 = vmul.f32 %v1169, %v977
    %v1234 = vmul.f32 %v1170, %v978
    %v1235 = vmul.f32 %v1171, %v979
    %v1236 = vmul.f32 %v1172, %v980
    %v1237 = vmul.f32 %v1173, %v981
    %v1238 = vmul.f32 %v1174, %v982
    %v1239 = vmul.f32 %v1175, %v983
    %v1240 = vmul.f32 %v1176, %v984
    %v1241 = vmul.f32 %v1177, %v985
    %v1242 = vmul.f32 %v1178, %v986
    %v1243 = vmul.f32 %v1179, %v987
    %v1244 = vmul.f32 %v1180, %v988
    %v1245 = vmul.f32 %v1181, %v989
    %v1246 = vmul.f32 %v1182, %v990
    %v1247 = vmul.f32 %v1183, %v991
    %v1248 = vmul.f32 %v1184, %v992
    %v1249 = vmul.f32 %v1185, %v993
    %v1250 = vmul.f32 %v1186, %v994
    %v1251 = vmul.f32 %v1187, %v995
    %v1252 = vmul.f32 %v1188, %v996
    %v1253 = vmul.f32 %v1189, %v997
    %v1254 = vmul.f32 %v1190, %v998
    %v1255 = vmul.f32 %v1191, %v999
    %v1256 = vmul.f32 %v1192, %v1000
    %v1257 = vmul.f32 %v1193, %v1001
    %v1258 = vmul.f32 %v1194, %v1002
    %v1259 = vmul.f32 %v1195, %v1003
    %v1260 = vmul.f32 %v1196, %v1004
    %v1261 = vmul.f32 %v1197, %v1005
    %v1262 = vsel %vm766, 16843009, 0
    %v1263 = vsel %vm767, 16843009, 0
    %v1264 = vsel %vm768, 16843009, 0
    %v1265 = vsel %vm769, 16843009, 0
    %v1266 = vsel %vm770, 16843009, 0
    %v1267 = vsel %vm771, 16843009, 0
    %v1268 = vsel %vm772, 16843009, 0
    %v1269 = vsel %vm773, 16843009, 0
    %v1270 = vsel %vm774, 16843009, 0
    %v1271 = vsel %vm775, 16843009, 0
    %v1272 = vsel %vm776, 16843009, 0
    %v1273 = vsel %vm777, 16843009, 0
    %v1274 = vsel %vm778, 16843009, 0
    %v1275 = vsel %vm779, 16843009, 0
    %v1276 = vsel %vm780, 16843009, 0
    %v1277 = vsel %vm781, 16843009, 0
    %v1278 = vunpack.c.0.s8 %v1262
    %v1279 = vunpack.c.0.s8 %v1263
    %v1280 = vunpack.c.1.s8 %v1262
    %v1281 = vunpack.c.1.s8 %v1263
    %v1282 = vunpack.c.2.s8 %v1262
    %v1283 = vunpack.c.2.s8 %v1263
    %v1284 = vunpack.c.3.s8 %v1262
    %v1285 = vunpack.c.3.s8 %v1263
    %v1286 = vunpack.c.0.s8 %v1264
    %v1287 = vunpack.c.0.s8 %v1265
    %v1288 = vunpack.c.1.s8 %v1264
    %v1289 = vunpack.c.1.s8 %v1265
    %v1290 = vunpack.c.2.s8 %v1264
    %v1291 = vunpack.c.2.s8 %v1265
    %v1292 = vunpack.c.3.s8 %v1264
    %v1293 = vunpack.c.3.s8 %v1265
    %v1294 = vunpack.c.0.s8 %v1266
    %v1295 = vunpack.c.0.s8 %v1267
    %v1296 = vunpack.c.1.s8 %v1266
    %v1297 = vunpack.c.1.s8 %v1267
    %v1298 = vunpack.c.2.s8 %v1266
    %v1299 = vunpack.c.2.s8 %v1267
    %v1300 = vunpack.c.3.s8 %v1266
    %v1301 = vunpack.c.3.s8 %v1267
    %v1302 = vunpack.c.0.s8 %v1268
    %v1303 = vunpack.c.0.s8 %v1269
    %v1304 = vunpack.c.1.s8 %v1268
    %v1305 = vunpack.c.1.s8 %v1269
    %v1306 = vunpack.c.2.s8 %v1268
    %v1307 = vunpack.c.2.s8 %v1269
    %v1308 = vunpack.c.3.s8 %v1268
    %v1309 = vunpack.c.3.s8 %v1269
    %v1310 = vunpack.c.0.s8 %v1270
    %v1311 = vunpack.c.0.s8 %v1271
    %v1312 = vunpack.c.1.s8 %v1270
    %v1313 = vunpack.c.1.s8 %v1271
    %v1314 = vunpack.c.2.s8 %v1270
    %v1315 = vunpack.c.2.s8 %v1271
    %v1316 = vunpack.c.3.s8 %v1270
    %v1317 = vunpack.c.3.s8 %v1271
    %v1318 = vunpack.c.0.s8 %v1272
    %v1319 = vunpack.c.0.s8 %v1273
    %v1320 = vunpack.c.1.s8 %v1272
    %v1321 = vunpack.c.1.s8 %v1273
    %v1322 = vunpack.c.2.s8 %v1272
    %v1323 = vunpack.c.2.s8 %v1273
    %v1324 = vunpack.c.3.s8 %v1272
    %v1325 = vunpack.c.3.s8 %v1273
    %v1326 = vunpack.c.0.s8 %v1274
    %v1327 = vunpack.c.0.s8 %v1275
    %v1328 = vunpack.c.1.s8 %v1274
    %v1329 = vunpack.c.1.s8 %v1275
    %v1330 = vunpack.c.2.s8 %v1274
    %v1331 = vunpack.c.2.s8 %v1275
    %v1332 = vunpack.c.3.s8 %v1274
    %v1333 = vunpack.c.3.s8 %v1275
    %v1334 = vunpack.c.0.s8 %v1276
    %v1335 = vunpack.c.0.s8 %v1277
    %v1336 = vunpack.c.1.s8 %v1276
    %v1337 = vunpack.c.1.s8 %v1277
    %v1338 = vunpack.c.2.s8 %v1276
    %v1339 = vunpack.c.2.s8 %v1277
    %v1340 = vunpack.c.3.s8 %v1276
    %v1341 = vunpack.c.3.s8 %v1277
    %v1342 = vpack.c.b16 %v1279, %v1278
    %v1343 = vpack.c.b8 %v1342, %v1342
    %v1344 = vpack.c.b16 %v1281, %v1280
    %v1345 = vpack.c.b8 %v1344, %v1344
    %v1346 = vpack.c.b16 %v1283, %v1282
    %v1347 = vpack.c.b8 %v1346, %v1346
    %v1348 = vpack.c.b16 %v1285, %v1284
    %v1349 = vpack.c.b8 %v1348, %v1348
    %v1350 = vpack.c.b16 %v1287, %v1286
    %v1351 = vpack.c.b8 %v1350, %v1350
    %v1352 = vpack.c.b16 %v1289, %v1288
    %v1353 = vpack.c.b8 %v1352, %v1352
    %v1354 = vpack.c.b16 %v1291, %v1290
    %v1355 = vpack.c.b8 %v1354, %v1354
    %v1356 = vpack.c.b16 %v1293, %v1292
    %v1357 = vpack.c.b8 %v1356, %v1356
    %v1358 = vpack.c.b16 %v1295, %v1294
    %v1359 = vpack.c.b8 %v1358, %v1358
    %v1360 = vpack.c.b16 %v1297, %v1296
    %v1361 = vpack.c.b8 %v1360, %v1360
    %v1362 = vpack.c.b16 %v1299, %v1298
    %v1363 = vpack.c.b8 %v1362, %v1362
    %v1364 = vpack.c.b16 %v1301, %v1300
    %v1365 = vpack.c.b8 %v1364, %v1364
    %v1366 = vpack.c.b16 %v1303, %v1302
    %v1367 = vpack.c.b8 %v1366, %v1366
    %v1368 = vpack.c.b16 %v1305, %v1304
    %v1369 = vpack.c.b8 %v1368, %v1368
    %v1370 = vpack.c.b16 %v1307, %v1306
    %v1371 = vpack.c.b8 %v1370, %v1370
    %v1372 = vpack.c.b16 %v1309, %v1308
    %v1373 = vpack.c.b8 %v1372, %v1372
    %v1374 = vpack.c.b16 %v1311, %v1310
    %v1375 = vpack.c.b8 %v1374, %v1374
    %v1376 = vpack.c.b16 %v1313, %v1312
    %v1377 = vpack.c.b8 %v1376, %v1376
    %v1378 = vpack.c.b16 %v1315, %v1314
    %v1379 = vpack.c.b8 %v1378, %v1378
    %v1380 = vpack.c.b16 %v1317, %v1316
    %v1381 = vpack.c.b8 %v1380, %v1380
    %v1382 = vpack.c.b16 %v1319, %v1318
    %v1383 = vpack.c.b8 %v1382, %v1382
    %v1384 = vpack.c.b16 %v1321, %v1320
    %v1385 = vpack.c.b8 %v1384, %v1384
    %v1386 = vpack.c.b16 %v1323, %v1322
    %v1387 = vpack.c.b8 %v1386, %v1386
    %v1388 = vpack.c.b16 %v1325, %v1324
    %v1389 = vpack.c.b8 %v1388, %v1388
    %v1390 = vpack.c.b16 %v1327, %v1326
    %v1391 = vpack.c.b8 %v1390, %v1390
    %v1392 = vpack.c.b16 %v1329, %v1328
    %v1393 = vpack.c.b8 %v1392, %v1392
    %v1394 = vpack.c.b16 %v1331, %v1330
    %v1395 = vpack.c.b8 %v1394, %v1394
    %v1396 = vpack.c.b16 %v1333, %v1332
    %v1397 = vpack.c.b8 %v1396, %v1396
    %v1398 = vpack.c.b16 %v1335, %v1334
    %v1399 = vpack.c.b8 %v1398, %v1398
    %v1400 = vpack.c.b16 %v1337, %v1336
    %v1401 = vpack.c.b8 %v1400, %v1400
    %v1402 = vpack.c.b16 %v1339, %v1338
    %v1403 = vpack.c.b8 %v1402, %v1402
    %v1404 = vpack.c.b16 %v1341, %v1340
    %v1405 = vpack.c.b8 %v1404, %v1404
    %vm1406 = vnez %v1343
    %vm1407 = vnez %v1345
    %vm1408 = vnez %v1347
    %vm1409 = vnez %v1349
    %vm1410 = vnez %v1351
    %vm1411 = vnez %v1353
    %vm1412 = vnez %v1355
    %vm1413 = vnez %v1357
    %vm1414 = vnez %v1359
    %vm1415 = vnez %v1361
    %vm1416 = vnez %v1363
    %vm1417 = vnez %v1365
    %vm1418 = vnez %v1367
    %vm1419 = vnez %v1369
    %vm1420 = vnez %v1371
    %vm1421 = vnez %v1373
    %vm1422 = vnez %v1375
    %vm1423 = vnez %v1377
    %vm1424 = vnez %v1379
    %vm1425 = vnez %v1381
    %vm1426 = vnez %v1383
    %vm1427 = vnez %v1385
    %vm1428 = vnez %v1387
    %vm1429 = vnez %v1389
    %vm1430 = vnez %v1391
    %vm1431 = vnez %v1393
    %vm1432 = vnez %v1395
    %vm1433 = vnez %v1397
    %vm1434 = vnez %v1399
    %vm1435 = vnez %v1401
    %vm1436 = vnez %v1403
    %vm1437 = vnez %v1405
    %v1438 = vsel %vm1406, 16843009, 0
    %v1439 = vsel %vm1407, 16843009, 0
    %v1440 = vsel %vm1408, 16843009, 0
    %v1441 = vsel %vm1409, 16843009, 0
    %v1442 = vsel %vm1410, 16843009, 0
    %v1443 = vsel %vm1411, 16843009, 0
    %v1444 = vsel %vm1412, 16843009, 0
    %v1445 = vsel %vm1413, 16843009, 0
    %v1446 = vsel %vm1414, 16843009, 0
    %v1447 = vsel %vm1415, 16843009, 0
    %v1448 = vsel %vm1416, 16843009, 0
    %v1449 = vsel %vm1417, 16843009, 0
    %v1450 = vsel %vm1418, 16843009, 0
    %v1451 = vsel %vm1419, 16843009, 0
    %v1452 = vsel %vm1420, 16843009, 0
    %v1453 = vsel %vm1421, 16843009, 0
    %v1454 = vsel %vm1422, 16843009, 0
    %v1455 = vsel %vm1423, 16843009, 0
    %v1456 = vsel %vm1424, 16843009, 0
    %v1457 = vsel %vm1425, 16843009, 0
    %v1458 = vsel %vm1426, 16843009, 0
    %v1459 = vsel %vm1427, 16843009, 0
    %v1460 = vsel %vm1428, 16843009, 0
    %v1461 = vsel %vm1429, 16843009, 0
    %v1462 = vsel %vm1430, 16843009, 0
    %v1463 = vsel %vm1431, 16843009, 0
    %v1464 = vsel %vm1432, 16843009, 0
    %v1465 = vsel %vm1433, 16843009, 0
    %v1466 = vsel %vm1434, 16843009, 0
    %v1467 = vsel %vm1435, 16843009, 0
    %v1468 = vsel %vm1436, 16843009, 0
    %v1469 = vsel %vm1437, 16843009, 0
    %v1470 = vunpack.c.0.s8 %v1438
    %v1471 = vunpack.c.1.s8 %v1438
    %v1472 = vunpack.c.0.s8 %v1439
    %v1473 = vunpack.c.1.s8 %v1439
    %v1474 = vunpack.c.0.s8 %v1440
    %v1475 = vunpack.c.1.s8 %v1440
    %v1476 = vunpack.c.0.s8 %v1441
    %v1477 = vunpack.c.1.s8 %v1441
    %v1478 = vunpack.c.0.s8 %v1442
    %v1479 = vunpack.c.1.s8 %v1442
    %v1480 = vunpack.c.0.s8 %v1443
    %v1481 = vunpack.c.1.s8 %v1443
    %v1482 = vunpack.c.0.s8 %v1444
    %v1483 = vunpack.c.1.s8 %v1444
    %v1484 = vunpack.c.0.s8 %v1445
    %v1485 = vunpack.c.1.s8 %v1445
    %v1486 = vunpack.c.0.s8 %v1446
    %v1487 = vunpack.c.1.s8 %v1446
    %v1488 = vunpack.c.0.s8 %v1447
    %v1489 = vunpack.c.1.s8 %v1447
    %v1490 = vunpack.c.0.s8 %v1448
    %v1491 = vunpack.c.1.s8 %v1448
    %v1492 = vunpack.c.0.s8 %v1449
    %v1493 = vunpack.c.1.s8 %v1449
    %v1494 = vunpack.c.0.s8 %v1450
    %v1495 = vunpack.c.1.s8 %v1450
    %v1496 = vunpack.c.0.s8 %v1451
    %v1497 = vunpack.c.1.s8 %v1451
    %v1498 = vunpack.c.0.s8 %v1452
    %v1499 = vunpack.c.1.s8 %v1452
    %v1500 = vunpack.c.0.s8 %v1453
    %v1501 = vunpack.c.1.s8 %v1453
    %v1502 = vunpack.c.0.s8 %v1454
    %v1503 = vunpack.c.1.s8 %v1454
    %v1504 = vunpack.c.0.s8 %v1455
    %v1505 = vunpack.c.1.s8 %v1455
    %v1506 = vunpack.c.0.s8 %v1456
    %v1507 = vunpack.c.1.s8 %v1456
    %v1508 = vunpack.c.0.s8 %v1457
    %v1509 = vunpack.c.1.s8 %v1457
    %v1510 = vunpack.c.0.s8 %v1458
    %v1511 = vunpack.c.1.s8 %v1458
    %v1512 = vunpack.c.0.s8 %v1459
    %v1513 = vunpack.c.1.s8 %v1459
    %v1514 = vunpack.c.0.s8 %v1460
    %v1515 = vunpack.c.1.s8 %v1460
    %v1516 = vunpack.c.0.s8 %v1461
    %v1517 = vunpack.c.1.s8 %v1461
    %v1518 = vunpack.c.0.s8 %v1462
    %v1519 = vunpack.c.1.s8 %v1462
    %v1520 = vunpack.c.0.s8 %v1463
    %v1521 = vunpack.c.1.s8 %v1463
    %v1522 = vunpack.c.0.s8 %v1464
    %v1523 = vunpack.c.1.s8 %v1464
    %v1524 = vunpack.c.0.s8 %v1465
    %v1525 = vunpack.c.1.s8 %v1465
    %v1526 = vunpack.c.0.s8 %v1466
    %v1527 = vunpack.c.1.s8 %v1466
    %v1528 = vunpack.c.0.s8 %v1467
    %v1529 = vunpack.c.1.s8 %v1467
    %v1530 = vunpack.c.0.s8 %v1468
    %v1531 = vunpack.c.1.s8 %v1468
    %v1532 = vunpack.c.0.s8 %v1469
    %v1533 = vunpack.c.1.s8 %v1469
    %vm1534 = vcmp.ne.s32.totalorder %v1470, 0
    %vm1535 = vcmp.ne.s32.totalorder %v1471, 0
    %vm1536 = vcmp.ne.s32.totalorder %v1472, 0
    %vm1537 = vcmp.ne.s32.totalorder %v1473, 0
    %vm1538 = vcmp.ne.s32.totalorder %v1474, 0
    %vm1539 = vcmp.ne.s32.totalorder %v1475, 0
    %vm1540 = vcmp.ne.s32.totalorder %v1476, 0
    %vm1541 = vcmp.ne.s32.totalorder %v1477, 0
    %vm1542 = vcmp.ne.s32.totalorder %v1478, 0
    %vm1543 = vcmp.ne.s32.totalorder %v1479, 0
    %vm1544 = vcmp.ne.s32.totalorder %v1480, 0
    %vm1545 = vcmp.ne.s32.totalorder %v1481, 0
    %vm1546 = vcmp.ne.s32.totalorder %v1482, 0
    %vm1547 = vcmp.ne.s32.totalorder %v1483, 0
    %vm1548 = vcmp.ne.s32.totalorder %v1484, 0
    %vm1549 = vcmp.ne.s32.totalorder %v1485, 0
    %vm1550 = vcmp.ne.s32.totalorder %v1486, 0
    %vm1551 = vcmp.ne.s32.totalorder %v1487, 0
    %vm1552 = vcmp.ne.s32.totalorder %v1488, 0
    %vm1553 = vcmp.ne.s32.totalorder %v1489, 0
    %vm1554 = vcmp.ne.s32.totalorder %v1490, 0
    %vm1555 = vcmp.ne.s32.totalorder %v1491, 0
    %vm1556 = vcmp.ne.s32.totalorder %v1492, 0
    %vm1557 = vcmp.ne.s32.totalorder %v1493, 0
    %vm1558 = vcmp.ne.s32.totalorder %v1494, 0
    %vm1559 = vcmp.ne.s32.totalorder %v1495, 0
    %vm1560 = vcmp.ne.s32.totalorder %v1496, 0
    %vm1561 = vcmp.ne.s32.totalorder %v1497, 0
    %vm1562 = vcmp.ne.s32.totalorder %v1498, 0
    %vm1563 = vcmp.ne.s32.totalorder %v1499, 0
    %vm1564 = vcmp.ne.s32.totalorder %v1500, 0
    %vm1565 = vcmp.ne.s32.totalorder %v1501, 0
    %vm1566 = vcmp.ne.s32.totalorder %v1502, 0
    %vm1567 = vcmp.ne.s32.totalorder %v1503, 0
    %vm1568 = vcmp.ne.s32.totalorder %v1504, 0
    %vm1569 = vcmp.ne.s32.totalorder %v1505, 0
    %vm1570 = vcmp.ne.s32.totalorder %v1506, 0
    %vm1571 = vcmp.ne.s32.totalorder %v1507, 0
    %vm1572 = vcmp.ne.s32.totalorder %v1508, 0
    %vm1573 = vcmp.ne.s32.totalorder %v1509, 0
    %vm1574 = vcmp.ne.s32.totalorder %v1510, 0
    %vm1575 = vcmp.ne.s32.totalorder %v1511, 0
    %vm1576 = vcmp.ne.s32.totalorder %v1512, 0
    %vm1577 = vcmp.ne.s32.totalorder %v1513, 0
    %vm1578 = vcmp.ne.s32.totalorder %v1514, 0
    %vm1579 = vcmp.ne.s32.totalorder %v1515, 0
    %vm1580 = vcmp.ne.s32.totalorder %v1516, 0
    %vm1581 = vcmp.ne.s32.totalorder %v1517, 0
    %vm1582 = vcmp.ne.s32.totalorder %v1518, 0
    %vm1583 = vcmp.ne.s32.totalorder %v1519, 0
    %vm1584 = vcmp.ne.s32.totalorder %v1520, 0
    %vm1585 = vcmp.ne.s32.totalorder %v1521, 0
    %vm1586 = vcmp.ne.s32.totalorder %v1522, 0
    %vm1587 = vcmp.ne.s32.totalorder %v1523, 0
    %vm1588 = vcmp.ne.s32.totalorder %v1524, 0
    %vm1589 = vcmp.ne.s32.totalorder %v1525, 0
    %vm1590 = vcmp.ne.s32.totalorder %v1526, 0
    %vm1591 = vcmp.ne.s32.totalorder %v1527, 0
    %vm1592 = vcmp.ne.s32.totalorder %v1528, 0
    %vm1593 = vcmp.ne.s32.totalorder %v1529, 0
    %vm1594 = vcmp.ne.s32.totalorder %v1530, 0
    %vm1595 = vcmp.ne.s32.totalorder %v1531, 0
    %vm1596 = vcmp.ne.s32.totalorder %v1532, 0
    %vm1597 = vcmp.ne.s32.totalorder %v1533, 0
    %v1598 = vsel %vm1534, %v1070, -3.4028235e+38
    %v1599 = vsel %vm1535, %v1071, -3.4028235e+38
    %v1600 = vsel %vm1536, %v1072, -3.4028235e+38
    %v1601 = vsel %vm1537, %v1073, -3.4028235e+38
    %v1602 = vsel %vm1538, %v1074, -3.4028235e+38
    %v1603 = vsel %vm1539, %v1075, -3.4028235e+38
    %v1604 = vsel %vm1540, %v1076, -3.4028235e+38
    %v1605 = vsel %vm1541, %v1077, -3.4028235e+38
    %v1606 = vsel %vm1542, %v1078, -3.4028235e+38
    %v1607 = vsel %vm1543, %v1079, -3.4028235e+38
    %v1608 = vsel %vm1544, %v1080, -3.4028235e+38
    %v1609 = vsel %vm1545, %v1081, -3.4028235e+38
    %v1610 = vsel %vm1546, %v1082, -3.4028235e+38
    %v1611 = vsel %vm1547, %v1083, -3.4028235e+38
    %v1612 = vsel %vm1548, %v1084, -3.4028235e+38
    %v1613 = vsel %vm1549, %v1085, -3.4028235e+38
    %v1614 = vsel %vm1550, %v1086, -3.4028235e+38
    %v1615 = vsel %vm1551, %v1087, -3.4028235e+38
    %v1616 = vsel %vm1552, %v1088, -3.4028235e+38
    %v1617 = vsel %vm1553, %v1089, -3.4028235e+38
    %v1618 = vsel %vm1554, %v1090, -3.4028235e+38
    %v1619 = vsel %vm1555, %v1091, -3.4028235e+38
    %v1620 = vsel %vm1556, %v1092, -3.4028235e+38
    %v1621 = vsel %vm1557, %v1093, -3.4028235e+38
    %v1622 = vsel %vm1558, %v1094, -3.4028235e+38
    %v1623 = vsel %vm1559, %v1095, -3.4028235e+38
    %v1624 = vsel %vm1560, %v1096, -3.4028235e+38
    %v1625 = vsel %vm1561, %v1097, -3.4028235e+38
    %v1626 = vsel %vm1562, %v1098, -3.4028235e+38
    %v1627 = vsel %vm1563, %v1099, -3.4028235e+38
    %v1628 = vsel %vm1564, %v1100, -3.4028235e+38
    %v1629 = vsel %vm1565, %v1101, -3.4028235e+38
    %v1630 = vsel %vm1566, %v1102, -3.4028235e+38
    %v1631 = vsel %vm1567, %v1103, -3.4028235e+38
    %v1632 = vsel %vm1568, %v1104, -3.4028235e+38
    %v1633 = vsel %vm1569, %v1105, -3.4028235e+38
    %v1634 = vsel %vm1570, %v1106, -3.4028235e+38
    %v1635 = vsel %vm1571, %v1107, -3.4028235e+38
    %v1636 = vsel %vm1572, %v1108, -3.4028235e+38
    %v1637 = vsel %vm1573, %v1109, -3.4028235e+38
    %v1638 = vsel %vm1574, %v1110, -3.4028235e+38
    %v1639 = vsel %vm1575, %v1111, -3.4028235e+38
    %v1640 = vsel %vm1576, %v1112, -3.4028235e+38
    %v1641 = vsel %vm1577, %v1113, -3.4028235e+38
    %v1642 = vsel %vm1578, %v1114, -3.4028235e+38
    %v1643 = vsel %vm1579, %v1115, -3.4028235e+38
    %v1644 = vsel %vm1580, %v1116, -3.4028235e+38
    %v1645 = vsel %vm1581, %v1117, -3.4028235e+38
    %v1646 = vsel %vm1582, %v1118, -3.4028235e+38
    %v1647 = vsel %vm1583, %v1119, -3.4028235e+38
    %v1648 = vsel %vm1584, %v1120, -3.4028235e+38
    %v1649 = vsel %vm1585, %v1121, -3.4028235e+38
    %v1650 = vsel %vm1586, %v1122, -3.4028235e+38
    %v1651 = vsel %vm1587, %v1123, -3.4028235e+38
    %v1652 = vsel %vm1588, %v1124, -3.4028235e+38
    %v1653 = vsel %vm1589, %v1125, -3.4028235e+38
    %v1654 = vsel %vm1590, %v1126, -3.4028235e+38
    %v1655 = vsel %vm1591, %v1127, -3.4028235e+38
    %v1656 = vsel %vm1592, %v1128, -3.4028235e+38
    %v1657 = vsel %vm1593, %v1129, -3.4028235e+38
    %v1658 = vsel %vm1594, %v1130, -3.4028235e+38
    %v1659 = vsel %vm1595, %v1131, -3.4028235e+38
    %v1660 = vsel %vm1596, %v1132, -3.4028235e+38
    %v1661 = vsel %vm1597, %v1133, -3.4028235e+38
    %v1662 = vmax.f32 %v1598, %v1599
    %1663 = vmax.xlane.f32.xlu0 %v1662
    %v1664 = vpop.xlane.xlu0 %1663
    %v1665 = vmax.f32 %v1600, %v1601
    %1666 = vmax.xlane.f32.xlu0 %v1665
    %v1667 = vpop.xlane.xlu0 %1666
    %v1668 = vmax.f32 %v1602, %v1603
    %1669 = vmax.xlane.f32.xlu0 %v1668
    %v1670 = vpop.xlane.xlu0 %1669
    %v1671 = vmax.f32 %v1604, %v1605
    %1672 = vmax.xlane.f32.xlu0 %v1671
    %v1673 = vpop.xlane.xlu0 %1672
    %v1674 = vmax.f32 %v1606, %v1607
    %1675 = vmax.xlane.f32.xlu0 %v1674
    %v1676 = vpop.xlane.xlu0 %1675
    %v1677 = vmax.f32 %v1608, %v1609
    %1678 = vmax.xlane.f32.xlu0 %v1677
    %v1679 = vpop.xlane.xlu0 %1678
    %v1680 = vmax.f32 %v1610, %v1611
    %1681 = vmax.xlane.f32.xlu0 %v1680
    %v1682 = vpop.xlane.xlu0 %1681
    %v1683 = vmax.f32 %v1612, %v1613
    %1684 = vmax.xlane.f32.xlu0 %v1683
    %v1685 = vpop.xlane.xlu0 %1684
    %v1686 = vmax.f32 %v1614, %v1615
    %1687 = vmax.xlane.f32.xlu0 %v1686
    %v1688 = vpop.xlane.xlu0 %1687
    %v1689 = vmax.f32 %v1616, %v1617
    %1690 = vmax.xlane.f32.xlu0 %v1689
    %v1691 = vpop.xlane.xlu0 %1690
    %v1692 = vmax.f32 %v1618, %v1619
    %1693 = vmax.xlane.f32.xlu0 %v1692
    %v1694 = vpop.xlane.xlu0 %1693
    %v1695 = vmax.f32 %v1620, %v1621
    %1696 = vmax.xlane.f32.xlu0 %v1695
    %v1697 = vpop.xlane.xlu0 %1696
    %v1698 = vmax.f32 %v1622, %v1623
    %1699 = vmax.xlane.f32.xlu0 %v1698
    %v1700 = vpop.xlane.xlu0 %1699
    %v1701 = vmax.f32 %v1624, %v1625
    %1702 = vmax.xlane.f32.xlu0 %v1701
    %v1703 = vpop.xlane.xlu0 %1702
    %v1704 = vmax.f32 %v1626, %v1627
    %1705 = vmax.xlane.f32.xlu0 %v1704
    %v1706 = vpop.xlane.xlu0 %1705
    %v1707 = vmax.f32 %v1628, %v1629
    %1708 = vmax.xlane.f32.xlu0 %v1707
    %v1709 = vpop.xlane.xlu0 %1708
    %v1710 = vmax.f32 %v1630, %v1631
    %1711 = vmax.xlane.f32.xlu0 %v1710
    %v1712 = vpop.xlane.xlu0 %1711
    %v1713 = vmax.f32 %v1632, %v1633
    %1714 = vmax.xlane.f32.xlu0 %v1713
    %v1715 = vpop.xlane.xlu0 %1714
    %v1716 = vmax.f32 %v1634, %v1635
    %1717 = vmax.xlane.f32.xlu0 %v1716
    %v1718 = vpop.xlane.xlu0 %1717
    %v1719 = vmax.f32 %v1636, %v1637
    %1720 = vmax.xlane.f32.xlu0 %v1719
    %v1721 = vpop.xlane.xlu0 %1720
    %v1722 = vmax.f32 %v1638, %v1639
    %1723 = vmax.xlane.f32.xlu0 %v1722
    %v1724 = vpop.xlane.xlu0 %1723
    %v1725 = vmax.f32 %v1640, %v1641
    %1726 = vmax.xlane.f32.xlu0 %v1725
    %v1727 = vpop.xlane.xlu0 %1726
    %v1728 = vmax.f32 %v1642, %v1643
    %1729 = vmax.xlane.f32.xlu0 %v1728
    %v1730 = vpop.xlane.xlu0 %1729
    %v1731 = vmax.f32 %v1644, %v1645
    %1732 = vmax.xlane.f32.xlu0 %v1731
    %v1733 = vpop.xlane.xlu0 %1732
    %v1734 = vmax.f32 %v1646, %v1647
    %1735 = vmax.xlane.f32.xlu0 %v1734
    %v1736 = vpop.xlane.xlu0 %1735
    %v1737 = vmax.f32 %v1648, %v1649
    %1738 = vmax.xlane.f32.xlu0 %v1737
    %v1739 = vpop.xlane.xlu0 %1738
    %v1740 = vmax.f32 %v1650, %v1651
    %1741 = vmax.xlane.f32.xlu0 %v1740
    %v1742 = vpop.xlane.xlu0 %1741
    %v1743 = vmax.f32 %v1652, %v1653
    %1744 = vmax.xlane.f32.xlu0 %v1743
    %v1745 = vpop.xlane.xlu0 %1744
    %v1746 = vmax.f32 %v1654, %v1655
    %1747 = vmax.xlane.f32.xlu0 %v1746
    %v1748 = vpop.xlane.xlu0 %1747
    %v1749 = vmax.f32 %v1656, %v1657
    %1750 = vmax.xlane.f32.xlu0 %v1749
    %v1751 = vpop.xlane.xlu0 %1750
    %v1752 = vmax.f32 %v1658, %v1659
    %1753 = vmax.xlane.f32.xlu0 %v1752
    %v1754 = vpop.xlane.xlu0 %1753
    %v1755 = vmax.f32 %v1660, %v1661
    %1756 = vmax.xlane.f32.xlu0 %v1755
    %v1757 = vpop.xlane.xlu0 %1756
    %v1758 = vmax.f32 %v1664, 0.0
    %v1759 = vmax.f32 %v1667, 0.0
    %v1760 = vmax.f32 %v1670, 0.0
    %v1761 = vmax.f32 %v1673, 0.0
    %v1762 = vmax.f32 %v1676, 0.0
    %v1763 = vmax.f32 %v1679, 0.0
    %v1764 = vmax.f32 %v1682, 0.0
    %v1765 = vmax.f32 %v1685, 0.0
    %v1766 = vmax.f32 %v1688, 0.0
    %v1767 = vmax.f32 %v1691, 0.0
    %v1768 = vmax.f32 %v1694, 0.0
    %v1769 = vmax.f32 %v1697, 0.0
    %v1770 = vmax.f32 %v1700, 0.0
    %v1771 = vmax.f32 %v1703, 0.0
    %v1772 = vmax.f32 %v1706, 0.0
    %v1773 = vmax.f32 %v1709, 0.0
    %v1774 = vmax.f32 %v1712, 0.0
    %v1775 = vmax.f32 %v1715, 0.0
    %v1776 = vmax.f32 %v1718, 0.0
    %v1777 = vmax.f32 %v1721, 0.0
    %v1778 = vmax.f32 %v1724, 0.0
    %v1779 = vmax.f32 %v1727, 0.0
    %v1780 = vmax.f32 %v1730, 0.0
    %v1781 = vmax.f32 %v1733, 0.0
    %v1782 = vmax.f32 %v1736, 0.0
    %v1783 = vmax.f32 %v1739, 0.0
    %v1784 = vmax.f32 %v1742, 0.0
    %v1785 = vmax.f32 %v1745, 0.0
    %v1786 = vmax.f32 %v1748, 0.0
    %v1787 = vmax.f32 %v1751, 0.0
    %v1788 = vmax.f32 %v1754, 0.0
    %v1789 = vmax.f32 %v1757, 0.0
    %v1790 = vsub.f32 %v1598, %v1758
    %v1791 = vsub.f32 %v1599, %v1758
    %v1792 = vsub.f32 %v1600, %v1759
    %v1793 = vsub.f32 %v1601, %v1759
    %v1794 = vsub.f32 %v1602, %v1760
    %v1795 = vsub.f32 %v1603, %v1760
    %v1796 = vsub.f32 %v1604, %v1761
    %v1797 = vsub.f32 %v1605, %v1761
    %v1798 = vsub.f32 %v1606, %v1762
    %v1799 = vsub.f32 %v1607, %v1762
    %v1800 = vsub.f32 %v1608, %v1763
    %v1801 = vsub.f32 %v1609, %v1763
    %v1802 = vsub.f32 %v1610, %v1764
    %v1803 = vsub.f32 %v1611, %v1764
    %v1804 = vsub.f32 %v1612, %v1765
    %v1805 = vsub.f32 %v1613, %v1765
    %v1806 = vsub.f32 %v1614, %v1766
    %v1807 = vsub.f32 %v1615, %v1766
    %v1808 = vsub.f32 %v1616, %v1767
    %v1809 = vsub.f32 %v1617, %v1767
    %v1810 = vsub.f32 %v1618, %v1768
    %v1811 = vsub.f32 %v1619, %v1768
    %v1812 = vsub.f32 %v1620, %v1769
    %v1813 = vsub.f32 %v1621, %v1769
    %v1814 = vsub.f32 %v1622, %v1770
    %v1815 = vsub.f32 %v1623, %v1770
    %v1816 = vsub.f32 %v1624, %v1771
    %v1817 = vsub.f32 %v1625, %v1771
    %v1818 = vsub.f32 %v1626, %v1772
    %v1819 = vsub.f32 %v1627, %v1772
    %v1820 = vsub.f32 %v1628, %v1773
    %v1821 = vsub.f32 %v1629, %v1773
    %v1822 = vsub.f32 %v1630, %v1774
    %v1823 = vsub.f32 %v1631, %v1774
    %v1824 = vsub.f32 %v1632, %v1775
    %v1825 = vsub.f32 %v1633, %v1775
    %v1826 = vsub.f32 %v1634, %v1776
    %v1827 = vsub.f32 %v1635, %v1776
    %v1828 = vsub.f32 %v1636, %v1777
    %v1829 = vsub.f32 %v1637, %v1777
    %v1830 = vsub.f32 %v1638, %v1778
    %v1831 = vsub.f32 %v1639, %v1778
    %v1832 = vsub.f32 %v1640, %v1779
    %v1833 = vsub.f32 %v1641, %v1779
    %v1834 = vsub.f32 %v1642, %v1780
    %v1835 = vsub.f32 %v1643, %v1780
    %v1836 = vsub.f32 %v1644, %v1781
    %v1837 = vsub.f32 %v1645, %v1781
    %v1838 = vsub.f32 %v1646, %v1782
    %v1839 = vsub.f32 %v1647, %v1782
    %v1840 = vsub.f32 %v1648, %v1783
    %v1841 = vsub.f32 %v1649, %v1783
    %v1842 = vsub.f32 %v1650, %v1784
    %v1843 = vsub.f32 %v1651, %v1784
    %v1844 = vsub.f32 %v1652, %v1785
    %v1845 = vsub.f32 %v1653, %v1785
    %v1846 = vsub.f32 %v1654, %v1786
    %v1847 = vsub.f32 %v1655, %v1786
    %v1848 = vsub.f32 %v1656, %v1787
    %v1849 = vsub.f32 %v1657, %v1787
    %v1850 = vsub.f32 %v1658, %v1788
    %v1851 = vsub.f32 %v1659, %v1788
    %v1852 = vsub.f32 %v1660, %v1789
    %v1853 = vsub.f32 %v1661, %v1789
    %v1854 = vmul.f32 %v1790, 1.442695
    %v1855 = vpow.pop %v1854
    %v1856 = vmul.f32 %v1791, 1.442695
    %v1857 = vpow.pop %v1856
    %v1858 = vmul.f32 %v1792, 1.442695
    %v1859 = vpow.pop %v1858
    %v1860 = vmul.f32 %v1793, 1.442695
    %v1861 = vpow.pop %v1860
    %v1862 = vmul.f32 %v1794, 1.442695
    %v1863 = vpow.pop %v1862
    %v1864 = vmul.f32 %v1795, 1.442695
    %v1865 = vpow.pop %v1864
    %v1866 = vmul.f32 %v1796, 1.442695
    %v1867 = vpow.pop %v1866
    %v1868 = vmul.f32 %v1797, 1.442695
    %v1869 = vpow.pop %v1868
    %v1870 = vmul.f32 %v1798, 1.442695
    %v1871 = vpow.pop %v1870
    %v1872 = vmul.f32 %v1799, 1.442695
    %v1873 = vpow.pop %v1872
    %v1874 = vmul.f32 %v1800, 1.442695
    %v1875 = vpow.pop %v1874
    %v1876 = vmul.f32 %v1801, 1.442695
    %v1877 = vpow.pop %v1876
    %v1878 = vmul.f32 %v1802, 1.442695
    %v1879 = vpow.pop %v1878
    %v1880 = vmul.f32 %v1803, 1.442695
    %v1881 = vpow.pop %v1880
    %v1882 = vmul.f32 %v1804, 1.442695
    %v1883 = vpow.pop %v1882
    %v1884 = vmul.f32 %v1805, 1.442695
    %v1885 = vpow.pop %v1884
    %v1886 = vmul.f32 %v1806, 1.442695
    %v1887 = vpow.pop %v1886
    %v1888 = vmul.f32 %v1807, 1.442695
    %v1889 = vpow.pop %v1888
    %v1890 = vmul.f32 %v1808, 1.442695
    %v1891 = vpow.pop %v1890
    %v1892 = vmul.f32 %v1809, 1.442695
    %v1893 = vpow.pop %v1892
    %v1894 = vmul.f32 %v1810, 1.442695
    %v1895 = vpow.pop %v1894
    %v1896 = vmul.f32 %v1811, 1.442695
    %v1897 = vpow.pop %v1896
    %v1898 = vmul.f32 %v1812, 1.442695
    %v1899 = vpow.pop %v1898
    %v1900 = vmul.f32 %v1813, 1.442695
    %v1901 = vpow.pop %v1900
    %v1902 = vmul.f32 %v1814, 1.442695
    %v1903 = vpow.pop %v1902
    %v1904 = vmul.f32 %v1815, 1.442695
    %v1905 = vpow.pop %v1904
    %v1906 = vmul.f32 %v1816, 1.442695
    %v1907 = vpow.pop %v1906
    %v1908 = vmul.f32 %v1817, 1.442695
    %v1909 = vpow.pop %v1908
    %v1910 = vmul.f32 %v1818, 1.442695
    %v1911 = vpow.pop %v1910
    %v1912 = vmul.f32 %v1819, 1.442695
    %v1913 = vpow.pop %v1912
    %v1914 = vmul.f32 %v1820, 1.442695
    %v1915 = vpow.pop %v1914
    %v1916 = vmul.f32 %v1821, 1.442695
    %v1917 = vpow.pop %v1916
    %v1918 = vmul.f32 %v1822, 1.442695
    %v1919 = vpow.pop %v1918
    %v1920 = vmul.f32 %v1823, 1.442695
    %v1921 = vpow.pop %v1920
    %v1922 = vmul.f32 %v1824, 1.442695
    %v1923 = vpow.pop %v1922
    %v1924 = vmul.f32 %v1825, 1.442695
    %v1925 = vpow.pop %v1924
    %v1926 = vmul.f32 %v1826, 1.442695
    %v1927 = vpow.pop %v1926
    %v1928 = vmul.f32 %v1827, 1.442695
    %v1929 = vpow.pop %v1928
    %v1930 = vmul.f32 %v1828, 1.442695
    %v1931 = vpow.pop %v1930
    %v1932 = vmul.f32 %v1829, 1.442695
    %v1933 = vpow.pop %v1932
    %v1934 = vmul.f32 %v1830, 1.442695
    %v1935 = vpow.pop %v1934
    %v1936 = vmul.f32 %v1831, 1.442695
    %v1937 = vpow.pop %v1936
    %v1938 = vmul.f32 %v1832, 1.442695
    %v1939 = vpow.pop %v1938
    %v1940 = vmul.f32 %v1833, 1.442695
    %v1941 = vpow.pop %v1940
    %v1942 = vmul.f32 %v1834, 1.442695
    %v1943 = vpow.pop %v1942
    %v1944 = vmul.f32 %v1835, 1.442695
    %v1945 = vpow.pop %v1944
    %v1946 = vmul.f32 %v1836, 1.442695
    %v1947 = vpow.pop %v1946
    %v1948 = vmul.f32 %v1837, 1.442695
    %v1949 = vpow.pop %v1948
    %v1950 = vmul.f32 %v1838, 1.442695
    %v1951 = vpow.pop %v1950
    %v1952 = vmul.f32 %v1839, 1.442695
    %v1953 = vpow.pop %v1952
    %v1954 = vmul.f32 %v1840, 1.442695
    %v1955 = vpow.pop %v1954
    %v1956 = vmul.f32 %v1841, 1.442695
    %v1957 = vpow.pop %v1956
    %v1958 = vmul.f32 %v1842, 1.442695
    %v1959 = vpow.pop %v1958
    %v1960 = vmul.f32 %v1843, 1.442695
    %v1961 = vpow.pop %v1960
    %v1962 = vmul.f32 %v1844, 1.442695
    %v1963 = vpow.pop %v1962
    %v1964 = vmul.f32 %v1845, 1.442695
    %v1965 = vpow.pop %v1964
    %v1966 = vmul.f32 %v1846, 1.442695
    %v1967 = vpow.pop %v1966
    %v1968 = vmul.f32 %v1847, 1.442695
    %v1969 = vpow.pop %v1968
    %v1970 = vmul.f32 %v1848, 1.442695
    %v1971 = vpow.pop %v1970
    %v1972 = vmul.f32 %v1849, 1.442695
    %v1973 = vpow.pop %v1972
    %v1974 = vmul.f32 %v1850, 1.442695
    %v1975 = vpow.pop %v1974
    %v1976 = vmul.f32 %v1851, 1.442695
    %v1977 = vpow.pop %v1976
    %v1978 = vmul.f32 %v1852, 1.442695
    %v1979 = vpow.pop %v1978
    %v1980 = vmul.f32 %v1853, 1.442695
    %v1981 = vpow.pop %v1980
    %v1982 = vsub.f32 0.0, %v1758
    %v1983 = vsub.f32 0.0, %v1759
    %v1984 = vsub.f32 0.0, %v1760
    %v1985 = vsub.f32 0.0, %v1761
    %v1986 = vsub.f32 0.0, %v1762
    %v1987 = vsub.f32 0.0, %v1763
    %v1988 = vsub.f32 0.0, %v1764
    %v1989 = vsub.f32 0.0, %v1765
    %v1990 = vsub.f32 0.0, %v1766
    %v1991 = vsub.f32 0.0, %v1767
    %v1992 = vsub.f32 0.0, %v1768
    %v1993 = vsub.f32 0.0, %v1769
    %v1994 = vsub.f32 0.0, %v1770
    %v1995 = vsub.f32 0.0, %v1771
    %v1996 = vsub.f32 0.0, %v1772
    %v1997 = vsub.f32 0.0, %v1773
    %v1998 = vsub.f32 0.0, %v1774
    %v1999 = vsub.f32 0.0, %v1775
    %v2000 = vsub.f32 0.0, %v1776
    %v2001 = vsub.f32 0.0, %v1777
    %v2002 = vsub.f32 0.0, %v1778
    %v2003 = vsub.f32 0.0, %v1779
    %v2004 = vsub.f32 0.0, %v1780
    %v2005 = vsub.f32 0.0, %v1781
    %v2006 = vsub.f32 0.0, %v1782
    %v2007 = vsub.f32 0.0, %v1783
    %v2008 = vsub.f32 0.0, %v1784
    %v2009 = vsub.f32 0.0, %v1785
    %v2010 = vsub.f32 0.0, %v1786
    %v2011 = vsub.f32 0.0, %v1787
    %v2012 = vsub.f32 0.0, %v1788
    %v2013 = vsub.f32 0.0, %v1789
    %v2014 = vmul.f32 %v1982, 1.442695
    %v2015 = vpow.pop %v2014
    %v2016 = vmul.f32 %v1983, 1.442695
    %v2017 = vpow.pop %v2016
    %v2018 = vmul.f32 %v1984, 1.442695
    %v2019 = vpow.pop %v2018
    %v2020 = vmul.f32 %v1985, 1.442695
    %v2021 = vpow.pop %v2020
    %v2022 = vmul.f32 %v1986, 1.442695
    %v2023 = vpow.pop %v2022
    %v2024 = vmul.f32 %v1987, 1.442695
    %v2025 = vpow.pop %v2024
    %v2026 = vmul.f32 %v1988, 1.442695
    %v2027 = vpow.pop %v2026
    %v2028 = vmul.f32 %v1989, 1.442695
    %v2029 = vpow.pop %v2028
    %v2030 = vmul.f32 %v1990, 1.442695
    %v2031 = vpow.pop %v2030
    %v2032 = vmul.f32 %v1991, 1.442695
    %v2033 = vpow.pop %v2032
    %v2034 = vmul.f32 %v1992, 1.442695
    %v2035 = vpow.pop %v2034
    %v2036 = vmul.f32 %v1993, 1.442695
    %v2037 = vpow.pop %v2036
    %v2038 = vmul.f32 %v1994, 1.442695
    %v2039 = vpow.pop %v2038
    %v2040 = vmul.f32 %v1995, 1.442695
    %v2041 = vpow.pop %v2040
    %v2042 = vmul.f32 %v1996, 1.442695
    %v2043 = vpow.pop %v2042
    %v2044 = vmul.f32 %v1997, 1.442695
    %v2045 = vpow.pop %v2044
    %v2046 = vmul.f32 %v1998, 1.442695
    %v2047 = vpow.pop %v2046
    %v2048 = vmul.f32 %v1999, 1.442695
    %v2049 = vpow.pop %v2048
    %v2050 = vmul.f32 %v2000, 1.442695
    %v2051 = vpow.pop %v2050
    %v2052 = vmul.f32 %v2001, 1.442695
    %v2053 = vpow.pop %v2052
    %v2054 = vmul.f32 %v2002, 1.442695
    %v2055 = vpow.pop %v2054
    %v2056 = vmul.f32 %v2003, 1.442695
    %v2057 = vpow.pop %v2056
    %v2058 = vmul.f32 %v2004, 1.442695
    %v2059 = vpow.pop %v2058
    %v2060 = vmul.f32 %v2005, 1.442695
    %v2061 = vpow.pop %v2060
    %v2062 = vmul.f32 %v2006, 1.442695
    %v2063 = vpow.pop %v2062
    %v2064 = vmul.f32 %v2007, 1.442695
    %v2065 = vpow.pop %v2064
    %v2066 = vmul.f32 %v2008, 1.442695
    %v2067 = vpow.pop %v2066
    %v2068 = vmul.f32 %v2009, 1.442695
    %v2069 = vpow.pop %v2068
    %v2070 = vmul.f32 %v2010, 1.442695
    %v2071 = vpow.pop %v2070
    %v2072 = vmul.f32 %v2011, 1.442695
    %v2073 = vpow.pop %v2072
    %v2074 = vmul.f32 %v2012, 1.442695
    %v2075 = vpow.pop %v2074
    %v2076 = vmul.f32 %v2013, 1.442695
    %v2077 = vpow.pop %v2076
    %v2078 = vadd.f32 %v1855, %v1857
    %2079 = vadd.xlane.f32.xlu0 %v2078
    %v2080 = vpop.xlane.xlu0 %2079
    %v2081 = vadd.f32 %v1859, %v1861
    %2082 = vadd.xlane.f32.xlu0 %v2081
    %v2083 = vpop.xlane.xlu0 %2082
    %v2084 = vadd.f32 %v1863, %v1865
    %2085 = vadd.xlane.f32.xlu0 %v2084
    %v2086 = vpop.xlane.xlu0 %2085
    %v2087 = vadd.f32 %v1867, %v1869
    %2088 = vadd.xlane.f32.xlu0 %v2087
    %v2089 = vpop.xlane.xlu0 %2088
    %v2090 = vadd.f32 %v1871, %v1873
    %2091 = vadd.xlane.f32.xlu0 %v2090
    %v2092 = vpop.xlane.xlu0 %2091
    %v2093 = vadd.f32 %v1875, %v1877
    %2094 = vadd.xlane.f32.xlu0 %v2093
    %v2095 = vpop.xlane.xlu0 %2094
    %v2096 = vadd.f32 %v1879, %v1881
    %2097 = vadd.xlane.f32.xlu0 %v2096
    %v2098 = vpop.xlane.xlu0 %2097
    %v2099 = vadd.f32 %v1883, %v1885
    %2100 = vadd.xlane.f32.xlu0 %v2099
    %v2101 = vpop.xlane.xlu0 %2100
    %v2102 = vadd.f32 %v1887, %v1889
    %2103 = vadd.xlane.f32.xlu0 %v2102
    %v2104 = vpop.xlane.xlu0 %2103
    %v2105 = vadd.f32 %v1891, %v1893
    %2106 = vadd.xlane.f32.xlu0 %v2105
    %v2107 = vpop.xlane.xlu0 %2106
    %v2108 = vadd.f32 %v1895, %v1897
    %2109 = vadd.xlane.f32.xlu0 %v2108
    %v2110 = vpop.xlane.xlu0 %2109
    %v2111 = vadd.f32 %v1899, %v1901
    %2112 = vadd.xlane.f32.xlu0 %v2111
    %v2113 = vpop.xlane.xlu0 %2112
    %v2114 = vadd.f32 %v1903, %v1905
    %2115 = vadd.xlane.f32.xlu0 %v2114
    %v2116 = vpop.xlane.xlu0 %2115
    %v2117 = vadd.f32 %v1907, %v1909
    %2118 = vadd.xlane.f32.xlu0 %v2117
    %v2119 = vpop.xlane.xlu0 %2118
    %v2120 = vadd.f32 %v1911, %v1913
    %2121 = vadd.xlane.f32.xlu0 %v2120
    %v2122 = vpop.xlane.xlu0 %2121
    %v2123 = vadd.f32 %v1915, %v1917
    %2124 = vadd.xlane.f32.xlu0 %v2123
    %v2125 = vpop.xlane.xlu0 %2124
    %v2126 = vadd.f32 %v1919, %v1921
    %2127 = vadd.xlane.f32.xlu0 %v2126
    %v2128 = vpop.xlane.xlu0 %2127
    %v2129 = vadd.f32 %v1923, %v1925
    %2130 = vadd.xlane.f32.xlu0 %v2129
    %v2131 = vpop.xlane.xlu0 %2130
    %v2132 = vadd.f32 %v1927, %v1929
    %2133 = vadd.xlane.f32.xlu0 %v2132
    %v2134 = vpop.xlane.xlu0 %2133
    %v2135 = vadd.f32 %v1931, %v1933
    %2136 = vadd.xlane.f32.xlu0 %v2135
    %v2137 = vpop.xlane.xlu0 %2136
    %v2138 = vadd.f32 %v1935, %v1937
    %2139 = vadd.xlane.f32.xlu0 %v2138
    %v2140 = vpop.xlane.xlu0 %2139
    %v2141 = vadd.f32 %v1939, %v1941
    %2142 = vadd.xlane.f32.xlu0 %v2141
    %v2143 = vpop.xlane.xlu0 %2142
    %v2144 = vadd.f32 %v1943, %v1945
    %2145 = vadd.xlane.f32.xlu0 %v2144
    %v2146 = vpop.xlane.xlu0 %2145
    %v2147 = vadd.f32 %v1947, %v1949
    %2148 = vadd.xlane.f32.xlu0 %v2147
    %v2149 = vpop.xlane.xlu0 %2148
    %v2150 = vadd.f32 %v1951, %v1953
    %2151 = vadd.xlane.f32.xlu0 %v2150
    %v2152 = vpop.xlane.xlu0 %2151
    %v2153 = vadd.f32 %v1955, %v1957
    %2154 = vadd.xlane.f32.xlu0 %v2153
    %v2155 = vpop.xlane.xlu0 %2154
    %v2156 = vadd.f32 %v1959, %v1961
    %2157 = vadd.xlane.f32.xlu0 %v2156
    %v2158 = vpop.xlane.xlu0 %2157
    %v2159 = vadd.f32 %v1963, %v1965
    %2160 = vadd.xlane.f32.xlu0 %v2159
    %v2161 = vpop.xlane.xlu0 %2160
    %v2162 = vadd.f32 %v1967, %v1969
    %2163 = vadd.xlane.f32.xlu0 %v2162
    %v2164 = vpop.xlane.xlu0 %2163
    %v2165 = vadd.f32 %v1971, %v1973
    %2166 = vadd.xlane.f32.xlu0 %v2165
    %v2167 = vpop.xlane.xlu0 %2166
    %v2168 = vadd.f32 %v1975, %v1977
    %2169 = vadd.xlane.f32.xlu0 %v2168
    %v2170 = vpop.xlane.xlu0 %2169
    %v2171 = vadd.f32 %v1979, %v1981
    %2172 = vadd.xlane.f32.xlu0 %v2171
    %v2173 = vpop.xlane.xlu0 %2172
    %v2174 = vadd.f32 %v2015, %v2080
    %v2175 = vadd.f32 %v2017, %v2083
    %v2176 = vadd.f32 %v2019, %v2086
    %v2177 = vadd.f32 %v2021, %v2089
    %v2178 = vadd.f32 %v2023, %v2092
    %v2179 = vadd.f32 %v2025, %v2095
    %v2180 = vadd.f32 %v2027, %v2098
    %v2181 = vadd.f32 %v2029, %v2101
    %v2182 = vadd.f32 %v2031, %v2104
    %v2183 = vadd.f32 %v2033, %v2107
    %v2184 = vadd.f32 %v2035, %v2110
    %v2185 = vadd.f32 %v2037, %v2113
    %v2186 = vadd.f32 %v2039, %v2116
    %v2187 = vadd.f32 %v2041, %v2119
    %v2188 = vadd.f32 %v2043, %v2122
    %v2189 = vadd.f32 %v2045, %v2125
    %v2190 = vadd.f32 %v2047, %v2128
    %v2191 = vadd.f32 %v2049, %v2131
    %v2192 = vadd.f32 %v2051, %v2134
    %v2193 = vadd.f32 %v2053, %v2137
    %v2194 = vadd.f32 %v2055, %v2140
    %v2195 = vadd.f32 %v2057, %v2143
    %v2196 = vadd.f32 %v2059, %v2146
    %v2197 = vadd.f32 %v2061, %v2149
    %v2198 = vadd.f32 %v2063, %v2152
    %v2199 = vadd.f32 %v2065, %v2155
    %v2200 = vadd.f32 %v2067, %v2158
    %v2201 = vadd.f32 %v2069, %v2161
    %v2202 = vadd.f32 %v2071, %v2164
    %v2203 = vadd.f32 %v2073, %v2167
    %v2204 = vadd.f32 %v2075, %v2170
    %v2205 = vadd.f32 %v2077, %v2173
    %v2206 = vlog2.pop %v2174
    %v2207 = vmul.f32 %v2206, 0.6931472
    %v2208 = vlog2.pop %v2175
    %v2209 = vmul.f32 %v2208, 0.6931472
    %v2210 = vlog2.pop %v2176
    %v2211 = vmul.f32 %v2210, 0.6931472
    %v2212 = vlog2.pop %v2177
    %v2213 = vmul.f32 %v2212, 0.6931472
    %v2214 = vlog2.pop %v2178
    %v2215 = vmul.f32 %v2214, 0.6931472
    %v2216 = vlog2.pop %v2179
    %v2217 = vmul.f32 %v2216, 0.6931472
    %v2218 = vlog2.pop %v2180
    %v2219 = vmul.f32 %v2218, 0.6931472
    %v2220 = vlog2.pop %v2181
    %v2221 = vmul.f32 %v2220, 0.6931472
    %v2222 = vlog2.pop %v2182
    %v2223 = vmul.f32 %v2222, 0.6931472
    %v2224 = vlog2.pop %v2183
    %v2225 = vmul.f32 %v2224, 0.6931472
    %v2226 = vlog2.pop %v2184
    %v2227 = vmul.f32 %v2226, 0.6931472
    %v2228 = vlog2.pop %v2185
    %v2229 = vmul.f32 %v2228, 0.6931472
    %v2230 = vlog2.pop %v2186
    %v2231 = vmul.f32 %v2230, 0.6931472
    %v2232 = vlog2.pop %v2187
    %v2233 = vmul.f32 %v2232, 0.6931472
    %v2234 = vlog2.pop %v2188
    %v2235 = vmul.f32 %v2234, 0.6931472
    %v2236 = vlog2.pop %v2189
    %v2237 = vmul.f32 %v2236, 0.6931472
    %v2238 = vlog2.pop %v2190
    %v2239 = vmul.f32 %v2238, 0.6931472
    %v2240 = vlog2.pop %v2191
    %v2241 = vmul.f32 %v2240, 0.6931472
    %v2242 = vlog2.pop %v2192
    %v2243 = vmul.f32 %v2242, 0.6931472
    %v2244 = vlog2.pop %v2193
    %v2245 = vmul.f32 %v2244, 0.6931472
    %v2246 = vlog2.pop %v2194
    %v2247 = vmul.f32 %v2246, 0.6931472
    %v2248 = vlog2.pop %v2195
    %v2249 = vmul.f32 %v2248, 0.6931472
    %v2250 = vlog2.pop %v2196
    %v2251 = vmul.f32 %v2250, 0.6931472
    %v2252 = vlog2.pop %v2197
    %v2253 = vmul.f32 %v2252, 0.6931472
    %v2254 = vlog2.pop %v2198
    %v2255 = vmul.f32 %v2254, 0.6931472
    %v2256 = vlog2.pop %v2199
    %v2257 = vmul.f32 %v2256, 0.6931472
    %v2258 = vlog2.pop %v2200
    %v2259 = vmul.f32 %v2258, 0.6931472
    %v2260 = vlog2.pop %v2201
    %v2261 = vmul.f32 %v2260, 0.6931472
    %v2262 = vlog2.pop %v2202
    %v2263 = vmul.f32 %v2262, 0.6931472
    %v2264 = vlog2.pop %v2203
    %v2265 = vmul.f32 %v2264, 0.6931472
    %v2266 = vlog2.pop %v2204
    %v2267 = vmul.f32 %v2266, 0.6931472
    %v2268 = vlog2.pop %v2205
    %v2269 = vmul.f32 %v2268, 0.6931472
    %v2270 = vadd.f32 %v1758, %v2207
    %v2271 = vadd.f32 %v1759, %v2209
    %v2272 = vadd.f32 %v1760, %v2211
    %v2273 = vadd.f32 %v1761, %v2213
    %v2274 = vadd.f32 %v1762, %v2215
    %v2275 = vadd.f32 %v1763, %v2217
    %v2276 = vadd.f32 %v1764, %v2219
    %v2277 = vadd.f32 %v1765, %v2221
    %v2278 = vadd.f32 %v1766, %v2223
    %v2279 = vadd.f32 %v1767, %v2225
    %v2280 = vadd.f32 %v1768, %v2227
    %v2281 = vadd.f32 %v1769, %v2229
    %v2282 = vadd.f32 %v1770, %v2231
    %v2283 = vadd.f32 %v1771, %v2233
    %v2284 = vadd.f32 %v1772, %v2235
    %v2285 = vadd.f32 %v1773, %v2237
    %v2286 = vadd.f32 %v1774, %v2239
    %v2287 = vadd.f32 %v1775, %v2241
    %v2288 = vadd.f32 %v1776, %v2243
    %v2289 = vadd.f32 %v1777, %v2245
    %v2290 = vadd.f32 %v1778, %v2247
    %v2291 = vadd.f32 %v1779, %v2249
    %v2292 = vadd.f32 %v1780, %v2251
    %v2293 = vadd.f32 %v1781, %v2253
    %v2294 = vadd.f32 %v1782, %v2255
    %v2295 = vadd.f32 %v1783, %v2257
    %v2296 = vadd.f32 %v1784, %v2259
    %v2297 = vadd.f32 %v1785, %v2261
    %v2298 = vadd.f32 %v1786, %v2263
    %v2299 = vadd.f32 %v1787, %v2265
    %v2300 = vadd.f32 %v1788, %v2267
    %v2301 = vadd.f32 %v1789, %v2269
    %vm2302 = vcmp.gt.f32.partialorder %v1664, -1.7014117e+38
    %vm2303 = vcmp.gt.f32.partialorder %v1667, -1.7014117e+38
    %vm2304 = vcmp.gt.f32.partialorder %v1670, -1.7014117e+38
    %vm2305 = vcmp.gt.f32.partialorder %v1673, -1.7014117e+38
    %vm2306 = vcmp.gt.f32.partialorder %v1676, -1.7014117e+38
    %vm2307 = vcmp.gt.f32.partialorder %v1679, -1.7014117e+38
    %vm2308 = vcmp.gt.f32.partialorder %v1682, -1.7014117e+38
    %vm2309 = vcmp.gt.f32.partialorder %v1685, -1.7014117e+38
    %vm2310 = vcmp.gt.f32.partialorder %v1688, -1.7014117e+38
    %vm2311 = vcmp.gt.f32.partialorder %v1691, -1.7014117e+38
    %vm2312 = vcmp.gt.f32.partialorder %v1694, -1.7014117e+38
    %vm2313 = vcmp.gt.f32.partialorder %v1697, -1.7014117e+38
    %vm2314 = vcmp.gt.f32.partialorder %v1700, -1.7014117e+38
    %vm2315 = vcmp.gt.f32.partialorder %v1703, -1.7014117e+38
    %vm2316 = vcmp.gt.f32.partialorder %v1706, -1.7014117e+38
    %vm2317 = vcmp.gt.f32.partialorder %v1709, -1.7014117e+38
    %vm2318 = vcmp.gt.f32.partialorder %v1712, -1.7014117e+38
    %vm2319 = vcmp.gt.f32.partialorder %v1715, -1.7014117e+38
    %vm2320 = vcmp.gt.f32.partialorder %v1718, -1.7014117e+38
    %vm2321 = vcmp.gt.f32.partialorder %v1721, -1.7014117e+38
    %vm2322 = vcmp.gt.f32.partialorder %v1724, -1.7014117e+38
    %vm2323 = vcmp.gt.f32.partialorder %v1727, -1.7014117e+38
    %vm2324 = vcmp.gt.f32.partialorder %v1730, -1.7014117e+38
    %vm2325 = vcmp.gt.f32.partialorder %v1733, -1.7014117e+38
    %vm2326 = vcmp.gt.f32.partialorder %v1736, -1.7014117e+38
    %vm2327 = vcmp.gt.f32.partialorder %v1739, -1.7014117e+38
    %vm2328 = vcmp.gt.f32.partialorder %v1742, -1.7014117e+38
    %vm2329 = vcmp.gt.f32.partialorder %v1745, -1.7014117e+38
    %vm2330 = vcmp.gt.f32.partialorder %v1748, -1.7014117e+38
    %vm2331 = vcmp.gt.f32.partialorder %v1751, -1.7014117e+38
    %vm2332 = vcmp.gt.f32.partialorder %v1754, -1.7014117e+38
    %vm2333 = vcmp.gt.f32.partialorder %v1757, -1.7014117e+38
    %v2334 = vsel %vm2302, %v2270, 0.0
    %v2335 = vsel %vm2303, %v2271, 0.0
    %v2336 = vsel %vm2304, %v2272, 0.0
    %v2337 = vsel %vm2305, %v2273, 0.0
    %v2338 = vsel %vm2306, %v2274, 0.0
    %v2339 = vsel %vm2307, %v2275, 0.0
    %v2340 = vsel %vm2308, %v2276, 0.0
    %v2341 = vsel %vm2309, %v2277, 0.0
    %v2342 = vsel %vm2310, %v2278, 0.0
    %v2343 = vsel %vm2311, %v2279, 0.0
    %v2344 = vsel %vm2312, %v2280, 0.0
    %v2345 = vsel %vm2313, %v2281, 0.0
    %v2346 = vsel %vm2314, %v2282, 0.0
    %v2347 = vsel %vm2315, %v2283, 0.0
    %v2348 = vsel %vm2316, %v2284, 0.0
    %v2349 = vsel %vm2317, %v2285, 0.0
    %v2350 = vsel %vm2318, %v2286, 0.0
    %v2351 = vsel %vm2319, %v2287, 0.0
    %v2352 = vsel %vm2320, %v2288, 0.0
    %v2353 = vsel %vm2321, %v2289, 0.0
    %v2354 = vsel %vm2322, %v2290, 0.0
    %v2355 = vsel %vm2323, %v2291, 0.0
    %v2356 = vsel %vm2324, %v2292, 0.0
    %v2357 = vsel %vm2325, %v2293, 0.0
    %v2358 = vsel %vm2326, %v2294, 0.0
    %v2359 = vsel %vm2327, %v2295, 0.0
    %v2360 = vsel %vm2328, %v2296, 0.0
    %v2361 = vsel %vm2329, %v2297, 0.0
    %v2362 = vsel %vm2330, %v2298, 0.0
    %v2363 = vsel %vm2331, %v2299, 0.0
    %v2364 = vsel %vm2332, %v2300, 0.0
    %v2365 = vsel %vm2333, %v2301, 0.0
    %v2366 = vsel %vm798, 16843009, 0
    %v2367 = vsel %vm799, 16843009, 0
    %v2368 = vsel %vm800, 16843009, 0
    %v2369 = vsel %vm801, 16843009, 0
    %v2370 = vsel %vm802, 16843009, 0
    %v2371 = vsel %vm803, 16843009, 0
    %v2372 = vsel %vm804, 16843009, 0
    %v2373 = vsel %vm805, 16843009, 0
    %v2374 = vsel %vm806, 16843009, 0
    %v2375 = vsel %vm807, 16843009, 0
    %v2376 = vsel %vm808, 16843009, 0
    %v2377 = vsel %vm809, 16843009, 0
    %v2378 = vsel %vm810, 16843009, 0
    %v2379 = vsel %vm811, 16843009, 0
    %v2380 = vsel %vm812, 16843009, 0
    %v2381 = vsel %vm813, 16843009, 0
    %v2382 = vunpack.c.0.s8 %v2366
    %v2383 = vunpack.c.0.s8 %v2367
    %v2384 = vunpack.c.1.s8 %v2366
    %v2385 = vunpack.c.1.s8 %v2367
    %v2386 = vunpack.c.2.s8 %v2366
    %v2387 = vunpack.c.2.s8 %v2367
    %v2388 = vunpack.c.3.s8 %v2366
    %v2389 = vunpack.c.3.s8 %v2367
    %v2390 = vunpack.c.0.s8 %v2368
    %v2391 = vunpack.c.0.s8 %v2369
    %v2392 = vunpack.c.1.s8 %v2368
    %v2393 = vunpack.c.1.s8 %v2369
    %v2394 = vunpack.c.2.s8 %v2368
    %v2395 = vunpack.c.2.s8 %v2369
    %v2396 = vunpack.c.3.s8 %v2368
    %v2397 = vunpack.c.3.s8 %v2369
    %v2398 = vunpack.c.0.s8 %v2370
    %v2399 = vunpack.c.0.s8 %v2371
    %v2400 = vunpack.c.1.s8 %v2370
    %v2401 = vunpack.c.1.s8 %v2371
    %v2402 = vunpack.c.2.s8 %v2370
    %v2403 = vunpack.c.2.s8 %v2371
    %v2404 = vunpack.c.3.s8 %v2370
    %v2405 = vunpack.c.3.s8 %v2371
    %v2406 = vunpack.c.0.s8 %v2372
    %v2407 = vunpack.c.0.s8 %v2373
    %v2408 = vunpack.c.1.s8 %v2372
    %v2409 = vunpack.c.1.s8 %v2373
    %v2410 = vunpack.c.2.s8 %v2372
    %v2411 = vunpack.c.2.s8 %v2373
    %v2412 = vunpack.c.3.s8 %v2372
    %v2413 = vunpack.c.3.s8 %v2373
    %v2414 = vunpack.c.0.s8 %v2374
    %v2415 = vunpack.c.0.s8 %v2375
    %v2416 = vunpack.c.1.s8 %v2374
    %v2417 = vunpack.c.1.s8 %v2375
    %v2418 = vunpack.c.2.s8 %v2374
    %v2419 = vunpack.c.2.s8 %v2375
    %v2420 = vunpack.c.3.s8 %v2374
    %v2421 = vunpack.c.3.s8 %v2375
    %v2422 = vunpack.c.0.s8 %v2376
    %v2423 = vunpack.c.0.s8 %v2377
    %v2424 = vunpack.c.1.s8 %v2376
    %v2425 = vunpack.c.1.s8 %v2377
    %v2426 = vunpack.c.2.s8 %v2376
    %v2427 = vunpack.c.2.s8 %v2377
    %v2428 = vunpack.c.3.s8 %v2376
    %v2429 = vunpack.c.3.s8 %v2377
    %v2430 = vunpack.c.0.s8 %v2378
    %v2431 = vunpack.c.0.s8 %v2379
    %v2432 = vunpack.c.1.s8 %v2378
    %v2433 = vunpack.c.1.s8 %v2379
    %v2434 = vunpack.c.2.s8 %v2378
    %v2435 = vunpack.c.2.s8 %v2379
    %v2436 = vunpack.c.3.s8 %v2378
    %v2437 = vunpack.c.3.s8 %v2379
    %v2438 = vunpack.c.0.s8 %v2380
    %v2439 = vunpack.c.0.s8 %v2381
    %v2440 = vunpack.c.1.s8 %v2380
    %v2441 = vunpack.c.1.s8 %v2381
    %v2442 = vunpack.c.2.s8 %v2380
    %v2443 = vunpack.c.2.s8 %v2381
    %v2444 = vunpack.c.3.s8 %v2380
    %v2445 = vunpack.c.3.s8 %v2381
    %v2446 = vpack.c.b16 %v2383, %v2382
    %v2447 = vpack.c.b8 %v2446, %v2446
    %v2448 = vpack.c.b16 %v2385, %v2384
    %v2449 = vpack.c.b8 %v2448, %v2448
    %v2450 = vpack.c.b16 %v2387, %v2386
    %v2451 = vpack.c.b8 %v2450, %v2450
    %v2452 = vpack.c.b16 %v2389, %v2388
    %v2453 = vpack.c.b8 %v2452, %v2452
    %v2454 = vpack.c.b16 %v2391, %v2390
    %v2455 = vpack.c.b8 %v2454, %v2454
    %v2456 = vpack.c.b16 %v2393, %v2392
    %v2457 = vpack.c.b8 %v2456, %v2456
    %v2458 = vpack.c.b16 %v2395, %v2394
    %v2459 = vpack.c.b8 %v2458, %v2458
    %v2460 = vpack.c.b16 %v2397, %v2396
    %v2461 = vpack.c.b8 %v2460, %v2460
    %v2462 = vpack.c.b16 %v2399, %v2398
    %v2463 = vpack.c.b8 %v2462, %v2462
    %v2464 = vpack.c.b16 %v2401, %v2400
    %v2465 = vpack.c.b8 %v2464, %v2464
    %v2466 = vpack.c.b16 %v2403, %v2402
    %v2467 = vpack.c.b8 %v2466, %v2466
    %v2468 = vpack.c.b16 %v2405, %v2404
    %v2469 = vpack.c.b8 %v2468, %v2468
    %v2470 = vpack.c.b16 %v2407, %v2406
    %v2471 = vpack.c.b8 %v2470, %v2470
    %v2472 = vpack.c.b16 %v2409, %v2408
    %v2473 = vpack.c.b8 %v2472, %v2472
    %v2474 = vpack.c.b16 %v2411, %v2410
    %v2475 = vpack.c.b8 %v2474, %v2474
    %v2476 = vpack.c.b16 %v2413, %v2412
    %v2477 = vpack.c.b8 %v2476, %v2476
    %v2478 = vpack.c.b16 %v2415, %v2414
    %v2479 = vpack.c.b8 %v2478, %v2478
    %v2480 = vpack.c.b16 %v2417, %v2416
    %v2481 = vpack.c.b8 %v2480, %v2480
    %v2482 = vpack.c.b16 %v2419, %v2418
    %v2483 = vpack.c.b8 %v2482, %v2482
    %v2484 = vpack.c.b16 %v2421, %v2420
    %v2485 = vpack.c.b8 %v2484, %v2484
    %v2486 = vpack.c.b16 %v2423, %v2422
    %v2487 = vpack.c.b8 %v2486, %v2486
    %v2488 = vpack.c.b16 %v2425, %v2424
    %v2489 = vpack.c.b8 %v2488, %v2488
    %v2490 = vpack.c.b16 %v2427, %v2426
    %v2491 = vpack.c.b8 %v2490, %v2490
    %v2492 = vpack.c.b16 %v2429, %v2428
    %v2493 = vpack.c.b8 %v2492, %v2492
    %v2494 = vpack.c.b16 %v2431, %v2430
    %v2495 = vpack.c.b8 %v2494, %v2494
    %v2496 = vpack.c.b16 %v2433, %v2432
    %v2497 = vpack.c.b8 %v2496, %v2496
    %v2498 = vpack.c.b16 %v2435, %v2434
    %v2499 = vpack.c.b8 %v2498, %v2498
    %v2500 = vpack.c.b16 %v2437, %v2436
    %v2501 = vpack.c.b8 %v2500, %v2500
    %v2502 = vpack.c.b16 %v2439, %v2438
    %v2503 = vpack.c.b8 %v2502, %v2502
    %v2504 = vpack.c.b16 %v2441, %v2440
    %v2505 = vpack.c.b8 %v2504, %v2504
    %v2506 = vpack.c.b16 %v2443, %v2442
    %v2507 = vpack.c.b8 %v2506, %v2506
    %v2508 = vpack.c.b16 %v2445, %v2444
    %v2509 = vpack.c.b8 %v2508, %v2508
    %vm2510 = vnez %v2447
    %vm2511 = vnez %v2449
    %vm2512 = vnez %v2451
    %vm2513 = vnez %v2453
    %vm2514 = vnez %v2455
    %vm2515 = vnez %v2457
    %vm2516 = vnez %v2459
    %vm2517 = vnez %v2461
    %vm2518 = vnez %v2463
    %vm2519 = vnez %v2465
    %vm2520 = vnez %v2467
    %vm2521 = vnez %v2469
    %vm2522 = vnez %v2471
    %vm2523 = vnez %v2473
    %vm2524 = vnez %v2475
    %vm2525 = vnez %v2477
    %vm2526 = vnez %v2479
    %vm2527 = vnez %v2481
    %vm2528 = vnez %v2483
    %vm2529 = vnez %v2485
    %vm2530 = vnez %v2487
    %vm2531 = vnez %v2489
    %vm2532 = vnez %v2491
    %vm2533 = vnez %v2493
    %vm2534 = vnez %v2495
    %vm2535 = vnez %v2497
    %vm2536 = vnez %v2499
    %vm2537 = vnez %v2501
    %vm2538 = vnez %v2503
    %vm2539 = vnez %v2505
    %vm2540 = vnez %v2507
    %vm2541 = vnez %v2509
    %v2542 = vsel %vm2510, 16843009, 0
    %v2543 = vsel %vm2511, 16843009, 0
    %v2544 = vsel %vm2512, 16843009, 0
    %v2545 = vsel %vm2513, 16843009, 0
    %v2546 = vsel %vm2514, 16843009, 0
    %v2547 = vsel %vm2515, 16843009, 0
    %v2548 = vsel %vm2516, 16843009, 0
    %v2549 = vsel %vm2517, 16843009, 0
    %v2550 = vsel %vm2518, 16843009, 0
    %v2551 = vsel %vm2519, 16843009, 0
    %v2552 = vsel %vm2520, 16843009, 0
    %v2553 = vsel %vm2521, 16843009, 0
    %v2554 = vsel %vm2522, 16843009, 0
    %v2555 = vsel %vm2523, 16843009, 0
    %v2556 = vsel %vm2524, 16843009, 0
    %v2557 = vsel %vm2525, 16843009, 0
    %v2558 = vsel %vm2526, 16843009, 0
    %v2559 = vsel %vm2527, 16843009, 0
    %v2560 = vsel %vm2528, 16843009, 0
    %v2561 = vsel %vm2529, 16843009, 0
    %v2562 = vsel %vm2530, 16843009, 0
    %v2563 = vsel %vm2531, 16843009, 0
    %v2564 = vsel %vm2532, 16843009, 0
    %v2565 = vsel %vm2533, 16843009, 0
    %v2566 = vsel %vm2534, 16843009, 0
    %v2567 = vsel %vm2535, 16843009, 0
    %v2568 = vsel %vm2536, 16843009, 0
    %v2569 = vsel %vm2537, 16843009, 0
    %v2570 = vsel %vm2538, 16843009, 0
    %v2571 = vsel %vm2539, 16843009, 0
    %v2572 = vsel %vm2540, 16843009, 0
    %v2573 = vsel %vm2541, 16843009, 0
    %v2574 = vunpack.c.0.s8 %v2542
    %v2575 = vunpack.c.1.s8 %v2542
    %v2576 = vunpack.c.0.s8 %v2543
    %v2577 = vunpack.c.1.s8 %v2543
    %v2578 = vunpack.c.0.s8 %v2544
    %v2579 = vunpack.c.1.s8 %v2544
    %v2580 = vunpack.c.0.s8 %v2545
    %v2581 = vunpack.c.1.s8 %v2545
    %v2582 = vunpack.c.0.s8 %v2546
    %v2583 = vunpack.c.1.s8 %v2546
    %v2584 = vunpack.c.0.s8 %v2547
    %v2585 = vunpack.c.1.s8 %v2547
    %v2586 = vunpack.c.0.s8 %v2548
    %v2587 = vunpack.c.1.s8 %v2548
    %v2588 = vunpack.c.0.s8 %v2549
    %v2589 = vunpack.c.1.s8 %v2549
    %v2590 = vunpack.c.0.s8 %v2550
    %v2591 = vunpack.c.1.s8 %v2550
    %v2592 = vunpack.c.0.s8 %v2551
    %v2593 = vunpack.c.1.s8 %v2551
    %v2594 = vunpack.c.0.s8 %v2552
    %v2595 = vunpack.c.1.s8 %v2552
    %v2596 = vunpack.c.0.s8 %v2553
    %v2597 = vunpack.c.1.s8 %v2553
    %v2598 = vunpack.c.0.s8 %v2554
    %v2599 = vunpack.c.1.s8 %v2554
    %v2600 = vunpack.c.0.s8 %v2555
    %v2601 = vunpack.c.1.s8 %v2555
    %v2602 = vunpack.c.0.s8 %v2556
    %v2603 = vunpack.c.1.s8 %v2556
    %v2604 = vunpack.c.0.s8 %v2557
    %v2605 = vunpack.c.1.s8 %v2557
    %v2606 = vunpack.c.0.s8 %v2558
    %v2607 = vunpack.c.1.s8 %v2558
    %v2608 = vunpack.c.0.s8 %v2559
    %v2609 = vunpack.c.1.s8 %v2559
    %v2610 = vunpack.c.0.s8 %v2560
    %v2611 = vunpack.c.1.s8 %v2560
    %v2612 = vunpack.c.0.s8 %v2561
    %v2613 = vunpack.c.1.s8 %v2561
    %v2614 = vunpack.c.0.s8 %v2562
    %v2615 = vunpack.c.1.s8 %v2562
    %v2616 = vunpack.c.0.s8 %v2563
    %v2617 = vunpack.c.1.s8 %v2563
    %v2618 = vunpack.c.0.s8 %v2564
    %v2619 = vunpack.c.1.s8 %v2564
    %v2620 = vunpack.c.0.s8 %v2565
    %v2621 = vunpack.c.1.s8 %v2565
    %v2622 = vunpack.c.0.s8 %v2566
    %v2623 = vunpack.c.1.s8 %v2566
    %v2624 = vunpack.c.0.s8 %v2567
    %v2625 = vunpack.c.1.s8 %v2567
    %v2626 = vunpack.c.0.s8 %v2568
    %v2627 = vunpack.c.1.s8 %v2568
    %v2628 = vunpack.c.0.s8 %v2569
    %v2629 = vunpack.c.1.s8 %v2569
    %v2630 = vunpack.c.0.s8 %v2570
    %v2631 = vunpack.c.1.s8 %v2570
    %v2632 = vunpack.c.0.s8 %v2571
    %v2633 = vunpack.c.1.s8 %v2571
    %v2634 = vunpack.c.0.s8 %v2572
    %v2635 = vunpack.c.1.s8 %v2572
    %v2636 = vunpack.c.0.s8 %v2573
    %v2637 = vunpack.c.1.s8 %v2573
    %vm2638 = vcmp.ne.s32.totalorder %v2574, 0
    %vm2639 = vcmp.ne.s32.totalorder %v2575, 0
    %vm2640 = vcmp.ne.s32.totalorder %v2576, 0
    %vm2641 = vcmp.ne.s32.totalorder %v2577, 0
    %vm2642 = vcmp.ne.s32.totalorder %v2578, 0
    %vm2643 = vcmp.ne.s32.totalorder %v2579, 0
    %vm2644 = vcmp.ne.s32.totalorder %v2580, 0
    %vm2645 = vcmp.ne.s32.totalorder %v2581, 0
    %vm2646 = vcmp.ne.s32.totalorder %v2582, 0
    %vm2647 = vcmp.ne.s32.totalorder %v2583, 0
    %vm2648 = vcmp.ne.s32.totalorder %v2584, 0
    %vm2649 = vcmp.ne.s32.totalorder %v2585, 0
    %vm2650 = vcmp.ne.s32.totalorder %v2586, 0
    %vm2651 = vcmp.ne.s32.totalorder %v2587, 0
    %vm2652 = vcmp.ne.s32.totalorder %v2588, 0
    %vm2653 = vcmp.ne.s32.totalorder %v2589, 0
    %vm2654 = vcmp.ne.s32.totalorder %v2590, 0
    %vm2655 = vcmp.ne.s32.totalorder %v2591, 0
    %vm2656 = vcmp.ne.s32.totalorder %v2592, 0
    %vm2657 = vcmp.ne.s32.totalorder %v2593, 0
    %vm2658 = vcmp.ne.s32.totalorder %v2594, 0
    %vm2659 = vcmp.ne.s32.totalorder %v2595, 0
    %vm2660 = vcmp.ne.s32.totalorder %v2596, 0
    %vm2661 = vcmp.ne.s32.totalorder %v2597, 0
    %vm2662 = vcmp.ne.s32.totalorder %v2598, 0
    %vm2663 = vcmp.ne.s32.totalorder %v2599, 0
    %vm2664 = vcmp.ne.s32.totalorder %v2600, 0
    %vm2665 = vcmp.ne.s32.totalorder %v2601, 0
    %vm2666 = vcmp.ne.s32.totalorder %v2602, 0
    %vm2667 = vcmp.ne.s32.totalorder %v2603, 0
    %vm2668 = vcmp.ne.s32.totalorder %v2604, 0
    %vm2669 = vcmp.ne.s32.totalorder %v2605, 0
    %vm2670 = vcmp.ne.s32.totalorder %v2606, 0
    %vm2671 = vcmp.ne.s32.totalorder %v2607, 0
    %vm2672 = vcmp.ne.s32.totalorder %v2608, 0
    %vm2673 = vcmp.ne.s32.totalorder %v2609, 0
    %vm2674 = vcmp.ne.s32.totalorder %v2610, 0
    %vm2675 = vcmp.ne.s32.totalorder %v2611, 0
    %vm2676 = vcmp.ne.s32.totalorder %v2612, 0
    %vm2677 = vcmp.ne.s32.totalorder %v2613, 0
    %vm2678 = vcmp.ne.s32.totalorder %v2614, 0
    %vm2679 = vcmp.ne.s32.totalorder %v2615, 0
    %vm2680 = vcmp.ne.s32.totalorder %v2616, 0
    %vm2681 = vcmp.ne.s32.totalorder %v2617, 0
    %vm2682 = vcmp.ne.s32.totalorder %v2618, 0
    %vm2683 = vcmp.ne.s32.totalorder %v2619, 0
    %vm2684 = vcmp.ne.s32.totalorder %v2620, 0
    %vm2685 = vcmp.ne.s32.totalorder %v2621, 0
    %vm2686 = vcmp.ne.s32.totalorder %v2622, 0
    %vm2687 = vcmp.ne.s32.totalorder %v2623, 0
    %vm2688 = vcmp.ne.s32.totalorder %v2624, 0
    %vm2689 = vcmp.ne.s32.totalorder %v2625, 0
    %vm2690 = vcmp.ne.s32.totalorder %v2626, 0
    %vm2691 = vcmp.ne.s32.totalorder %v2627, 0
    %vm2692 = vcmp.ne.s32.totalorder %v2628, 0
    %vm2693 = vcmp.ne.s32.totalorder %v2629, 0
    %vm2694 = vcmp.ne.s32.totalorder %v2630, 0
    %vm2695 = vcmp.ne.s32.totalorder %v2631, 0
    %vm2696 = vcmp.ne.s32.totalorder %v2632, 0
    %vm2697 = vcmp.ne.s32.totalorder %v2633, 0
    %vm2698 = vcmp.ne.s32.totalorder %v2634, 0
    %vm2699 = vcmp.ne.s32.totalorder %v2635, 0
    %vm2700 = vcmp.ne.s32.totalorder %v2636, 0
    %vm2701 = vcmp.ne.s32.totalorder %v2637, 0
    %v2702 = vsel %vm2638, %v1198, -3.4028235e+38
    %v2703 = vsel %vm2639, %v1199, -3.4028235e+38
    %v2704 = vsel %vm2640, %v1200, -3.4028235e+38
    %v2705 = vsel %vm2641, %v1201, -3.4028235e+38
    %v2706 = vsel %vm2642, %v1202, -3.4028235e+38
    %v2707 = vsel %vm2643, %v1203, -3.4028235e+38
    %v2708 = vsel %vm2644, %v1204, -3.4028235e+38
    %v2709 = vsel %vm2645, %v1205, -3.4028235e+38
    %v2710 = vsel %vm2646, %v1206, -3.4028235e+38
    %v2711 = vsel %vm2647, %v1207, -3.4028235e+38
    %v2712 = vsel %vm2648, %v1208, -3.4028235e+38
    %v2713 = vsel %vm2649, %v1209, -3.4028235e+38
    %v2714 = vsel %vm2650, %v1210, -3.4028235e+38
    %v2715 = vsel %vm2651, %v1211, -3.4028235e+38
    %v2716 = vsel %vm2652, %v1212, -3.4028235e+38
    %v2717 = vsel %vm2653, %v1213, -3.4028235e+38
    %v2718 = vsel %vm2654, %v1214, -3.4028235e+38
    %v2719 = vsel %vm2655, %v1215, -3.4028235e+38
    %v2720 = vsel %vm2656, %v1216, -3.4028235e+38
    %v2721 = vsel %vm2657, %v1217, -3.4028235e+38
    %v2722 = vsel %vm2658, %v1218, -3.4028235e+38
    %v2723 = vsel %vm2659, %v1219, -3.4028235e+38
    %v2724 = vsel %vm2660, %v1220, -3.4028235e+38
    %v2725 = vsel %vm2661, %v1221, -3.4028235e+38
    %v2726 = vsel %vm2662, %v1222, -3.4028235e+38
    %v2727 = vsel %vm2663, %v1223, -3.4028235e+38
    %v2728 = vsel %vm2664, %v1224, -3.4028235e+38
    %v2729 = vsel %vm2665, %v1225, -3.4028235e+38
    %v2730 = vsel %vm2666, %v1226, -3.4028235e+38
    %v2731 = vsel %vm2667, %v1227, -3.4028235e+38
    %v2732 = vsel %vm2668, %v1228, -3.4028235e+38
    %v2733 = vsel %vm2669, %v1229, -3.4028235e+38
    %v2734 = vsel %vm2670, %v1230, -3.4028235e+38
    %v2735 = vsel %vm2671, %v1231, -3.4028235e+38
    %v2736 = vsel %vm2672, %v1232, -3.4028235e+38
    %v2737 = vsel %vm2673, %v1233, -3.4028235e+38
    %v2738 = vsel %vm2674, %v1234, -3.4028235e+38
    %v2739 = vsel %vm2675, %v1235, -3.4028235e+38
    %v2740 = vsel %vm2676, %v1236, -3.4028235e+38
    %v2741 = vsel %vm2677, %v1237, -3.4028235e+38
    %v2742 = vsel %vm2678, %v1238, -3.4028235e+38
    %v2743 = vsel %vm2679, %v1239, -3.4028235e+38
    %v2744 = vsel %vm2680, %v1240, -3.4028235e+38
    %v2745 = vsel %vm2681, %v1241, -3.4028235e+38
    %v2746 = vsel %vm2682, %v1242, -3.4028235e+38
    %v2747 = vsel %vm2683, %v1243, -3.4028235e+38
    %v2748 = vsel %vm2684, %v1244, -3.4028235e+38
    %v2749 = vsel %vm2685, %v1245, -3.4028235e+38
    %v2750 = vsel %vm2686, %v1246, -3.4028235e+38
    %v2751 = vsel %vm2687, %v1247, -3.4028235e+38
    %v2752 = vsel %vm2688, %v1248, -3.4028235e+38
    %v2753 = vsel %vm2689, %v1249, -3.4028235e+38
    %v2754 = vsel %vm2690, %v1250, -3.4028235e+38
    %v2755 = vsel %vm2691, %v1251, -3.4028235e+38
    %v2756 = vsel %vm2692, %v1252, -3.4028235e+38
    %v2757 = vsel %vm2693, %v1253, -3.4028235e+38
    %v2758 = vsel %vm2694, %v1254, -3.4028235e+38
    %v2759 = vsel %vm2695, %v1255, -3.4028235e+38
    %v2760 = vsel %vm2696, %v1256, -3.4028235e+38
    %v2761 = vsel %vm2697, %v1257, -3.4028235e+38
    %v2762 = vsel %vm2698, %v1258, -3.4028235e+38
    %v2763 = vsel %vm2699, %v1259, -3.4028235e+38
    %v2764 = vsel %vm2700, %v1260, -3.4028235e+38
    %v2765 = vsel %vm2701, %v1261, -3.4028235e+38
    %v2766 = vmax.f32 %v2702, %v2703
    %2767 = vmax.xlane.f32.xlu0 %v2766
    %v2768 = vpop.xlane.xlu0 %2767
    %v2769 = vmax.f32 %v2704, %v2705
    %2770 = vmax.xlane.f32.xlu0 %v2769
    %v2771 = vpop.xlane.xlu0 %2770
    %v2772 = vmax.f32 %v2706, %v2707
    %2773 = vmax.xlane.f32.xlu0 %v2772
    %v2774 = vpop.xlane.xlu0 %2773
    %v2775 = vmax.f32 %v2708, %v2709
    %2776 = vmax.xlane.f32.xlu0 %v2775
    %v2777 = vpop.xlane.xlu0 %2776
    %v2778 = vmax.f32 %v2710, %v2711
    %2779 = vmax.xlane.f32.xlu0 %v2778
    %v2780 = vpop.xlane.xlu0 %2779
    %v2781 = vmax.f32 %v2712, %v2713
    %2782 = vmax.xlane.f32.xlu0 %v2781
    %v2783 = vpop.xlane.xlu0 %2782
    %v2784 = vmax.f32 %v2714, %v2715
    %2785 = vmax.xlane.f32.xlu0 %v2784
    %v2786 = vpop.xlane.xlu0 %2785
    %v2787 = vmax.f32 %v2716, %v2717
    %2788 = vmax.xlane.f32.xlu0 %v2787
    %v2789 = vpop.xlane.xlu0 %2788
    %v2790 = vmax.f32 %v2718, %v2719
    %2791 = vmax.xlane.f32.xlu0 %v2790
    %v2792 = vpop.xlane.xlu0 %2791
    %v2793 = vmax.f32 %v2720, %v2721
    %2794 = vmax.xlane.f32.xlu0 %v2793
    %v2795 = vpop.xlane.xlu0 %2794
    %v2796 = vmax.f32 %v2722, %v2723
    %2797 = vmax.xlane.f32.xlu0 %v2796
    %v2798 = vpop.xlane.xlu0 %2797
    %v2799 = vmax.f32 %v2724, %v2725
    %2800 = vmax.xlane.f32.xlu0 %v2799
    %v2801 = vpop.xlane.xlu0 %2800
    %v2802 = vmax.f32 %v2726, %v2727
    %2803 = vmax.xlane.f32.xlu0 %v2802
    %v2804 = vpop.xlane.xlu0 %2803
    %v2805 = vmax.f32 %v2728, %v2729
    %2806 = vmax.xlane.f32.xlu0 %v2805
    %v2807 = vpop.xlane.xlu0 %2806
    %v2808 = vmax.f32 %v2730, %v2731
    %2809 = vmax.xlane.f32.xlu0 %v2808
    %v2810 = vpop.xlane.xlu0 %2809
    %v2811 = vmax.f32 %v2732, %v2733
    %2812 = vmax.xlane.f32.xlu0 %v2811
    %v2813 = vpop.xlane.xlu0 %2812
    %v2814 = vmax.f32 %v2734, %v2735
    %2815 = vmax.xlane.f32.xlu0 %v2814
    %v2816 = vpop.xlane.xlu0 %2815
    %v2817 = vmax.f32 %v2736, %v2737
    %2818 = vmax.xlane.f32.xlu0 %v2817
    %v2819 = vpop.xlane.xlu0 %2818
    %v2820 = vmax.f32 %v2738, %v2739
    %2821 = vmax.xlane.f32.xlu0 %v2820
    %v2822 = vpop.xlane.xlu0 %2821
    %v2823 = vmax.f32 %v2740, %v2741
    %2824 = vmax.xlane.f32.xlu0 %v2823
    %v2825 = vpop.xlane.xlu0 %2824
    %v2826 = vmax.f32 %v2742, %v2743
    %2827 = vmax.xlane.f32.xlu0 %v2826
    %v2828 = vpop.xlane.xlu0 %2827
    %v2829 = vmax.f32 %v2744, %v2745
    %2830 = vmax.xlane.f32.xlu0 %v2829
    %v2831 = vpop.xlane.xlu0 %2830
    %v2832 = vmax.f32 %v2746, %v2747
    %2833 = vmax.xlane.f32.xlu0 %v2832
    %v2834 = vpop.xlane.xlu0 %2833
    %v2835 = vmax.f32 %v2748, %v2749
    %2836 = vmax.xlane.f32.xlu0 %v2835
    %v2837 = vpop.xlane.xlu0 %2836
    %v2838 = vmax.f32 %v2750, %v2751
    %2839 = vmax.xlane.f32.xlu0 %v2838
    %v2840 = vpop.xlane.xlu0 %2839
    %v2841 = vmax.f32 %v2752, %v2753
    %2842 = vmax.xlane.f32.xlu0 %v2841
    %v2843 = vpop.xlane.xlu0 %2842
    %v2844 = vmax.f32 %v2754, %v2755
    %2845 = vmax.xlane.f32.xlu0 %v2844
    %v2846 = vpop.xlane.xlu0 %2845
    %v2847 = vmax.f32 %v2756, %v2757
    %2848 = vmax.xlane.f32.xlu0 %v2847
    %v2849 = vpop.xlane.xlu0 %2848
    %v2850 = vmax.f32 %v2758, %v2759
    %2851 = vmax.xlane.f32.xlu0 %v2850
    %v2852 = vpop.xlane.xlu0 %2851
    %v2853 = vmax.f32 %v2760, %v2761
    %2854 = vmax.xlane.f32.xlu0 %v2853
    %v2855 = vpop.xlane.xlu0 %2854
    %v2856 = vmax.f32 %v2762, %v2763
    %2857 = vmax.xlane.f32.xlu0 %v2856
    %v2858 = vpop.xlane.xlu0 %2857
    %v2859 = vmax.f32 %v2764, %v2765
    %2860 = vmax.xlane.f32.xlu0 %v2859
    %v2861 = vpop.xlane.xlu0 %2860
    %v2862 = vmax.f32 %v2768, 0.0
    %v2863 = vmax.f32 %v2771, 0.0
    %v2864 = vmax.f32 %v2774, 0.0
    %v2865 = vmax.f32 %v2777, 0.0
    %v2866 = vmax.f32 %v2780, 0.0
    %v2867 = vmax.f32 %v2783, 0.0
    %v2868 = vmax.f32 %v2786, 0.0
    %v2869 = vmax.f32 %v2789, 0.0
    %v2870 = vmax.f32 %v2792, 0.0
    %v2871 = vmax.f32 %v2795, 0.0
    %v2872 = vmax.f32 %v2798, 0.0
    %v2873 = vmax.f32 %v2801, 0.0
    %v2874 = vmax.f32 %v2804, 0.0
    %v2875 = vmax.f32 %v2807, 0.0
    %v2876 = vmax.f32 %v2810, 0.0
    %v2877 = vmax.f32 %v2813, 0.0
    %v2878 = vmax.f32 %v2816, 0.0
    %v2879 = vmax.f32 %v2819, 0.0
    %v2880 = vmax.f32 %v2822, 0.0
    %v2881 = vmax.f32 %v2825, 0.0
    %v2882 = vmax.f32 %v2828, 0.0
    %v2883 = vmax.f32 %v2831, 0.0
    %v2884 = vmax.f32 %v2834, 0.0
    %v2885 = vmax.f32 %v2837, 0.0
    %v2886 = vmax.f32 %v2840, 0.0
    %v2887 = vmax.f32 %v2843, 0.0
    %v2888 = vmax.f32 %v2846, 0.0
    %v2889 = vmax.f32 %v2849, 0.0
    %v2890 = vmax.f32 %v2852, 0.0
    %v2891 = vmax.f32 %v2855, 0.0
    %v2892 = vmax.f32 %v2858, 0.0
    %v2893 = vmax.f32 %v2861, 0.0
    %v2894 = vsub.f32 %v2702, %v2862
    %v2895 = vsub.f32 %v2703, %v2862
    %v2896 = vsub.f32 %v2704, %v2863
    %v2897 = vsub.f32 %v2705, %v2863
    %v2898 = vsub.f32 %v2706, %v2864
    %v2899 = vsub.f32 %v2707, %v2864
    %v2900 = vsub.f32 %v2708, %v2865
    %v2901 = vsub.f32 %v2709, %v2865
    %v2902 = vsub.f32 %v2710, %v2866
    %v2903 = vsub.f32 %v2711, %v2866
    %v2904 = vsub.f32 %v2712, %v2867
    %v2905 = vsub.f32 %v2713, %v2867
    %v2906 = vsub.f32 %v2714, %v2868
    %v2907 = vsub.f32 %v2715, %v2868
    %v2908 = vsub.f32 %v2716, %v2869
    %v2909 = vsub.f32 %v2717, %v2869
    %v2910 = vsub.f32 %v2718, %v2870
    %v2911 = vsub.f32 %v2719, %v2870
    %v2912 = vsub.f32 %v2720, %v2871
    %v2913 = vsub.f32 %v2721, %v2871
    %v2914 = vsub.f32 %v2722, %v2872
    %v2915 = vsub.f32 %v2723, %v2872
    %v2916 = vsub.f32 %v2724, %v2873
    %v2917 = vsub.f32 %v2725, %v2873
    %v2918 = vsub.f32 %v2726, %v2874
    %v2919 = vsub.f32 %v2727, %v2874
    %v2920 = vsub.f32 %v2728, %v2875
    %v2921 = vsub.f32 %v2729, %v2875
    %v2922 = vsub.f32 %v2730, %v2876
    %v2923 = vsub.f32 %v2731, %v2876
    %v2924 = vsub.f32 %v2732, %v2877
    %v2925 = vsub.f32 %v2733, %v2877
    %v2926 = vsub.f32 %v2734, %v2878
    %v2927 = vsub.f32 %v2735, %v2878
    %v2928 = vsub.f32 %v2736, %v2879
    %v2929 = vsub.f32 %v2737, %v2879
    %v2930 = vsub.f32 %v2738, %v2880
    %v2931 = vsub.f32 %v2739, %v2880
    %v2932 = vsub.f32 %v2740, %v2881
    %v2933 = vsub.f32 %v2741, %v2881
    %v2934 = vsub.f32 %v2742, %v2882
    %v2935 = vsub.f32 %v2743, %v2882
    %v2936 = vsub.f32 %v2744, %v2883
    %v2937 = vsub.f32 %v2745, %v2883
    %v2938 = vsub.f32 %v2746, %v2884
    %v2939 = vsub.f32 %v2747, %v2884
    %v2940 = vsub.f32 %v2748, %v2885
    %v2941 = vsub.f32 %v2749, %v2885
    %v2942 = vsub.f32 %v2750, %v2886
    %v2943 = vsub.f32 %v2751, %v2886
    %v2944 = vsub.f32 %v2752, %v2887
    %v2945 = vsub.f32 %v2753, %v2887
    %v2946 = vsub.f32 %v2754, %v2888
    %v2947 = vsub.f32 %v2755, %v2888
    %v2948 = vsub.f32 %v2756, %v2889
    %v2949 = vsub.f32 %v2757, %v2889
    %v2950 = vsub.f32 %v2758, %v2890
    %v2951 = vsub.f32 %v2759, %v2890
    %v2952 = vsub.f32 %v2760, %v2891
    %v2953 = vsub.f32 %v2761, %v2891
    %v2954 = vsub.f32 %v2762, %v2892
    %v2955 = vsub.f32 %v2763, %v2892
    %v2956 = vsub.f32 %v2764, %v2893
    %v2957 = vsub.f32 %v2765, %v2893
    %v2958 = vmul.f32 %v2894, 1.442695
    %v2959 = vpow.pop %v2958
    %v2960 = vmul.f32 %v2895, 1.442695
    %v2961 = vpow.pop %v2960
    %v2962 = vmul.f32 %v2896, 1.442695
    %v2963 = vpow.pop %v2962
    %v2964 = vmul.f32 %v2897, 1.442695
    %v2965 = vpow.pop %v2964
    %v2966 = vmul.f32 %v2898, 1.442695
    %v2967 = vpow.pop %v2966
    %v2968 = vmul.f32 %v2899, 1.442695
    %v2969 = vpow.pop %v2968
    %v2970 = vmul.f32 %v2900, 1.442695
    %v2971 = vpow.pop %v2970
    %v2972 = vmul.f32 %v2901, 1.442695
    %v2973 = vpow.pop %v2972
    %v2974 = vmul.f32 %v2902, 1.442695
    %v2975 = vpow.pop %v2974
    %v2976 = vmul.f32 %v2903, 1.442695
    %v2977 = vpow.pop %v2976
    %v2978 = vmul.f32 %v2904, 1.442695
    %v2979 = vpow.pop %v2978
    %v2980 = vmul.f32 %v2905, 1.442695
    %v2981 = vpow.pop %v2980
    %v2982 = vmul.f32 %v2906, 1.442695
    %v2983 = vpow.pop %v2982
    %v2984 = vmul.f32 %v2907, 1.442695
    %v2985 = vpow.pop %v2984
    %v2986 = vmul.f32 %v2908, 1.442695
    %v2987 = vpow.pop %v2986
    %v2988 = vmul.f32 %v2909, 1.442695
    %v2989 = vpow.pop %v2988
    %v2990 = vmul.f32 %v2910, 1.442695
    %v2991 = vpow.pop %v2990
    %v2992 = vmul.f32 %v2911, 1.442695
    %v2993 = vpow.pop %v2992
    %v2994 = vmul.f32 %v2912, 1.442695
    %v2995 = vpow.pop %v2994
    %v2996 = vmul.f32 %v2913, 1.442695
    %v2997 = vpow.pop %v2996
    %v2998 = vmul.f32 %v2914, 1.442695
    %v2999 = vpow.pop %v2998
    %v3000 = vmul.f32 %v2915, 1.442695
    %v3001 = vpow.pop %v3000
    %v3002 = vmul.f32 %v2916, 1.442695
    %v3003 = vpow.pop %v3002
    %v3004 = vmul.f32 %v2917, 1.442695
    %v3005 = vpow.pop %v3004
    %v3006 = vmul.f32 %v2918, 1.442695
    %v3007 = vpow.pop %v3006
    %v3008 = vmul.f32 %v2919, 1.442695
    %v3009 = vpow.pop %v3008
    %v3010 = vmul.f32 %v2920, 1.442695
    %v3011 = vpow.pop %v3010
    %v3012 = vmul.f32 %v2921, 1.442695
    %v3013 = vpow.pop %v3012
    %v3014 = vmul.f32 %v2922, 1.442695
    %v3015 = vpow.pop %v3014
    %v3016 = vmul.f32 %v2923, 1.442695
    %v3017 = vpow.pop %v3016
    %v3018 = vmul.f32 %v2924, 1.442695
    %v3019 = vpow.pop %v3018
    %v3020 = vmul.f32 %v2925, 1.442695
    %v3021 = vpow.pop %v3020
    %v3022 = vmul.f32 %v2926, 1.442695
    %v3023 = vpow.pop %v3022
    %v3024 = vmul.f32 %v2927, 1.442695
    %v3025 = vpow.pop %v3024
    %v3026 = vmul.f32 %v2928, 1.442695
    %v3027 = vpow.pop %v3026
    %v3028 = vmul.f32 %v2929, 1.442695
    %v3029 = vpow.pop %v3028
    %v3030 = vmul.f32 %v2930, 1.442695
    %v3031 = vpow.pop %v3030
    %v3032 = vmul.f32 %v2931, 1.442695
    %v3033 = vpow.pop %v3032
    %v3034 = vmul.f32 %v2932, 1.442695
    %v3035 = vpow.pop %v3034
    %v3036 = vmul.f32 %v2933, 1.442695
    %v3037 = vpow.pop %v3036
    %v3038 = vmul.f32 %v2934, 1.442695
    %v3039 = vpow.pop %v3038
    %v3040 = vmul.f32 %v2935, 1.442695
    %v3041 = vpow.pop %v3040
    %v3042 = vmul.f32 %v2936, 1.442695
    %v3043 = vpow.pop %v3042
    %v3044 = vmul.f32 %v2937, 1.442695
    %v3045 = vpow.pop %v3044
    %v3046 = vmul.f32 %v2938, 1.442695
    %v3047 = vpow.pop %v3046
    %v3048 = vmul.f32 %v2939, 1.442695
    %v3049 = vpow.pop %v3048
    %v3050 = vmul.f32 %v2940, 1.442695
    %v3051 = vpow.pop %v3050
    %v3052 = vmul.f32 %v2941, 1.442695
    %v3053 = vpow.pop %v3052
    %v3054 = vmul.f32 %v2942, 1.442695
    %v3055 = vpow.pop %v3054
    %v3056 = vmul.f32 %v2943, 1.442695
    %v3057 = vpow.pop %v3056
    %v3058 = vmul.f32 %v2944, 1.442695
    %v3059 = vpow.pop %v3058
    %v3060 = vmul.f32 %v2945, 1.442695
    %v3061 = vpow.pop %v3060
    %v3062 = vmul.f32 %v2946, 1.442695
    %v3063 = vpow.pop %v3062
    %v3064 = vmul.f32 %v2947, 1.442695
    %v3065 = vpow.pop %v3064
    %v3066 = vmul.f32 %v2948, 1.442695
    %v3067 = vpow.pop %v3066
    %v3068 = vmul.f32 %v2949, 1.442695
    %v3069 = vpow.pop %v3068
    %v3070 = vmul.f32 %v2950, 1.442695
    %v3071 = vpow.pop %v3070
    %v3072 = vmul.f32 %v2951, 1.442695
    %v3073 = vpow.pop %v3072
    %v3074 = vmul.f32 %v2952, 1.442695
    %v3075 = vpow.pop %v3074
    %v3076 = vmul.f32 %v2953, 1.442695
    %v3077 = vpow.pop %v3076
    %v3078 = vmul.f32 %v2954, 1.442695
    %v3079 = vpow.pop %v3078
    %v3080 = vmul.f32 %v2955, 1.442695
    %v3081 = vpow.pop %v3080
    %v3082 = vmul.f32 %v2956, 1.442695
    %v3083 = vpow.pop %v3082
    %v3084 = vmul.f32 %v2957, 1.442695
    %v3085 = vpow.pop %v3084
    %v3086 = vsub.f32 0.0, %v2862
    %v3087 = vsub.f32 0.0, %v2863
    %v3088 = vsub.f32 0.0, %v2864
    %v3089 = vsub.f32 0.0, %v2865
    %v3090 = vsub.f32 0.0, %v2866
    %v3091 = vsub.f32 0.0, %v2867
    %v3092 = vsub.f32 0.0, %v2868
    %v3093 = vsub.f32 0.0, %v2869
    %v3094 = vsub.f32 0.0, %v2870
    %v3095 = vsub.f32 0.0, %v2871
    %v3096 = vsub.f32 0.0, %v2872
    %v3097 = vsub.f32 0.0, %v2873
    %v3098 = vsub.f32 0.0, %v2874
    %v3099 = vsub.f32 0.0, %v2875
    %v3100 = vsub.f32 0.0, %v2876
    %v3101 = vsub.f32 0.0, %v2877
    %v3102 = vsub.f32 0.0, %v2878
    %v3103 = vsub.f32 0.0, %v2879
    %v3104 = vsub.f32 0.0, %v2880
    %v3105 = vsub.f32 0.0, %v2881
    %v3106 = vsub.f32 0.0, %v2882
    %v3107 = vsub.f32 0.0, %v2883
    %v3108 = vsub.f32 0.0, %v2884
    %v3109 = vsub.f32 0.0, %v2885
    %v3110 = vsub.f32 0.0, %v2886
    %v3111 = vsub.f32 0.0, %v2887
    %v3112 = vsub.f32 0.0, %v2888
    %v3113 = vsub.f32 0.0, %v2889
    %v3114 = vsub.f32 0.0, %v2890
    %v3115 = vsub.f32 0.0, %v2891
    %v3116 = vsub.f32 0.0, %v2892
    %v3117 = vsub.f32 0.0, %v2893
    %v3118 = vmul.f32 %v3086, 1.442695
    %v3119 = vpow.pop %v3118
    %v3120 = vmul.f32 %v3087, 1.442695
    %v3121 = vpow.pop %v3120
    %v3122 = vmul.f32 %v3088, 1.442695
    %v3123 = vpow.pop %v3122
    %v3124 = vmul.f32 %v3089, 1.442695
    %v3125 = vpow.pop %v3124
    %v3126 = vmul.f32 %v3090, 1.442695
    %v3127 = vpow.pop %v3126
    %v3128 = vmul.f32 %v3091, 1.442695
    %v3129 = vpow.pop %v3128
    %v3130 = vmul.f32 %v3092, 1.442695
    %v3131 = vpow.pop %v3130
    %v3132 = vmul.f32 %v3093, 1.442695
    %v3133 = vpow.pop %v3132
    %v3134 = vmul.f32 %v3094, 1.442695
    %v3135 = vpow.pop %v3134
    %v3136 = vmul.f32 %v3095, 1.442695
    %v3137 = vpow.pop %v3136
    %v3138 = vmul.f32 %v3096, 1.442695
    %v3139 = vpow.pop %v3138
    %v3140 = vmul.f32 %v3097, 1.442695
    %v3141 = vpow.pop %v3140
    %v3142 = vmul.f32 %v3098, 1.442695
    %v3143 = vpow.pop %v3142
    %v3144 = vmul.f32 %v3099, 1.442695
    %v3145 = vpow.pop %v3144
    %v3146 = vmul.f32 %v3100, 1.442695
    %v3147 = vpow.pop %v3146
    %v3148 = vmul.f32 %v3101, 1.442695
    %v3149 = vpow.pop %v3148
    %v3150 = vmul.f32 %v3102, 1.442695
    %v3151 = vpow.pop %v3150
    %v3152 = vmul.f32 %v3103, 1.442695
    %v3153 = vpow.pop %v3152
    %v3154 = vmul.f32 %v3104, 1.442695
    %v3155 = vpow.pop %v3154
    %v3156 = vmul.f32 %v3105, 1.442695
    %v3157 = vpow.pop %v3156
    %v3158 = vmul.f32 %v3106, 1.442695
    %v3159 = vpow.pop %v3158
    %v3160 = vmul.f32 %v3107, 1.442695
    %v3161 = vpow.pop %v3160
    %v3162 = vmul.f32 %v3108, 1.442695
    %v3163 = vpow.pop %v3162
    %v3164 = vmul.f32 %v3109, 1.442695
    %v3165 = vpow.pop %v3164
    %v3166 = vmul.f32 %v3110, 1.442695
    %v3167 = vpow.pop %v3166
    %v3168 = vmul.f32 %v3111, 1.442695
    %v3169 = vpow.pop %v3168
    %v3170 = vmul.f32 %v3112, 1.442695
    %v3171 = vpow.pop %v3170
    %v3172 = vmul.f32 %v3113, 1.442695
    %v3173 = vpow.pop %v3172
    %v3174 = vmul.f32 %v3114, 1.442695
    %v3175 = vpow.pop %v3174
    %v3176 = vmul.f32 %v3115, 1.442695
    %v3177 = vpow.pop %v3176
    %v3178 = vmul.f32 %v3116, 1.442695
    %v3179 = vpow.pop %v3178
    %v3180 = vmul.f32 %v3117, 1.442695
    %v3181 = vpow.pop %v3180
    %v3182 = vadd.f32 %v2959, %v2961
    %3183 = vadd.xlane.f32.xlu0 %v3182
    %v3184 = vpop.xlane.xlu0 %3183
    %v3185 = vadd.f32 %v2963, %v2965
    %3186 = vadd.xlane.f32.xlu0 %v3185
    %v3187 = vpop.xlane.xlu0 %3186
    %v3188 = vadd.f32 %v2967, %v2969
    %3189 = vadd.xlane.f32.xlu0 %v3188
    %v3190 = vpop.xlane.xlu0 %3189
    %v3191 = vadd.f32 %v2971, %v2973
    %3192 = vadd.xlane.f32.xlu0 %v3191
    %v3193 = vpop.xlane.xlu0 %3192
    %v3194 = vadd.f32 %v2975, %v2977
    %3195 = vadd.xlane.f32.xlu0 %v3194
    %v3196 = vpop.xlane.xlu0 %3195
    %v3197 = vadd.f32 %v2979, %v2981
    %3198 = vadd.xlane.f32.xlu0 %v3197
    %v3199 = vpop.xlane.xlu0 %3198
    %v3200 = vadd.f32 %v2983, %v2985
    %3201 = vadd.xlane.f32.xlu0 %v3200
    %v3202 = vpop.xlane.xlu0 %3201
    %v3203 = vadd.f32 %v2987, %v2989
    %3204 = vadd.xlane.f32.xlu0 %v3203
    %v3205 = vpop.xlane.xlu0 %3204
    %v3206 = vadd.f32 %v2991, %v2993
    %3207 = vadd.xlane.f32.xlu0 %v3206
    %v3208 = vpop.xlane.xlu0 %3207
    %v3209 = vadd.f32 %v2995, %v2997
    %3210 = vadd.xlane.f32.xlu0 %v3209
    %v3211 = vpop.xlane.xlu0 %3210
    %v3212 = vadd.f32 %v2999, %v3001
    %3213 = vadd.xlane.f32.xlu0 %v3212
    %v3214 = vpop.xlane.xlu0 %3213
    %v3215 = vadd.f32 %v3003, %v3005
    %3216 = vadd.xlane.f32.xlu0 %v3215
    %v3217 = vpop.xlane.xlu0 %3216
    %v3218 = vadd.f32 %v3007, %v3009
    %3219 = vadd.xlane.f32.xlu0 %v3218
    %v3220 = vpop.xlane.xlu0 %3219
    %v3221 = vadd.f32 %v3011, %v3013
    %3222 = vadd.xlane.f32.xlu0 %v3221
    %v3223 = vpop.xlane.xlu0 %3222
    %v3224 = vadd.f32 %v3015, %v3017
    %3225 = vadd.xlane.f32.xlu0 %v3224
    %v3226 = vpop.xlane.xlu0 %3225
    %v3227 = vadd.f32 %v3019, %v3021
    %3228 = vadd.xlane.f32.xlu0 %v3227
    %v3229 = vpop.xlane.xlu0 %3228
    %v3230 = vadd.f32 %v3023, %v3025
    %3231 = vadd.xlane.f32.xlu0 %v3230
    %v3232 = vpop.xlane.xlu0 %3231
    %v3233 = vadd.f32 %v3027, %v3029
    %3234 = vadd.xlane.f32.xlu0 %v3233
    %v3235 = vpop.xlane.xlu0 %3234
    %v3236 = vadd.f32 %v3031, %v3033
    %3237 = vadd.xlane.f32.xlu0 %v3236
    %v3238 = vpop.xlane.xlu0 %3237
    %v3239 = vadd.f32 %v3035, %v3037
    %3240 = vadd.xlane.f32.xlu0 %v3239
    %v3241 = vpop.xlane.xlu0 %3240
    %v3242 = vadd.f32 %v3039, %v3041
    %3243 = vadd.xlane.f32.xlu0 %v3242
    %v3244 = vpop.xlane.xlu0 %3243
    %v3245 = vadd.f32 %v3043, %v3045
    %3246 = vadd.xlane.f32.xlu0 %v3245
    %v3247 = vpop.xlane.xlu0 %3246
    %v3248 = vadd.f32 %v3047, %v3049
    %3249 = vadd.xlane.f32.xlu0 %v3248
    %v3250 = vpop.xlane.xlu0 %3249
    %v3251 = vadd.f32 %v3051, %v3053
    %3252 = vadd.xlane.f32.xlu0 %v3251
    %v3253 = vpop.xlane.xlu0 %3252
    %v3254 = vadd.f32 %v3055, %v3057
    %3255 = vadd.xlane.f32.xlu0 %v3254
    %v3256 = vpop.xlane.xlu0 %3255
    %v3257 = vadd.f32 %v3059, %v3061
    %3258 = vadd.xlane.f32.xlu0 %v3257
    %v3259 = vpop.xlane.xlu0 %3258
    %v3260 = vadd.f32 %v3063, %v3065
    %3261 = vadd.xlane.f32.xlu0 %v3260
    %v3262 = vpop.xlane.xlu0 %3261
    %v3263 = vadd.f32 %v3067, %v3069
    %3264 = vadd.xlane.f32.xlu0 %v3263
    %v3265 = vpop.xlane.xlu0 %3264
    %v3266 = vadd.f32 %v3071, %v3073
    %3267 = vadd.xlane.f32.xlu0 %v3266
    %v3268 = vpop.xlane.xlu0 %3267
    %v3269 = vadd.f32 %v3075, %v3077
    %3270 = vadd.xlane.f32.xlu0 %v3269
    %v3271 = vpop.xlane.xlu0 %3270
    %v3272 = vadd.f32 %v3079, %v3081
    %3273 = vadd.xlane.f32.xlu0 %v3272
    %v3274 = vpop.xlane.xlu0 %3273
    %v3275 = vadd.f32 %v3083, %v3085
    %3276 = vadd.xlane.f32.xlu0 %v3275
    %v3277 = vpop.xlane.xlu0 %3276
    %v3278 = vadd.f32 %v3119, %v3184
    %v3279 = vadd.f32 %v3121, %v3187
    %v3280 = vadd.f32 %v3123, %v3190
    %v3281 = vadd.f32 %v3125, %v3193
    %v3282 = vadd.f32 %v3127, %v3196
    %v3283 = vadd.f32 %v3129, %v3199
    %v3284 = vadd.f32 %v3131, %v3202
    %v3285 = vadd.f32 %v3133, %v3205
    %v3286 = vadd.f32 %v3135, %v3208
    %v3287 = vadd.f32 %v3137, %v3211
    %v3288 = vadd.f32 %v3139, %v3214
    %v3289 = vadd.f32 %v3141, %v3217
    %v3290 = vadd.f32 %v3143, %v3220
    %v3291 = vadd.f32 %v3145, %v3223
    %v3292 = vadd.f32 %v3147, %v3226
    %v3293 = vadd.f32 %v3149, %v3229
    %v3294 = vadd.f32 %v3151, %v3232
    %v3295 = vadd.f32 %v3153, %v3235
    %v3296 = vadd.f32 %v3155, %v3238
    %v3297 = vadd.f32 %v3157, %v3241
    %v3298 = vadd.f32 %v3159, %v3244
    %v3299 = vadd.f32 %v3161, %v3247
    %v3300 = vadd.f32 %v3163, %v3250
    %v3301 = vadd.f32 %v3165, %v3253
    %v3302 = vadd.f32 %v3167, %v3256
    %v3303 = vadd.f32 %v3169, %v3259
    %v3304 = vadd.f32 %v3171, %v3262
    %v3305 = vadd.f32 %v3173, %v3265
    %v3306 = vadd.f32 %v3175, %v3268
    %v3307 = vadd.f32 %v3177, %v3271
    %v3308 = vadd.f32 %v3179, %v3274
    %v3309 = vadd.f32 %v3181, %v3277
    %v3310 = vlog2.pop %v3278
    %v3311 = vmul.f32 %v3310, 0.6931472
    %v3312 = vlog2.pop %v3279
    %v3313 = vmul.f32 %v3312, 0.6931472
    %v3314 = vlog2.pop %v3280
    %v3315 = vmul.f32 %v3314, 0.6931472
    %v3316 = vlog2.pop %v3281
    %v3317 = vmul.f32 %v3316, 0.6931472
    %v3318 = vlog2.pop %v3282
    %v3319 = vmul.f32 %v3318, 0.6931472
    %v3320 = vlog2.pop %v3283
    %v3321 = vmul.f32 %v3320, 0.6931472
    %v3322 = vlog2.pop %v3284
    %v3323 = vmul.f32 %v3322, 0.6931472
    %v3324 = vlog2.pop %v3285
    %v3325 = vmul.f32 %v3324, 0.6931472
    %v3326 = vlog2.pop %v3286
    %v3327 = vmul.f32 %v3326, 0.6931472
    %v3328 = vlog2.pop %v3287
    %v3329 = vmul.f32 %v3328, 0.6931472
    %v3330 = vlog2.pop %v3288
    %v3331 = vmul.f32 %v3330, 0.6931472
    %v3332 = vlog2.pop %v3289
    %v3333 = vmul.f32 %v3332, 0.6931472
    %v3334 = vlog2.pop %v3290
    %v3335 = vmul.f32 %v3334, 0.6931472
    %v3336 = vlog2.pop %v3291
    %v3337 = vmul.f32 %v3336, 0.6931472
    %v3338 = vlog2.pop %v3292
    %v3339 = vmul.f32 %v3338, 0.6931472
    %v3340 = vlog2.pop %v3293
    %v3341 = vmul.f32 %v3340, 0.6931472
    %v3342 = vlog2.pop %v3294
    %v3343 = vmul.f32 %v3342, 0.6931472
    %v3344 = vlog2.pop %v3295
    %v3345 = vmul.f32 %v3344, 0.6931472
    %v3346 = vlog2.pop %v3296
    %v3347 = vmul.f32 %v3346, 0.6931472
    %v3348 = vlog2.pop %v3297
    %v3349 = vmul.f32 %v3348, 0.6931472
    %v3350 = vlog2.pop %v3298
    %v3351 = vmul.f32 %v3350, 0.6931472
    %v3352 = vlog2.pop %v3299
    %v3353 = vmul.f32 %v3352, 0.6931472
    %v3354 = vlog2.pop %v3300
    %v3355 = vmul.f32 %v3354, 0.6931472
    %v3356 = vlog2.pop %v3301
    %v3357 = vmul.f32 %v3356, 0.6931472
    %v3358 = vlog2.pop %v3302
    %v3359 = vmul.f32 %v3358, 0.6931472
    %v3360 = vlog2.pop %v3303
    %v3361 = vmul.f32 %v3360, 0.6931472
    %v3362 = vlog2.pop %v3304
    %v3363 = vmul.f32 %v3362, 0.6931472
    %v3364 = vlog2.pop %v3305
    %v3365 = vmul.f32 %v3364, 0.6931472
    %v3366 = vlog2.pop %v3306
    %v3367 = vmul.f32 %v3366, 0.6931472
    %v3368 = vlog2.pop %v3307
    %v3369 = vmul.f32 %v3368, 0.6931472
    %v3370 = vlog2.pop %v3308
    %v3371 = vmul.f32 %v3370, 0.6931472
    %v3372 = vlog2.pop %v3309
    %v3373 = vmul.f32 %v3372, 0.6931472
    %v3374 = vadd.f32 %v2862, %v3311
    %v3375 = vadd.f32 %v2863, %v3313
    %v3376 = vadd.f32 %v2864, %v3315
    %v3377 = vadd.f32 %v2865, %v3317
    %v3378 = vadd.f32 %v2866, %v3319
    %v3379 = vadd.f32 %v2867, %v3321
    %v3380 = vadd.f32 %v2868, %v3323
    %v3381 = vadd.f32 %v2869, %v3325
    %v3382 = vadd.f32 %v2870, %v3327
    %v3383 = vadd.f32 %v2871, %v3329
    %v3384 = vadd.f32 %v2872, %v3331
    %v3385 = vadd.f32 %v2873, %v3333
    %v3386 = vadd.f32 %v2874, %v3335
    %v3387 = vadd.f32 %v2875, %v3337
    %v3388 = vadd.f32 %v2876, %v3339
    %v3389 = vadd.f32 %v2877, %v3341
    %v3390 = vadd.f32 %v2878, %v3343
    %v3391 = vadd.f32 %v2879, %v3345
    %v3392 = vadd.f32 %v2880, %v3347
    %v3393 = vadd.f32 %v2881, %v3349
    %v3394 = vadd.f32 %v2882, %v3351
    %v3395 = vadd.f32 %v2883, %v3353
    %v3396 = vadd.f32 %v2884, %v3355
    %v3397 = vadd.f32 %v2885, %v3357
    %v3398 = vadd.f32 %v2886, %v3359
    %v3399 = vadd.f32 %v2887, %v3361
    %v3400 = vadd.f32 %v2888, %v3363
    %v3401 = vadd.f32 %v2889, %v3365
    %v3402 = vadd.f32 %v2890, %v3367
    %v3403 = vadd.f32 %v2891, %v3369
    %v3404 = vadd.f32 %v2892, %v3371
    %v3405 = vadd.f32 %v2893, %v3373
    %vm3406 = vcmp.gt.f32.partialorder %v2768, -1.7014117e+38
    %vm3407 = vcmp.gt.f32.partialorder %v2771, -1.7014117e+38
    %vm3408 = vcmp.gt.f32.partialorder %v2774, -1.7014117e+38
    %vm3409 = vcmp.gt.f32.partialorder %v2777, -1.7014117e+38
    %vm3410 = vcmp.gt.f32.partialorder %v2780, -1.7014117e+38
    %vm3411 = vcmp.gt.f32.partialorder %v2783, -1.7014117e+38
    %vm3412 = vcmp.gt.f32.partialorder %v2786, -1.7014117e+38
    %vm3413 = vcmp.gt.f32.partialorder %v2789, -1.7014117e+38
    %vm3414 = vcmp.gt.f32.partialorder %v2792, -1.7014117e+38
    %vm3415 = vcmp.gt.f32.partialorder %v2795, -1.7014117e+38
    %vm3416 = vcmp.gt.f32.partialorder %v2798, -1.7014117e+38
    %vm3417 = vcmp.gt.f32.partialorder %v2801, -1.7014117e+38
    %vm3418 = vcmp.gt.f32.partialorder %v2804, -1.7014117e+38
    %vm3419 = vcmp.gt.f32.partialorder %v2807, -1.7014117e+38
    %vm3420 = vcmp.gt.f32.partialorder %v2810, -1.7014117e+38
    %vm3421 = vcmp.gt.f32.partialorder %v2813, -1.7014117e+38
    %vm3422 = vcmp.gt.f32.partialorder %v2816, -1.7014117e+38
    %vm3423 = vcmp.gt.f32.partialorder %v2819, -1.7014117e+38
    %vm3424 = vcmp.gt.f32.partialorder %v2822, -1.7014117e+38
    %vm3425 = vcmp.gt.f32.partialorder %v2825, -1.7014117e+38
    %vm3426 = vcmp.gt.f32.partialorder %v2828, -1.7014117e+38
    %vm3427 = vcmp.gt.f32.partialorder %v2831, -1.7014117e+38
    %vm3428 = vcmp.gt.f32.partialorder %v2834, -1.7014117e+38
    %vm3429 = vcmp.gt.f32.partialorder %v2837, -1.7014117e+38
    %vm3430 = vcmp.gt.f32.partialorder %v2840, -1.7014117e+38
    %vm3431 = vcmp.gt.f32.partialorder %v2843, -1.7014117e+38
    %vm3432 = vcmp.gt.f32.partialorder %v2846, -1.7014117e+38
    %vm3433 = vcmp.gt.f32.partialorder %v2849, -1.7014117e+38
    %vm3434 = vcmp.gt.f32.partialorder %v2852, -1.7014117e+38
    %vm3435 = vcmp.gt.f32.partialorder %v2855, -1.7014117e+38
    %vm3436 = vcmp.gt.f32.partialorder %v2858, -1.7014117e+38
    %vm3437 = vcmp.gt.f32.partialorder %v2861, -1.7014117e+38
    %v3438 = vsel %vm3406, %v3374, 0.0
    %v3439 = vsel %vm3407, %v3375, 0.0
    %v3440 = vsel %vm3408, %v3376, 0.0
    %v3441 = vsel %vm3409, %v3377, 0.0
    %v3442 = vsel %vm3410, %v3378, 0.0
    %v3443 = vsel %vm3411, %v3379, 0.0
    %v3444 = vsel %vm3412, %v3380, 0.0
    %v3445 = vsel %vm3413, %v3381, 0.0
    %v3446 = vsel %vm3414, %v3382, 0.0
    %v3447 = vsel %vm3415, %v3383, 0.0
    %v3448 = vsel %vm3416, %v3384, 0.0
    %v3449 = vsel %vm3417, %v3385, 0.0
    %v3450 = vsel %vm3418, %v3386, 0.0
    %v3451 = vsel %vm3419, %v3387, 0.0
    %v3452 = vsel %vm3420, %v3388, 0.0
    %v3453 = vsel %vm3421, %v3389, 0.0
    %v3454 = vsel %vm3422, %v3390, 0.0
    %v3455 = vsel %vm3423, %v3391, 0.0
    %v3456 = vsel %vm3424, %v3392, 0.0
    %v3457 = vsel %vm3425, %v3393, 0.0
    %v3458 = vsel %vm3426, %v3394, 0.0
    %v3459 = vsel %vm3427, %v3395, 0.0
    %v3460 = vsel %vm3428, %v3396, 0.0
    %v3461 = vsel %vm3429, %v3397, 0.0
    %v3462 = vsel %vm3430, %v3398, 0.0
    %v3463 = vsel %vm3431, %v3399, 0.0
    %v3464 = vsel %vm3432, %v3400, 0.0
    %v3465 = vsel %vm3433, %v3401, 0.0
    %v3466 = vsel %vm3434, %v3402, 0.0
    %v3467 = vsel %vm3435, %v3403, 0.0
    %v3468 = vsel %vm3436, %v3404, 0.0
    %v3469 = vsel %vm3437, %v3405, 0.0
    %v3470 = vmul.f32 %v3438, 0.02
    %v3471 = vmul.f32 %v3439, 0.02
    %v3472 = vmul.f32 %v3440, 0.02
    %v3473 = vmul.f32 %v3441, 0.02
    %v3474 = vmul.f32 %v3442, 0.02
    %v3475 = vmul.f32 %v3443, 0.02
    %v3476 = vmul.f32 %v3444, 0.02
    %v3477 = vmul.f32 %v3445, 0.02
    %v3478 = vmul.f32 %v3446, 0.02
    %v3479 = vmul.f32 %v3447, 0.02
    %v3480 = vmul.f32 %v3448, 0.02
    %v3481 = vmul.f32 %v3449, 0.02
    %v3482 = vmul.f32 %v3450, 0.02
    %v3483 = vmul.f32 %v3451, 0.02
    %v3484 = vmul.f32 %v3452, 0.02
    %v3485 = vmul.f32 %v3453, 0.02
    %v3486 = vmul.f32 %v3454, 0.02
    %v3487 = vmul.f32 %v3455, 0.02
    %v3488 = vmul.f32 %v3456, 0.02
    %v3489 = vmul.f32 %v3457, 0.02
    %v3490 = vmul.f32 %v3458, 0.02
    %v3491 = vmul.f32 %v3459, 0.02
    %v3492 = vmul.f32 %v3460, 0.02
    %v3493 = vmul.f32 %v3461, 0.02
    %v3494 = vmul.f32 %v3462, 0.02
    %v3495 = vmul.f32 %v3463, 0.02
    %v3496 = vmul.f32 %v3464, 0.02
    %v3497 = vmul.f32 %v3465, 0.02
    %v3498 = vmul.f32 %v3466, 0.02
    %v3499 = vmul.f32 %v3467, 0.02
    %v3500 = vmul.f32 %v3468, 0.02
    %v3501 = vmul.f32 %v3469, 0.02
    %v3502 = vadd.f32 %v2334, %v3470
    %v3503 = vadd.f32 %v2335, %v3471
    %v3504 = vadd.f32 %v2336, %v3472
    %v3505 = vadd.f32 %v2337, %v3473
    %v3506 = vadd.f32 %v2338, %v3474
    %v3507 = vadd.f32 %v2339, %v3475
    %v3508 = vadd.f32 %v2340, %v3476
    %v3509 = vadd.f32 %v2341, %v3477
    %v3510 = vadd.f32 %v2342, %v3478
    %v3511 = vadd.f32 %v2343, %v3479
    %v3512 = vadd.f32 %v2344, %v3480
    %v3513 = vadd.f32 %v2345, %v3481
    %v3514 = vadd.f32 %v2346, %v3482
    %v3515 = vadd.f32 %v2347, %v3483
    %v3516 = vadd.f32 %v2348, %v3484
    %v3517 = vadd.f32 %v2349, %v3485
    %v3518 = vadd.f32 %v2350, %v3486
    %v3519 = vadd.f32 %v2351, %v3487
    %v3520 = vadd.f32 %v2352, %v3488
    %v3521 = vadd.f32 %v2353, %v3489
    %v3522 = vadd.f32 %v2354, %v3490
    %v3523 = vadd.f32 %v2355, %v3491
    %v3524 = vadd.f32 %v2356, %v3492
    %v3525 = vadd.f32 %v2357, %v3493
    %v3526 = vadd.f32 %v2358, %v3494
    %v3527 = vadd.f32 %v2359, %v3495
    %v3528 = vadd.f32 %v2360, %v3496
    %v3529 = vadd.f32 %v2361, %v3497
    %v3530 = vadd.f32 %v2362, %v3498
    %v3531 = vadd.f32 %v2363, %v3499
    %v3532 = vadd.f32 %v2364, %v3500
    %v3533 = vadd.f32 %v2365, %v3501
    %v3534 = vadd.f32 %v3502, %v3503
    %v3535 = vadd.f32 %v3534, %v3504
    %v3536 = vadd.f32 %v3535, %v3505
    %v3537 = vadd.f32 %v3536, %v3506
    %v3538 = vadd.f32 %v3537, %v3507
    %v3539 = vadd.f32 %v3538, %v3508
    %v3540 = vadd.f32 %v3539, %v3509
    %v3541 = vadd.f32 %v3540, %v3510
    %v3542 = vadd.f32 %v3541, %v3511
    %v3543 = vadd.f32 %v3542, %v3512
    %v3544 = vadd.f32 %v3543, %v3513
    %v3545 = vadd.f32 %v3544, %v3514
    %v3546 = vadd.f32 %v3545, %v3515
    %v3547 = vadd.f32 %v3546, %v3516
    %v3548 = vadd.f32 %v3547, %v3517
    %v3549 = vadd.f32 %v3548, %v3518
    %v3550 = vadd.f32 %v3549, %v3519
    %v3551 = vadd.f32 %v3550, %v3520
    %v3552 = vadd.f32 %v3551, %v3521
    %v3553 = vadd.f32 %v3552, %v3522
    %v3554 = vadd.f32 %v3553, %v3523
    %v3555 = vadd.f32 %v3554, %v3524
    %v3556 = vadd.f32 %v3555, %v3525
    %v3557 = vadd.f32 %v3556, %v3526
    %v3558 = vadd.f32 %v3557, %v3527
    %v3559 = vadd.f32 %v3558, %v3528
    %v3560 = vadd.f32 %v3559, %v3529
    %v3561 = vadd.f32 %v3560, %v3530
    %v3562 = vadd.f32 %v3561, %v3531
    %v3563 = vadd.f32 %v3562, %v3532
    %v3564 = vadd.f32 %v3563, %v3533
    %v3565 = vrot.slane %v3564, 4
    %v3566 = vadd.f32 %v3564, %v3565
    %v3567 = vrot.slane %v3566, 2
    %v3568 = vadd.f32 %v3566, %v3567
    %v3569 = vrot.slane %v3568, 1
    %v3570 = vadd.f32 %v3568, %v3569
    %3571 = vst [vmem:[#allocation13] sm:$0xff] %v3570
    // Predicated region
    $region50: #{tpu_custom_call.1} parent=1 // pred_check
      _
    $region51: #{tpu_custom_call.1} parent=1 // pred_check_branch
      %3573 = sbr.rel (0) target = $region53
    $region52: #{tpu_custom_call.1} parent=1 // pred_region
      %s3575 = ssub.s32 128, 128
      %3576 = vsyncadd [#allocation4], %s3575
      %s3578 = sshll.u32 [#allocation13], 4
      %s3579 = int_to_ptr.vmem [resolvable:$true] %s3578
      %3581 = dma.vmem_to_hbm [thread:$0]  %s3579, 128, %s6, [#allocation4]
    $region53: #{tpu_custom_call.1} parent=1 // pred_fallthru
      _
    // Predicated region
    $region54: #{tpu_custom_call.1} parent=1 // pred_check
      _
    $region55: #{tpu_custom_call.1} parent=1 // pred_check_branch
      %3583 = sbr.rel (0) target = $region57
    $region56: #{tpu_custom_call.1} parent=1 // pred_region
      %3584 = dma.done [#allocation4], 128
    $region57: #{tpu_custom_call.1} parent=1 // pred_fallthru
      _
    %3585 = vsyncpa [#allocation3], 1
    %3586 = vsyncpa [#allocation6], 1
    %3587 = vsyncpa [#allocation9], 1
    %3588 = vsyncpa [#allocation12], 1
    %3589 = vsyncpa [#allocation4], 1

</llo_original>
